<compile_context>
chip_gen: v7x
topology: tpu7x:2x2x1
jax: 0.10.0
libtpu: 0.0.40
codegen_flags: <defaults>
</compile_context>

<pallas_src>
import jax
import jax.numpy as jnp
from jax.experimental import pallas as pl
from jax.experimental.pallas import tpu as pltpu


# ---------------------------------------------------------------------------
# Fused 4-layer kernel: each grid step processes TB images end-to-end.
# Input rows are grouped by (h mod 4); every array is (rows, lanes) 2D with
# per-image row index r-major:  row = j*TB + b.
# ---------------------------------------------------------------------------
def _qcae_kernel(x_ref,
                 g1_ref, b1_ref,
                 g2_ref, b2_ref,
                 g5e_ref, g5o_ref, b5_ref,
                 g6e_ref, g6o_ref, b6_ref,
                 o_ref):
    tb = x_ref.shape[0] // 16
    bf16 = jnp.bfloat16

    def mm(lhs, rhs_ref):
        return jnp.dot(lhs, rhs_ref[...], preferred_element_type=jnp.float32)

    def act(y, b_ref):                       # bias + nn.Hardtanh
        return jnp.clip(y + b_ref[...], -1.0, 1.0)

    def shift_up(v):                         # v[j] -> v[j+1], zero at the end
        z = jnp.zeros((tb,) + v.shape[1:], v.dtype)
        return jnp.concatenate([v[tb:], z], axis=0)

    def shift_down(v):                       # v[j] -> v[j-1], zero at the start
        z = jnp.zeros((tb,) + v.shape[1:], v.dtype)
        return jnp.concatenate([z, v[:-tb]], axis=0)

    x = x_ref[...].astype(bf16)              # (16*TB, 64): rows grouped by h mod 4
    q = 4 * tb
    r0, r1, r2, r3 = x[0:q], x[q:2 * q], x[2 * q:3 * q], x[3 * q:4 * q]

    # ---- e1: QuaternionConv(4->32, k3, s2, p1) + Hardtanh -------------------
    # even output rows (oh=2j) read input rows 4j-1, 4j, 4j+1
    lhs_e = jnp.concatenate([shift_down(r3), r0, r1], axis=1)        # (4TB, 192)
    # odd  output rows (oh=2j+1) read input rows 4j+1, 4j+2, 4j+3
    lhs_o = jnp.concatenate([r1, r2, r3], axis=1)                    # (4TB, 192)
    a1_e = act(mm(lhs_e, g1_ref), b1_ref).astype(bf16)               # e1 rows 2j
    a1_o = act(mm(lhs_o, g1_ref), b1_ref).astype(bf16)               # e1 rows 2j+1

    # ---- e2: QuaternionConv(32->40, k3, s2, p1) + Hardtanh (Cout padded to 64)
    lhs2 = jnp.concatenate([shift_down(a1_o), a1_e, a1_o], axis=1)   # (4TB, 768)
    a2 = act(mm(lhs2, g2_ref), b2_ref).astype(bf16)                  # (4TB, 256)

    # ---- d5: QuaternionTransposeConv(40->32, k3, s2, p1, op1) + Hardtanh ----
    eo = act(mm(a2, g5e_ref), b5_ref).astype(bf16)                   # d5 rows 2j
    lhs5o = jnp.concatenate([a2, shift_up(a2)], axis=1)              # (4TB, 512)
    oo = act(mm(lhs5o, g5o_ref), b5_ref).astype(bf16)                # d5 rows 2j+1

    # ---- d6: QuaternionTransposeConv(32->4, k3, s2, p1, op1) + Hardtanh -----
    even_lhs = jnp.concatenate([eo, oo], axis=0)                     # (8TB, 256)
    even_out = act(mm(even_lhs, g6e_ref), b6_ref)                    # rows 4j | 4j+2
    odd_lhs = jnp.concatenate(
        [jnp.concatenate([eo, oo], axis=1),                          # -> rows 4j+1
         jnp.concatenate([oo, shift_up(eo)], axis=1)], axis=0)       # -> rows 4j+3
    odd_out = act(mm(odd_lhs, g6o_ref), b6_ref)                      # (8TB, 64)

    # Lane block g in {0,1,2,3} holds output rows with h mod 4 == g.
    o_ref[...] = jnp.concatenate(
        [even_out[:q], odd_out[:q], even_out[q:], odd_out[q:]], axis=1)   # (4TB, 256)


def qcae_forward(params, x_nchw, *, tb=32):
    assert tb % 8 == 0
    n, c, h, w = x_nchw.shape
    assert (c, h, w) == (4, 16, 16), (c, h, w)
    n_pad = ((n + tb - 1) // tb) * tb
    nb = n_pad // tb

    # NCHW -> per-image (H, W*C) rows, pad the batch to a multiple of TB.
    x = jnp.transpose(x_nchw, (0, 2, 3, 1)).reshape(n, h, w * c).astype(jnp.float32)
    if n_pad != n:
        x = jnp.concatenate([x, jnp.zeros((n_pad - n, h, w * c), x.dtype)], axis=0)
    # Group rows by (h mod 4): [0,4,8,12, 1,5,9,13, 2,6,10,14, 3,7,11,15].
    row_order = jnp.arange(16).reshape(4, 4).T.reshape(-1)
    x = x[:, row_order, :]
    # Blocks of TB images, rows stored spatial-major / batch-minor: row = t*TB + b.
    x = x.reshape(nb, tb, h, w * c).transpose(0, 2, 1, 3).reshape(nb, h * tb, w * c)

    def wspec(arr):
        return pl.BlockSpec(arr.shape, lambda i, _nd=arr.ndim: (0,) * _nd)

    weight_names = ("g1", "b1", "g2", "b2", "g5e", "g5o", "b5", "g6e", "g6o", "b6")
    weights = [params[k] for k in weight_names]

    out = pl.pallas_call(
        _qcae_kernel,
        out_shape=jax.ShapeDtypeStruct((nb, 4 * tb, 256), jnp.float32),
        grid=(nb,),
        in_specs=[pl.BlockSpec((None, h * tb, w * c), lambda i: (i, 0, 0))]
                 + [wspec(a) for a in weights],
        out_specs=pl.BlockSpec((None, 4 * tb, 256), lambda i: (i, 0, 0)),
        compiler_params=pltpu.CompilerParams(
            dimension_semantics=("parallel",)),    # 2 TCs on v7x; cheap loop elsewhere
    )(x, *weights)

    # out[blk, j*TB + b, g*64 + w*4 + c] -> image blk*TB+b, channel c, h = 4*j + g, width w
    out = out.reshape(nb, 4, tb, 4, 16, 4)         # (blk, j, b, g, w, c)
    out = jnp.transpose(out, (0, 2, 5, 1, 3, 4))   # (blk, b, c, j, g, w)
    out = out.reshape(n_pad, 4, 16, 16)
    return out[:n]


# ---------------------------------------------------------------------------
# Init-time preprocessing: Hamilton block weights + conv-structure folding.
# ---------------------------------------------------------------------------
def _hamilton_weight(key, dim0, dim1, kh, kw, scale=0.1):
    # TODO(synk): real module uses quaternion_init (Chi-distributed magnitude +
    # unit-quaternion phase); deterministic Gaussian sub-weights with the same
    # shapes and the same Hamilton block structure are used here instead.
    kr, ki_, kj_, kk_ = jax.random.split(key, 4)
    shp = (dim0, dim1, kh, kw)
    r = scale * jax.random.normal(kr, shp, jnp.float32)
    i = scale * jax.random.normal(ki_, shp, jnp.float32)
    j = scale * jax.random.normal(kj_, shp, jnp.float32)
    k = scale * jax.random.normal(kk_, shp, jnp.float32)
    row_r = jnp.concatenate([r, -i, -j, -k], axis=1)
    row_i = jnp.concatenate([i,  r, -k,  j], axis=1)
    row_j = jnp.concatenate([j,  k,  r, -i], axis=1)
    row_k = jnp.concatenate([k, -j,  i,  r], axis=1)
    return jnp.concatenate([row_r, row_i, row_j, row_k], axis=0)


def _conv_g(w_oihw, iw_dim, stride, pad):
    """Per-kernel-row G matrices for a stride-s conv: out[oh] = sum_k x[s*oh+k-p] @ G[k]."""
    cout, cin, kh, kw = w_oihw.shape
    ow_dim = (iw_dim + 2 * pad - kw) // stride + 1
    iw, ow, kj = jnp.arange(iw_dim), jnp.arange(ow_dim), jnp.arange(kw)
    ind = (iw[:, None, None] == stride * ow[None, :, None] + kj[None, None, :] - pad)
    g = jnp.einsum("abq,oipq->paibo", ind.astype(jnp.float32), w_oihw)
    return g.reshape(kh, iw_dim * cin, ow_dim * cout), ow_dim


def _tconv_g(w_iohw, iw_dim, stride, pad, opad):
    """Per-kernel-row G matrices for conv_transpose2d: out[s*ih+k-p] += x[ih] @ G[k]."""
    cin, cout, kh, kw = w_iohw.shape
    ow_dim = (iw_dim - 1) * stride - 2 * pad + kw + opad
    iw, ow, kj = jnp.arange(iw_dim), jnp.arange(ow_dim), jnp.arange(kw)
    ind = (ow[None, :, None] == stride * iw[:, None, None] + kj[None, None, :] - pad)
    g = jnp.einsum("abq,iopq->paibo", ind.astype(jnp.float32), w_iohw)
    return g.reshape(kh, iw_dim * cin, ow_dim * cout), ow_dim


def init_qcae_params(key):
    ks = jax.random.split(key, 8)
    e1_w = _hamilton_weight(ks[0], 8, 1, 3, 3)            # (32, 4, 3, 3)  conv  (O,I,kh,kw)
    e1_b = 0.01 * jax.random.normal(ks[1], (32,), jnp.float32)
    e2_w = _hamilton_weight(ks[2], 10, 8, 3, 3)           # (40, 32, 3, 3) conv
    e2_b = 0.01 * jax.random.normal(ks[3], (40,), jnp.float32)
    d5_w = _hamilton_weight(ks[4], 10, 8, 3, 3)           # (40, 32, 3, 3) tconv (I,O,kh,kw)
    d5_b = 0.01 * jax.random.normal(ks[5], (32,), jnp.float32)
    d6_w = _hamilton_weight(ks[6], 8, 1, 3, 3)            # (32, 4, 3, 3)  tconv
    d6_b = 0.01 * jax.random.normal(ks[7], (4,), jnp.float32)

    p = {"e1_wfull": e1_w, "e1_bias": e1_b, "e2_wfull": e2_w, "e2_bias": e2_b,
         "d5_wfull": d5_w, "d5_bias": d5_b, "d6_wfull": d6_w, "d6_bias": d6_b}

    # Zero-pad e2's 40 output channels (and d5's 40 input channels) to 64 so every
    # intermediate activation is a fully packed 256-lane slab.
    e2_w_pad = jnp.pad(e2_w, ((0, 24), (0, 0), (0, 0), (0, 0)))
    e2_b_pad = jnp.pad(e2_b, (0, 24))
    d5_w_pad = jnp.pad(d5_w, ((0, 24), (0, 0), (0, 0), (0, 0)))

    g1, ow1 = _conv_g(e1_w, 16, 2, 1)           # (3, 64, 256),  ow=8
    g2, ow2 = _conv_g(e2_w_pad, 8, 2, 1)        # (3, 256, 256), ow=4
    g5, ow5 = _tconv_g(d5_w_pad, 4, 2, 1, 1)    # (3, 256, 256), ow=8
    g6, ow6 = _tconv_g(d6_w, 8, 2, 1, 1)        # (3, 256, 64),  ow=16

    bf = jnp.bfloat16
    p["g1"] = jnp.concatenate([g1[0], g1[1], g1[2]], axis=0).astype(bf)   # (192, 256)
    p["g2"] = jnp.concatenate([g2[0], g2[1], g2[2]], axis=0).astype(bf)   # (768, 256)
    p["g5e"] = g5[1].astype(bf)                                           # (256, 256)
    p["g5o"] = jnp.concatenate([g5[2], g5[0]], axis=0).astype(bf)         # (512, 256)
    p["g6e"] = g6[1].astype(bf)                                           # (256, 64)
    p["g6o"] = jnp.concatenate([g6[2], g6[0]], axis=0).astype(bf)         # (512, 64)
    p["b1"] = jnp.tile(e1_b, ow1)[None, :]                                # (1, 256)
    p["b2"] = jnp.tile(e2_b_pad, ow2)[None, :]                            # (1, 256)
    p["b5"] = jnp.tile(d5_b, ow5)[None, :]                                # (1, 256)
    p["b6"] = jnp.tile(d6_b, ow6)[None, :]                                # (1, 64)
    return p


# ---------------------------------------------------------------------------
# Pure-JAX reference (im2col formulation) for a numerical self-check.
# ---------------------------------------------------------------------------
def _im2col(x_nhwc, kh, kw, stride):
    n, h, w, c = x_nhwc.shape
    oh = (h - kh) // stride + 1
    ow = (w - kw) // stride + 1
    cols = []
    for i in range(kh):
        for j in range(kw):
            cols.append(x_nhwc[:, i:i + stride * (oh - 1) + 1:stride,
                                  j:j + stride * (ow - 1) + 1:stride, :])
    patches = jnp.stack(cols, axis=3)
    return patches.reshape(n * oh * ow, kh * kw * c), (n, oh, ow)


def _ref_conv2d(x_nhwc, w_oihw, bias, stride, padding):
    cout, cin, kh, kw = w_oihw.shape
    xp = jnp.pad(x_nhwc, ((0, 0), (padding, padding), (padding, padding), (0, 0)))
    patches, (n, oh, ow) = _im2col(xp, kh, kw, stride)
    w_flat = jnp.transpose(w_oihw, (2, 3, 1, 0)).reshape(kh * kw * cin, cout)
    out = patches @ w_flat + bias[None, :]
    return jnp.clip(out, -1.0, 1.0).reshape(n, oh, ow, cout)


def _ref_conv_transpose2d(x_nhwc, w_iohw, bias, stride, padding, output_padding):
    cin, cout, kh, kw = w_iohw.shape
    n, h, w, _ = x_nhwc.shape
    hd, wd = (h - 1) * stride + 1, (w - 1) * stride + 1
    x_dil = jnp.zeros((n, hd, wd, cin), x_nhwc.dtype)
    x_dil = x_dil.at[:, ::stride, ::stride, :].set(x_nhwc)
    lo = kh - 1 - padding
    hi = kh - 1 - padding + output_padding
    xp = jnp.pad(x_dil, ((0, 0), (lo, hi), (lo, hi), (0, 0)))
    w_conv = jnp.flip(jnp.transpose(w_iohw, (1, 0, 2, 3)), axis=(2, 3))
    patches, (nb, oh, ow) = _im2col(xp, kh, kw, 1)
    w_flat = jnp.transpose(w_conv, (2, 3, 1, 0)).reshape(kh * kw * cin, cout)
    out = patches @ w_flat + bias[None, :]
    return jnp.clip(out, -1.0, 1.0).reshape(nb, oh, ow, cout)


def qcae_reference(params, x_nchw):
    x = jnp.transpose(x_nchw, (0, 2, 3, 1))
    e1 = _ref_conv2d(x, params["e1_wfull"], params["e1_bias"], 2, 1)
    e2 = _ref_conv2d(e1, params["e2_wfull"], params["e2_bias"], 2, 1)
    d5 = _ref_conv_transpose2d(e2, params["d5_wfull"], params["d5_bias"], 2, 1, 1)
    d6 = _ref_conv_transpose2d(d5, params["d6_wfull"], params["d6_bias"], 2, 1, 1)
    return jnp.transpose(d6, (0, 3, 1, 2))


if __name__ == "__main__":
    key = jax.random.PRNGKey(0)
    kx, kp = jax.random.split(key)
    x = jax.random.normal(kx, (2, 4, 16, 16), dtype=jnp.float32)   # NCHW like PyTorch
    params = init_qcae_params(kp)

    out = jax.jit(qcae_forward)(params, x)
    out = jax.block_until_ready(out)

    assert out.shape == (2, 4, 16, 16), out.shape
    assert bool(jnp.all(jnp.isfinite(out)))
    assert float(jnp.max(jnp.abs(out))) <= 1.0 + 1e-6              # Hardtanh range

    ref = qcae_reference(params, x)
    err = float(jnp.max(jnp.abs(out - ref)))
    assert err < 1e-1, f"max |kernel - reference| = {err}"          # bf16-weight tolerance
    print("KERNEL_OK")
</pallas_src>

<mosaic_0001>
module attributes {stable_mosaic.version = 11 : i64} {
  func.func @_qcae_kernel(%arg0: i32, %arg1: memref<1x512x64xf32, #tpu.memory_space<vmem>>, %arg2: memref<192x256xbf16, #tpu.memory_space<vmem>>, %arg3: memref<1x256xf32, #tpu.memory_space<vmem>>, %arg4: memref<768x256xbf16, #tpu.memory_space<vmem>>, %arg5: memref<1x256xf32, #tpu.memory_space<vmem>>, %arg6: memref<256x256xbf16, #tpu.memory_space<vmem>>, %arg7: memref<512x256xbf16, #tpu.memory_space<vmem>>, %arg8: memref<1x256xf32, #tpu.memory_space<vmem>>, %arg9: memref<256x64xbf16, #tpu.memory_space<vmem>>, %arg10: memref<512x64xbf16, #tpu.memory_space<vmem>>, %arg11: memref<1x64xf32, #tpu.memory_space<vmem>>, %arg12: memref<1x128x256xf32, #tpu.memory_space<vmem>>) attributes {dimension_semantics = [#tpu.dimension_semantics<parallel>], iteration_bounds = array<i64: 1>, scalar_prefetch = 0 : i64, scratch_operands = 0 : i64, tpu.core_type = #tpu.core_type<tc>, window_params = [{transform_indices = @transform_0, window_bounds = array<i64: 1, 512, 64>}, {pipeline_mode = #tpu.pipeline_mode<synchronous>, transform_indices = @transform_1, window_bounds = array<i64: 192, 256>}, {pipeline_mode = #tpu.pipeline_mode<synchronous>, transform_indices = @transform_2, window_bounds = array<i64: 1, 256>}, {pipeline_mode = #tpu.pipeline_mode<synchronous>, transform_indices = @transform_3, window_bounds = array<i64: 768, 256>}, {pipeline_mode = #tpu.pipeline_mode<synchronous>, transform_indices = @transform_4, window_bounds = array<i64: 1, 256>}, {pipeline_mode = #tpu.pipeline_mode<synchronous>, transform_indices = @transform_5, window_bounds = array<i64: 256, 256>}, {pipeline_mode = #tpu.pipeline_mode<synchronous>, transform_indices = @transform_6, window_bounds = array<i64: 512, 256>}, {pipeline_mode = #tpu.pipeline_mode<synchronous>, transform_indices = @transform_7, window_bounds = array<i64: 1, 256>}, {pipeline_mode = #tpu.pipeline_mode<synchronous>, transform_indices = @transform_8, window_bounds = array<i64: 256, 64>}, {pipeline_mode = #tpu.pipeline_mode<synchronous>, transform_indices = @transform_9, window_bounds = array<i64: 512, 64>}, {pipeline_mode = #tpu.pipeline_mode<synchronous>, transform_indices = @transform_10, window_bounds = array<i64: 1, 64>}, {transform_indices = @transform_11, window_bounds = array<i64: 1, 128, 256>}]} {
    %c0 = arith.constant 0 : index
    %c0_0 = arith.constant 0 : index
    %c0_1 = arith.constant 0 : index
    %0 = vector.load %arg1[%c0, %c0_0, %c0_1] : memref<1x512x64xf32, #tpu.memory_space<vmem>>, vector<1x512x64xf32>
    %1 = vector.shape_cast %0 : vector<1x512x64xf32> to vector<512x64xf32>
    %2 = arith.truncf %1 : vector<512x64xf32> to vector<512x64xbf16>
    %3 = vector.extract_strided_slice %2 {offsets = [0, 0], sizes = [128, 64], strides = [1, 1]} : vector<512x64xbf16> to vector<128x64xbf16>
    %4 = vector.extract_strided_slice %2 {offsets = [128, 0], sizes = [128, 64], strides = [1, 1]} : vector<512x64xbf16> to vector<128x64xbf16>
    %5 = vector.extract_strided_slice %2 {offsets = [256, 0], sizes = [128, 64], strides = [1, 1]} : vector<512x64xbf16> to vector<128x64xbf16>
    %6 = vector.extract_strided_slice %2 {offsets = [384, 0], sizes = [128, 64], strides = [1, 1]} : vector<512x64xbf16> to vector<128x64xbf16>
    %cst = arith.constant 0.000000e+00 : bf16
    %7 = vector.broadcast %cst : bf16 to vector<32x64xbf16>
    %8 = vector.extract_strided_slice %6 {offsets = [0, 0], sizes = [96, 64], strides = [1, 1]} : vector<128x64xbf16> to vector<96x64xbf16>
    %9 = tpu.concatenate %7, %8 in 0 : vector<32x64xbf16>, vector<96x64xbf16> -> vector<128x64xbf16>
    %10 = tpu.concatenate %9, %3, %4 in 1 : vector<128x64xbf16>, vector<128x64xbf16>, vector<128x64xbf16> -> vector<128x192xbf16>
    %11 = tpu.concatenate %4, %5, %6 in 1 : vector<128x64xbf16>, vector<128x64xbf16>, vector<128x64xbf16> -> vector<128x192xbf16>
    %c0_2 = arith.constant 0 : index
    %c0_3 = arith.constant 0 : index
    %12 = vector.load %arg2[%c0_2, %c0_3] : memref<192x256xbf16, #tpu.memory_space<vmem>>, vector<192x256xbf16>
    %cst_4 = arith.constant dense<0.000000e+00> : vector<128x256xf32>
    %13 = tpu.matmul %10, %12, %cst_4 {dimension_numbers = #tpu.dot_dimension_numbers<[1], [0], [0], [1], [0, 0, 1, 1], [], []>} : vector<128x192xbf16>, vector<192x256xbf16>, vector<128x256xf32> -> vector<128x256xf32>
    %c0_5 = arith.constant 0 : index
    %c0_6 = arith.constant 0 : index
    %14 = vector.load %arg3[%c0_5, %c0_6] : memref<1x256xf32, #tpu.memory_space<vmem>>, vector<1x256xf32>
    %15 = vector.broadcast %14 : vector<1x256xf32> to vector<128x256xf32>
    %16 = arith.addf %13, %15 : vector<128x256xf32>
    %cst_7 = arith.constant -1.000000e+00 : f32
    %cst_8 = arith.constant 1.000000e+00 : f32
    %17 = vector.broadcast %cst_7 : f32 to vector<128x256xf32>
    %18 = arith.maximumf %17, %16 : vector<128x256xf32>
    %19 = vector.broadcast %cst_8 : f32 to vector<128x256xf32>
    %20 = arith.minimumf %19, %18 : vector<128x256xf32>
    %21 = arith.truncf %20 : vector<128x256xf32> to vector<128x256xbf16>
    %c0_9 = arith.constant 0 : index
    %c0_10 = arith.constant 0 : index
    %22 = vector.load %arg2[%c0_9, %c0_10] : memref<192x256xbf16, #tpu.memory_space<vmem>>, vector<192x256xbf16>
    %cst_11 = arith.constant dense<0.000000e+00> : vector<128x256xf32>
    %23 = tpu.matmul %11, %22, %cst_11 {dimension_numbers = #tpu.dot_dimension_numbers<[1], [0], [0], [1], [0, 0, 1, 1], [], []>} : vector<128x192xbf16>, vector<192x256xbf16>, vector<128x256xf32> -> vector<128x256xf32>
    %c0_12 = arith.constant 0 : index
    %c0_13 = arith.constant 0 : index
    %24 = vector.load %arg3[%c0_12, %c0_13] : memref<1x256xf32, #tpu.memory_space<vmem>>, vector<1x256xf32>
    %25 = vector.broadcast %24 : vector<1x256xf32> to vector<128x256xf32>
    %26 = arith.addf %23, %25 : vector<128x256xf32>
    %cst_14 = arith.constant -1.000000e+00 : f32
    %cst_15 = arith.constant 1.000000e+00 : f32
    %27 = vector.broadcast %cst_14 : f32 to vector<128x256xf32>
    %28 = arith.maximumf %27, %26 : vector<128x256xf32>
    %29 = vector.broadcast %cst_15 : f32 to vector<128x256xf32>
    %30 = arith.minimumf %29, %28 : vector<128x256xf32>
    %31 = arith.truncf %30 : vector<128x256xf32> to vector<128x256xbf16>
    %cst_16 = arith.constant 0.000000e+00 : bf16
    %32 = vector.broadcast %cst_16 : bf16 to vector<32x256xbf16>
    %33 = vector.extract_strided_slice %31 {offsets = [0, 0], sizes = [96, 256], strides = [1, 1]} : vector<128x256xbf16> to vector<96x256xbf16>
    %34 = tpu.concatenate %32, %33 in 0 : vector<32x256xbf16>, vector<96x256xbf16> -> vector<128x256xbf16>
    %35 = tpu.concatenate %34, %21, %31 in 1 : vector<128x256xbf16>, vector<128x256xbf16>, vector<128x256xbf16> -> vector<128x768xbf16>
    %c0_17 = arith.constant 0 : index
    %c0_18 = arith.constant 0 : index
    %36 = vector.load %arg4[%c0_17, %c0_18] : memref<768x256xbf16, #tpu.memory_space<vmem>>, vector<768x256xbf16>
    %cst_19 = arith.constant dense<0.000000e+00> : vector<128x256xf32>
    %37 = tpu.matmul %35, %36, %cst_19 {dimension_numbers = #tpu.dot_dimension_numbers<[1], [0], [0], [1], [0, 0, 1, 1], [], []>} : vector<128x768xbf16>, vector<768x256xbf16>, vector<128x256xf32> -> vector<128x256xf32>
    %c0_20 = arith.constant 0 : index
    %c0_21 = arith.constant 0 : index
    %38 = vector.load %arg5[%c0_20, %c0_21] : memref<1x256xf32, #tpu.memory_space<vmem>>, vector<1x256xf32>
    %39 = vector.broadcast %38 : vector<1x256xf32> to vector<128x256xf32>
    %40 = arith.addf %37, %39 : vector<128x256xf32>
    %cst_22 = arith.constant -1.000000e+00 : f32
    %cst_23 = arith.constant 1.000000e+00 : f32
    %41 = vector.broadcast %cst_22 : f32 to vector<128x256xf32>
    %42 = arith.maximumf %41, %40 : vector<128x256xf32>
    %43 = vector.broadcast %cst_23 : f32 to vector<128x256xf32>
    %44 = arith.minimumf %43, %42 : vector<128x256xf32>
    %45 = arith.truncf %44 : vector<128x256xf32> to vector<128x256xbf16>
    %c0_24 = arith.constant 0 : index
    %c0_25 = arith.constant 0 : index
    %46 = vector.load %arg6[%c0_24, %c0_25] : memref<256x256xbf16, #tpu.memory_space<vmem>>, vector<256x256xbf16>
    %cst_26 = arith.constant dense<0.000000e+00> : vector<128x256xf32>
    %47 = tpu.matmul %45, %46, %cst_26 {dimension_numbers = #tpu.dot_dimension_numbers<[1], [0], [0], [1], [0, 0, 1, 1], [], []>} : vector<128x256xbf16>, vector<256x256xbf16>, vector<128x256xf32> -> vector<128x256xf32>
    %c0_27 = arith.constant 0 : index
    %c0_28 = arith.constant 0 : index
    %48 = vector.load %arg8[%c0_27, %c0_28] : memref<1x256xf32, #tpu.memory_space<vmem>>, vector<1x256xf32>
    %49 = vector.broadcast %48 : vector<1x256xf32> to vector<128x256xf32>
    %50 = arith.addf %47, %49 : vector<128x256xf32>
    %cst_29 = arith.constant -1.000000e+00 : f32
    %cst_30 = arith.constant 1.000000e+00 : f32
    %51 = vector.broadcast %cst_29 : f32 to vector<128x256xf32>
    %52 = arith.maximumf %51, %50 : vector<128x256xf32>
    %53 = vector.broadcast %cst_30 : f32 to vector<128x256xf32>
    %54 = arith.minimumf %53, %52 : vector<128x256xf32>
    %55 = arith.truncf %54 : vector<128x256xf32> to vector<128x256xbf16>
    %cst_31 = arith.constant 0.000000e+00 : bf16
    %56 = vector.broadcast %cst_31 : bf16 to vector<32x256xbf16>
    %57 = vector.extract_strided_slice %45 {offsets = [32, 0], sizes = [96, 256], strides = [1, 1]} : vector<128x256xbf16> to vector<96x256xbf16>
    %58 = tpu.concatenate %57, %56 in 0 : vector<96x256xbf16>, vector<32x256xbf16> -> vector<128x256xbf16>
    %59 = tpu.concatenate %45, %58 in 1 : vector<128x256xbf16>, vector<128x256xbf16> -> vector<128x512xbf16>
    %c0_32 = arith.constant 0 : index
    %c0_33 = arith.constant 0 : index
    %60 = vector.load %arg7[%c0_32, %c0_33] : memref<512x256xbf16, #tpu.memory_space<vmem>>, vector<512x256xbf16>
    %cst_34 = arith.constant dense<0.000000e+00> : vector<128x256xf32>
    %61 = tpu.matmul %59, %60, %cst_34 {dimension_numbers = #tpu.dot_dimension_numbers<[1], [0], [0], [1], [0, 0, 1, 1], [], []>} : vector<128x512xbf16>, vector<512x256xbf16>, vector<128x256xf32> -> vector<128x256xf32>
    %c0_35 = arith.constant 0 : index
    %c0_36 = arith.constant 0 : index
    %62 = vector.load %arg8[%c0_35, %c0_36] : memref<1x256xf32, #tpu.memory_space<vmem>>, vector<1x256xf32>
    %63 = vector.broadcast %62 : vector<1x256xf32> to vector<128x256xf32>
    %64 = arith.addf %61, %63 : vector<128x256xf32>
    %cst_37 = arith.constant -1.000000e+00 : f32
    %cst_38 = arith.constant 1.000000e+00 : f32
    %65 = vector.broadcast %cst_37 : f32 to vector<128x256xf32>
    %66 = arith.maximumf %65, %64 : vector<128x256xf32>
    %67 = vector.broadcast %cst_38 : f32 to vector<128x256xf32>
    %68 = arith.minimumf %67, %66 : vector<128x256xf32>
    %69 = arith.truncf %68 : vector<128x256xf32> to vector<128x256xbf16>
    %70 = tpu.concatenate %55, %69 in 0 : vector<128x256xbf16>, vector<128x256xbf16> -> vector<256x256xbf16>
    %c0_39 = arith.constant 0 : index
    %c0_40 = arith.constant 0 : index
    %71 = vector.load %arg9[%c0_39, %c0_40] : memref<256x64xbf16, #tpu.memory_space<vmem>>, vector<256x64xbf16>
    %cst_41 = arith.constant dense<0.000000e+00> : vector<256x64xf32>
    %72 = tpu.matmul %70, %71, %cst_41 {dimension_numbers = #tpu.dot_dimension_numbers<[1], [0], [0], [1], [0, 0, 1, 1], [], []>} : vector<256x256xbf16>, vector<256x64xbf16>, vector<256x64xf32> -> vector<256x64xf32>
    %c0_42 = arith.constant 0 : index
    %c0_43 = arith.constant 0 : index
    %73 = vector.load %arg11[%c0_42, %c0_43] : memref<1x64xf32, #tpu.memory_space<vmem>>, vector<1x64xf32>
    %74 = vector.broadcast %73 : vector<1x64xf32> to vector<256x64xf32>
    %75 = arith.addf %72, %74 : vector<256x64xf32>
    %cst_44 = arith.constant -1.000000e+00 : f32
    %cst_45 = arith.constant 1.000000e+00 : f32
    %76 = vector.broadcast %cst_44 : f32 to vector<256x64xf32>
    %77 = arith.maximumf %76, %75 : vector<256x64xf32>
    %78 = vector.broadcast %cst_45 : f32 to vector<256x64xf32>
    %79 = arith.minimumf %78, %77 : vector<256x64xf32>
    %80 = tpu.concatenate %55, %69 in 1 : vector<128x256xbf16>, vector<128x256xbf16> -> vector<128x512xbf16>
    %cst_46 = arith.constant 0.000000e+00 : bf16
    %81 = vector.broadcast %cst_46 : bf16 to vector<32x256xbf16>
    %82 = vector.extract_strided_slice %55 {offsets = [32, 0], sizes = [96, 256], strides = [1, 1]} : vector<128x256xbf16> to vector<96x256xbf16>
    %83 = tpu.concatenate %82, %81 in 0 : vector<96x256xbf16>, vector<32x256xbf16> -> vector<128x256xbf16>
    %84 = tpu.concatenate %69, %83 in 1 : vector<128x256xbf16>, vector<128x256xbf16> -> vector<128x512xbf16>
    %85 = tpu.concatenate %80, %84 in 0 : vector<128x512xbf16>, vector<128x512xbf16> -> vector<256x512xbf16>
    %c0_47 = arith.constant 0 : index
    %c0_48 = arith.constant 0 : index
    %86 = vector.load %arg10[%c0_47, %c0_48] : memref<512x64xbf16, #tpu.memory_space<vmem>>, vector<512x64xbf16>
    %cst_49 = arith.constant dense<0.000000e+00> : vector<256x64xf32>
    %87 = tpu.matmul %85, %86, %cst_49 {dimension_numbers = #tpu.dot_dimension_numbers<[1], [0], [0], [1], [0, 0, 1, 1], [], []>} : vector<256x512xbf16>, vector<512x64xbf16>, vector<256x64xf32> -> vector<256x64xf32>
    %c0_50 = arith.constant 0 : index
    %c0_51 = arith.constant 0 : index
    %88 = vector.load %arg11[%c0_50, %c0_51] : memref<1x64xf32, #tpu.memory_space<vmem>>, vector<1x64xf32>
    %89 = vector.broadcast %88 : vector<1x64xf32> to vector<256x64xf32>
    %90 = arith.addf %87, %89 : vector<256x64xf32>
    %cst_52 = arith.constant -1.000000e+00 : f32
    %cst_53 = arith.constant 1.000000e+00 : f32
    %91 = vector.broadcast %cst_52 : f32 to vector<256x64xf32>
    %92 = arith.maximumf %91, %90 : vector<256x64xf32>
    %93 = vector.broadcast %cst_53 : f32 to vector<256x64xf32>
    %94 = arith.minimumf %93, %92 : vector<256x64xf32>
    %95 = vector.extract_strided_slice %79 {offsets = [0, 0], sizes = [128, 64], strides = [1, 1]} : vector<256x64xf32> to vector<128x64xf32>
    %96 = vector.extract_strided_slice %94 {offsets = [0, 0], sizes = [128, 64], strides = [1, 1]} : vector<256x64xf32> to vector<128x64xf32>
    %97 = vector.extract_strided_slice %79 {offsets = [128, 0], sizes = [128, 64], strides = [1, 1]} : vector<256x64xf32> to vector<128x64xf32>
    %98 = vector.extract_strided_slice %94 {offsets = [128, 0], sizes = [128, 64], strides = [1, 1]} : vector<256x64xf32> to vector<128x64xf32>
    %99 = tpu.concatenate %95, %96, %97, %98 in 1 : vector<128x64xf32>, vector<128x64xf32>, vector<128x64xf32>, vector<128x64xf32> -> vector<128x256xf32>
    %c0_54 = arith.constant 0 : index
    %c0_55 = arith.constant 0 : index
    %c0_56 = arith.constant 0 : index
    %100 = vector.load %arg12[%c0_54, %c0_55, %c0_56] : memref<1x128x256xf32, #tpu.memory_space<vmem>>, vector<1x128x256xf32>
    %101 = vector.shape_cast %100 : vector<1x128x256xf32> to vector<128x256xf32>
    %102 = vector.shape_cast %99 : vector<128x256xf32> to vector<1x128x256xf32>
    tpu.vector_store %arg12[%c0_54, %c0_55, %c0_56], %102 {strides = array<i32>} : memref<1x128x256xf32, #tpu.memory_space<vmem>>, vector<1x128x256xf32>,
    return
  }
  func.func @transform_0(%arg0: i32) -> (i32, i32, i32) {
    %c0_i32 = arith.constant 0 : i32
    %c0_i32_0 = arith.constant 0 : i32
    %c0_i32_1 = arith.constant 0 : i32
    return %arg0, %c0_i32, %c0_i32_0 : i32, i32, i32
  }
  func.func @transform_1(%arg0: i32) -> (i32, i32) {
    %c0_i32 = arith.constant 0 : i32
    %c0_i32_0 = arith.constant 0 : i32
    %c0_i32_1 = arith.constant 0 : i32
    return %c0_i32, %c0_i32_0 : i32, i32
  }
  func.func @transform_2(%arg0: i32) -> (i32, i32) {
    %c0_i32 = arith.constant 0 : i32
    %c0_i32_0 = arith.constant 0 : i32
    %c0_i32_1 = arith.constant 0 : i32
    return %c0_i32, %c0_i32_0 : i32, i32
  }
  func.func @transform_3(%arg0: i32) -> (i32, i32) {
    %c0_i32 = arith.constant 0 : i32
    %c0_i32_0 = arith.constant 0 : i32
    %c0_i32_1 = arith.constant 0 : i32
    return %c0_i32, %c0_i32_0 : i32, i32
  }
  func.func @transform_4(%arg0: i32) -> (i32, i32) {
    %c0_i32 = arith.constant 0 : i32
    %c0_i32_0 = arith.constant 0 : i32
    %c0_i32_1 = arith.constant 0 : i32
    return %c0_i32, %c0_i32_0 : i32, i32
  }
  func.func @transform_5(%arg0: i32) -> (i32, i32) {
    %c0_i32 = arith.constant 0 : i32
    %c0_i32_0 = arith.constant 0 : i32
    %c0_i32_1 = arith.constant 0 : i32
    return %c0_i32, %c0_i32_0 : i32, i32
  }
  func.func @transform_6(%arg0: i32) -> (i32, i32) {
    %c0_i32 = arith.constant 0 : i32
    %c0_i32_0 = arith.constant 0 : i32
    %c0_i32_1 = arith.constant 0 : i32
    return %c0_i32, %c0_i32_0 : i32, i32
  }
  func.func @transform_7(%arg0: i32) -> (i32, i32) {
    %c0_i32 = arith.constant 0 : i32
    %c0_i32_0 = arith.constant 0 : i32
    %c0_i32_1 = arith.constant 0 : i32
    return %c0_i32, %c0_i32_0 : i32, i32
  }
  func.func @transform_8(%arg0: i32) -> (i32, i32) {
    %c0_i32 = arith.constant 0 : i32
    %c0_i32_0 = arith.constant 0 : i32
    %c0_i32_1 = arith.constant 0 : i32
    return %c0_i32, %c0_i32_0 : i32, i32
  }
  func.func @transform_9(%arg0: i32) -> (i32, i32) {
    %c0_i32 = arith.constant 0 : i32
    %c0_i32_0 = arith.constant 0 : i32
    %c0_i32_1 = arith.constant 0 : i32
    return %c0_i32, %c0_i32_0 : i32, i32
  }
  func.func @transform_10(%arg0: i32) -> (i32, i32) {
    %c0_i32 = arith.constant 0 : i32
    %c0_i32_0 = arith.constant 0 : i32
    %c0_i32_1 = arith.constant 0 : i32
    return %c0_i32, %c0_i32_0 : i32, i32
  }
  func.func @transform_11(%arg0: i32) -> (i32, i32, i32) {
    %c0_i32 = arith.constant 0 : i32
    %c0_i32_0 = arith.constant 0 : i32
    %c0_i32_1 = arith.constant 0 : i32
    return %arg0, %c0_i32, %c0_i32_0 : i32, i32, i32
  }
}

</mosaic_0001>

<llo_original>
// kernel: qcae_forward.1
$region0: #{qcae_forward.1}
  #allocation0 [shape = 'u32[]', space=smem, size = 0x4, offset = 0x4, fixed_abs, tag = 'smem constant byte address 0x4 - core index']
  #allocation1 [shape = 'u32[144,128]{1,0:T(1,128)}', space=vmem, size = 0x12000, scoped, tag = 'internal scratch']
  %s0 = inlined_call_operand.vmem [shape: f32[1,512,64], index: 0, kind: input, shape index: {}]
  %s1 = inlined_call_operand.hbm [shape: bf16[192,256], index: 1, kind: input, shape index: {}]
  %s2 = inlined_call_operand.vmem [shape: f32[1,256], index: 2, kind: input, shape index: {}]
  %s3 = inlined_call_operand.vmem [shape: bf16[768,256], index: 3, kind: input, shape index: {}]
  %s4 = inlined_call_operand.vmem [shape: f32[1,256], index: 4, kind: input, shape index: {}]
  %s5 = inlined_call_operand.vmem [shape: bf16[256,256], index: 5, kind: input, shape index: {}]
  %s6 = inlined_call_operand.vmem [shape: bf16[512,256], index: 6, kind: input, shape index: {}]
  %s7 = inlined_call_operand.hbm [shape: f32[1,256], index: 7, kind: input, shape index: {}]
  %s8 = inlined_call_operand.vmem [shape: bf16[256,64], index: 8, kind: input, shape index: {}]
  %s9 = inlined_call_operand.vmem [shape: bf16[512,64], index: 9, kind: input, shape index: {}]
  %s10 = inlined_call_operand.vmem [shape: f32[1,64], index: 10, kind: input, shape index: {}]
  %s11 = inlined_call_operand.vmem [shape: f32[1,128,256], index: 11, kind: output, shape index: {}]
  %s12 = sld [smem:[#allocation0]]
  $region62: #{qcae_forward.1} parent=0
    _
  %s14 = ssub.s32 1, %s12
  %s15 = scalar_select 0, %s14, %s12
  $region1: #{qcae_forward.1} parent=0
    #allocation2 [shape = 'u8[98304]{0}', space=vmem, size = 0x18000, scoped, tag = 'input window, operand 1, single buffered']
    #allocation3 [shape = 's32[1]{0}', space=sflag, size = 0x4, scoped, tag = 'scoped memory for qcae_forward.1']
    #allocation4 [shape = 'u8[1024]{0}', space=vmem, size = 0x400, scoped, tag = 'input window, operand 7, single buffered']
    #allocation5 [shape = 's32[1]{0}', space=sflag, size = 0x4, scoped, tag = 'scoped memory for qcae_forward.1']
    %16 = vsyncpa [#allocation3], 0
    %17 = vsyncpa [#allocation5], 0
    // Predicated region
    $region2: #{qcae_forward.1} parent=1 // pred_check
      _
    $region3: #{qcae_forward.1} parent=1 // pred_check_branch
      %19 = sbr.rel (0) target = $region5
    $region4: #{qcae_forward.1} parent=1 // pred_region
      _
    $region5: #{qcae_forward.1} parent=1 // pred_fallthru
      _
    // Predicated region
    $region6: #{qcae_forward.1} parent=1 // pred_check
      _
    $region7: #{qcae_forward.1} parent=1 // pred_check_branch
      %21 = sbr.rel (0) target = $region9
    $region8: #{qcae_forward.1} parent=1 // pred_region
      %s23 = ssub.s32 3072, 3072
      %24 = vsyncadd [#allocation3], %s23
      %s25 = sshll.u32 [#allocation2], 4
      %s26 = int_to_ptr.vmem [resolvable:$true] %s25
      %31 = dma.hbm_to_vmem [thread:$0]  %s1, 3072, %s26, [#allocation3], 128, 128, 8
    $region9: #{qcae_forward.1} parent=1 // pred_fallthru
      _
    // Predicated region
    $region10: #{qcae_forward.1} parent=1 // pred_check
      _
    $region11: #{qcae_forward.1} parent=1 // pred_check_branch
      %33 = sbr.rel (0) target = $region13
    $region12: #{qcae_forward.1} parent=1 // pred_region
      _
    $region13: #{qcae_forward.1} parent=1 // pred_fallthru
      _
    // Predicated region
    $region14: #{qcae_forward.1} parent=1 // pred_check
      _
    $region15: #{qcae_forward.1} parent=1 // pred_check_branch
      %35 = sbr.rel (0) target = $region17
    $region16: #{qcae_forward.1} parent=1 // pred_region
      _
    $region17: #{qcae_forward.1} parent=1 // pred_fallthru
      _
    // Predicated region
    $region18: #{qcae_forward.1} parent=1 // pred_check
      _
    $region19: #{qcae_forward.1} parent=1 // pred_check_branch
      %37 = sbr.rel (0) target = $region21
    $region20: #{qcae_forward.1} parent=1 // pred_region
      _
    $region21: #{qcae_forward.1} parent=1 // pred_fallthru
      _
    // Predicated region
    $region22: #{qcae_forward.1} parent=1 // pred_check
      _
    $region23: #{qcae_forward.1} parent=1 // pred_check_branch
      %39 = sbr.rel (0) target = $region25
    $region24: #{qcae_forward.1} parent=1 // pred_region
      _
    $region25: #{qcae_forward.1} parent=1 // pred_fallthru
      _
    // Predicated region
    $region26: #{qcae_forward.1} parent=1 // pred_check
      _
    $region27: #{qcae_forward.1} parent=1 // pred_check_branch
      %41 = sbr.rel (0) target = $region29
    $region28: #{qcae_forward.1} parent=1 // pred_region
      _
    $region29: #{qcae_forward.1} parent=1 // pred_fallthru
      _
    // Predicated region
    $region30: #{qcae_forward.1} parent=1 // pred_check
      _
    $region31: #{qcae_forward.1} parent=1 // pred_check_branch
      %43 = sbr.rel (0) target = $region33
    $region32: #{qcae_forward.1} parent=1 // pred_region
      %s45 = ssub.s32 32, 32
      %46 = vsyncadd [#allocation5], %s45
      %s48 = sshll.u32 [#allocation4], 4
      %s49 = int_to_ptr.vmem [resolvable:$true] %s48
      %51 = dma.hbm_to_vmem [thread:$0]  %s7, 32, %s49, [#allocation5]
    $region33: #{qcae_forward.1} parent=1 // pred_fallthru
      _
    // Predicated region
    $region34: #{qcae_forward.1} parent=1 // pred_check
      _
    $region35: #{qcae_forward.1} parent=1 // pred_check_branch
      %53 = sbr.rel (0) target = $region37
    $region36: #{qcae_forward.1} parent=1 // pred_region
      _
    $region37: #{qcae_forward.1} parent=1 // pred_fallthru
      _
    // Predicated region
    $region38: #{qcae_forward.1} parent=1 // pred_check
      _
    $region39: #{qcae_forward.1} parent=1 // pred_check_branch
      %55 = sbr.rel (0) target = $region41
    $region40: #{qcae_forward.1} parent=1 // pred_region
      _
    $region41: #{qcae_forward.1} parent=1 // pred_fallthru
      _
    // Predicated region
    $region42: #{qcae_forward.1} parent=1 // pred_check
      _
    $region43: #{qcae_forward.1} parent=1 // pred_check_branch
      %57 = sbr.rel (0) target = $region45
    $region44: #{qcae_forward.1} parent=1 // pred_region
      _
    $region45: #{qcae_forward.1} parent=1 // pred_fallthru
      _
    // Predicated region
    $region46: #{qcae_forward.1} parent=1 // pred_check
      _
    $region47: #{qcae_forward.1} parent=1 // pred_check_branch
      %59 = sbr.rel (0) target = $region49
    $region48: #{qcae_forward.1} parent=1 // pred_region
      %60 = dma.done [#allocation3], 3072
    $region49: #{qcae_forward.1} parent=1 // pred_fallthru
      _
    // Predicated region
    $region50: #{qcae_forward.1} parent=1 // pred_check
      _
    $region51: #{qcae_forward.1} parent=1 // pred_check_branch
      %62 = sbr.rel (0) target = $region53
    $region52: #{qcae_forward.1} parent=1 // pred_region
      %63 = dma.done [#allocation5], 32
    $region53: #{qcae_forward.1} parent=1 // pred_fallthru
      _
    %v65 = vld [vmem:[%s0] sm:$0xff]
    %v66 = vld [vmem:[%s0 + $0x8] sm:$0xff]
    %v67 = vld [vmem:[%s0 + $0x10] sm:$0xff]
    %v68 = vld [vmem:[%s0 + $0x18] sm:$0xff]
    %v69 = vld [vmem:[%s0 + $0x20] sm:$0xff]
    %v70 = vld [vmem:[%s0 + $0x28] sm:$0xff]
    %v71 = vld [vmem:[%s0 + $0x30] sm:$0xff]
    %v72 = vld [vmem:[%s0 + $0x38] sm:$0xff]
    %v73 = vld [vmem:[%s0 + $0x40] sm:$0xff]
    %v74 = vld [vmem:[%s0 + $0x48] sm:$0xff]
    %v75 = vld [vmem:[%s0 + $0x50] sm:$0xff]
    %v76 = vld [vmem:[%s0 + $0x58] sm:$0xff]
    %v77 = vld [vmem:[%s0 + $0x60] sm:$0xff]
    %v78 = vld [vmem:[%s0 + $0x68] sm:$0xff]
    %v79 = vld [vmem:[%s0 + $0x70] sm:$0xff]
    %v80 = vld [vmem:[%s0 + $0x78] sm:$0xff]
    %v81 = vld [vmem:[%s0 + $0x80] sm:$0xff]
    %v82 = vld [vmem:[%s0 + $0x88] sm:$0xff]
    %v83 = vld [vmem:[%s0 + $0x90] sm:$0xff]
    %v84 = vld [vmem:[%s0 + $0x98] sm:$0xff]
    %v85 = vld [vmem:[%s0 + $0xa0] sm:$0xff]
    %v86 = vld [vmem:[%s0 + $0xa8] sm:$0xff]
    %v87 = vld [vmem:[%s0 + $0xb0] sm:$0xff]
    %v88 = vld [vmem:[%s0 + $0xb8] sm:$0xff]
    %v89 = vld [vmem:[%s0 + $0xc0] sm:$0xff]
    %v90 = vld [vmem:[%s0 + $0xc8] sm:$0xff]
    %v91 = vld [vmem:[%s0 + $0xd0] sm:$0xff]
    %v92 = vld [vmem:[%s0 + $0xd8] sm:$0xff]
    %v93 = vld [vmem:[%s0 + $0xe0] sm:$0xff]
    %v94 = vld [vmem:[%s0 + $0xe8] sm:$0xff]
    %v95 = vld [vmem:[%s0 + $0xf0] sm:$0xff]
    %v96 = vld [vmem:[%s0 + $0xf8] sm:$0xff]
    %v97 = vld [vmem:[%s0 + $0x100] sm:$0xff]
    %v98 = vld [vmem:[%s0 + $0x108] sm:$0xff]
    %v99 = vld [vmem:[%s0 + $0x110] sm:$0xff]
    %v100 = vld [vmem:[%s0 + $0x118] sm:$0xff]
    %v101 = vld [vmem:[%s0 + $0x120] sm:$0xff]
    %v102 = vld [vmem:[%s0 + $0x128] sm:$0xff]
    %v103 = vld [vmem:[%s0 + $0x130] sm:$0xff]
    %v104 = vld [vmem:[%s0 + $0x138] sm:$0xff]
    %v105 = vld [vmem:[%s0 + $0x140] sm:$0xff]
    %v106 = vld [vmem:[%s0 + $0x148] sm:$0xff]
    %v107 = vld [vmem:[%s0 + $0x150] sm:$0xff]
    %v108 = vld [vmem:[%s0 + $0x158] sm:$0xff]
    %v109 = vld [vmem:[%s0 + $0x160] sm:$0xff]
    %v110 = vld [vmem:[%s0 + $0x168] sm:$0xff]
    %v111 = vld [vmem:[%s0 + $0x170] sm:$0xff]
    %v112 = vld [vmem:[%s0 + $0x178] sm:$0xff]
    %v113 = vld [vmem:[%s0 + $0x180] sm:$0xff]
    %v114 = vld [vmem:[%s0 + $0x188] sm:$0xff]
    %v115 = vld [vmem:[%s0 + $0x190] sm:$0xff]
    %v116 = vld [vmem:[%s0 + $0x198] sm:$0xff]
    %v117 = vld [vmem:[%s0 + $0x1a0] sm:$0xff]
    %v118 = vld [vmem:[%s0 + $0x1a8] sm:$0xff]
    %v119 = vld [vmem:[%s0 + $0x1b0] sm:$0xff]
    %v120 = vld [vmem:[%s0 + $0x1b8] sm:$0xff]
    %v121 = vld [vmem:[%s0 + $0x1c0] sm:$0xff]
    %v122 = vld [vmem:[%s0 + $0x1c8] sm:$0xff]
    %v123 = vld [vmem:[%s0 + $0x1d0] sm:$0xff]
    %v124 = vld [vmem:[%s0 + $0x1d8] sm:$0xff]
    %v125 = vld [vmem:[%s0 + $0x1e0] sm:$0xff]
    %v126 = vld [vmem:[%s0 + $0x1e8] sm:$0xff]
    %v127 = vld [vmem:[%s0 + $0x1f0] sm:$0xff]
    %v128 = vld [vmem:[%s0 + $0x1f8] sm:$0xff]
    %v129 = vpack.c.bf16 %v66, %v65
    %v130 = vpack.c.bf16 %v68, %v67
    %v131 = vpack.c.bf16 %v70, %v69
    %v132 = vpack.c.bf16 %v72, %v71
    %v133 = vpack.c.bf16 %v74, %v73
    %v134 = vpack.c.bf16 %v76, %v75
    %v135 = vpack.c.bf16 %v78, %v77
    %v136 = vpack.c.bf16 %v80, %v79
    %v137 = vpack.c.bf16 %v82, %v81
    %v138 = vpack.c.bf16 %v84, %v83
    %v139 = vpack.c.bf16 %v86, %v85
    %v140 = vpack.c.bf16 %v88, %v87
    %v141 = vpack.c.bf16 %v90, %v89
    %v142 = vpack.c.bf16 %v92, %v91
    %v143 = vpack.c.bf16 %v94, %v93
    %v144 = vpack.c.bf16 %v96, %v95
    %v145 = vpack.c.bf16 %v98, %v97
    %v146 = vpack.c.bf16 %v100, %v99
    %v147 = vpack.c.bf16 %v102, %v101
    %v148 = vpack.c.bf16 %v104, %v103
    %v149 = vpack.c.bf16 %v106, %v105
    %v150 = vpack.c.bf16 %v108, %v107
    %v151 = vpack.c.bf16 %v110, %v109
    %v152 = vpack.c.bf16 %v112, %v111
    %v153 = vpack.c.bf16 %v114, %v113
    %v154 = vpack.c.bf16 %v116, %v115
    %v155 = vpack.c.bf16 %v118, %v117
    %v156 = vpack.c.bf16 %v120, %v119
    %v157 = vpack.c.bf16 %v122, %v121
    %v158 = vpack.c.bf16 %v124, %v123
    %v159 = vpack.c.bf16 %v126, %v125
    %v160 = vpack.c.bf16 %v128, %v127
    %169 = vrot.lane.b32.xlu0 %v129, 64
    %v170 = vpop.permute.xlu0 %169
    %171 = vrot.lane.b32.xlu0 %v130, 64
    %v172 = vpop.permute.xlu0 %171
    %173 = vrot.lane.b32.xlu0 %v131, 64
    %v174 = vpop.permute.xlu0 %173
    %175 = vrot.lane.b32.xlu0 %v132, 64
    %v176 = vpop.permute.xlu0 %175
    %177 = vrot.lane.b32.xlu0 %v133, 64
    %v178 = vpop.permute.xlu0 %177
    %179 = vrot.lane.b32.xlu0 %v134, 64
    %v180 = vpop.permute.xlu0 %179
    %181 = vrot.lane.b32.xlu0 %v135, 64
    %v182 = vpop.permute.xlu0 %181
    %183 = vrot.lane.b32.xlu0 %v136, 64
    %v184 = vpop.permute.xlu0 %183
    %vm185 = vcmask 523264
    %v188 = vsel %vm185, 0, %v170
    %v191 = vsel %vm185, 0, %v172
    %v195 = vsel %vm185, %v153, %v174
    %v199 = vsel %vm185, %v154, %v176
    %v203 = vsel %vm185, %v155, %v178
    %v207 = vsel %vm185, %v156, %v180
    %v211 = vsel %vm185, %v157, %v182
    %v215 = vsel %vm185, %v158, %v184
    %225 = vrot.lane.b32.xlu0 %v145, 64
    %v226 = vpop.permute.xlu0 %225
    %227 = vrot.lane.b32.xlu0 %v146, 64
    %v228 = vpop.permute.xlu0 %227
    %229 = vrot.lane.b32.xlu0 %v147, 64
    %v230 = vpop.permute.xlu0 %229
    %231 = vrot.lane.b32.xlu0 %v148, 64
    %v232 = vpop.permute.xlu0 %231
    %233 = vrot.lane.b32.xlu0 %v149, 64
    %v234 = vpop.permute.xlu0 %233
    %235 = vrot.lane.b32.xlu0 %v150, 64
    %v236 = vpop.permute.xlu0 %235
    %237 = vrot.lane.b32.xlu0 %v151, 64
    %v238 = vpop.permute.xlu0 %237
    %239 = vrot.lane.b32.xlu0 %v152, 64
    %v240 = vpop.permute.xlu0 %239
    %v243 = vsel %vm185, %v137, %v226
    %v247 = vsel %vm185, %v138, %v228
    %v251 = vsel %vm185, %v139, %v230
    %v255 = vsel %vm185, %v140, %v232
    %v259 = vsel %vm185, %v141, %v234
    %v263 = vsel %vm185, %v142, %v236
    %v267 = vsel %vm185, %v143, %v238
    %v271 = vsel %vm185, %v144, %v240
    %v273 = vld [vmem:[#allocation2] sm:$0xff]
    %v274 = vld [vmem:[#allocation2 + $0x8] sm:$0xff]
    %v275 = vld [vmem:[#allocation2 + $0x10] sm:$0xff]
    %v276 = vld [vmem:[#allocation2 + $0x18] sm:$0xff]
    %v277 = vld [vmem:[#allocation2 + $0x20] sm:$0xff]
    %v278 = vld [vmem:[#allocation2 + $0x28] sm:$0xff]
    %v279 = vld [vmem:[#allocation2 + $0x30] sm:$0xff]
    %v280 = vld [vmem:[#allocation2 + $0x38] sm:$0xff]
    %v281 = vld [vmem:[#allocation2 + $0x40] sm:$0xff]
    %v282 = vld [vmem:[#allocation2 + $0x48] sm:$0xff]
    %v283 = vld [vmem:[#allocation2 + $0x50] sm:$0xff]
    %v284 = vld [vmem:[#allocation2 + $0x58] sm:$0xff]
    %v285 = vld [vmem:[#allocation2 + $0x60] sm:$0xff]
    %v286 = vld [vmem:[#allocation2 + $0x68] sm:$0xff]
    %v287 = vld [vmem:[#allocation2 + $0x70] sm:$0xff]
    %v288 = vld [vmem:[#allocation2 + $0x78] sm:$0xff]
    %v289 = vld [vmem:[#allocation2 + $0x80] sm:$0xff]
    %v290 = vld [vmem:[#allocation2 + $0x88] sm:$0xff]
    %v291 = vld [vmem:[#allocation2 + $0x90] sm:$0xff]
    %v292 = vld [vmem:[#allocation2 + $0x98] sm:$0xff]
    %v293 = vld [vmem:[#allocation2 + $0xa0] sm:$0xff]
    %v294 = vld [vmem:[#allocation2 + $0xa8] sm:$0xff]
    %v295 = vld [vmem:[#allocation2 + $0xb0] sm:$0xff]
    %v296 = vld [vmem:[#allocation2 + $0xb8] sm:$0xff]
    %v297 = vld [vmem:[%s2] sm:$0x3]
    %v299 = vlaneseq
    %v300 = vshrl.u32 %v299, 7
    %v301 = vsub.s32 0, %v300
    %v302 = vrot.slane %v297, %v301
    %v303 = vlaneseq
    %v304 = vshrl.u32 %v303, 7
    %v305 = vsub.s32 1, %v304
    %v306 = vrot.slane %v297, %v305
    %v333 = vunpack.c.l.b16 %v273
    %v334 = vunpack.c.h.b16 %v273
    %v335 = vunpack.c.l.b16 %v274
    %v336 = vunpack.c.h.b16 %v274
    %v337 = vunpack.c.l.b16 %v275
    %v338 = vunpack.c.h.b16 %v275
    %v339 = vunpack.c.l.b16 %v276
    %v340 = vunpack.c.h.b16 %v276
    %v341 = vunpack.c.l.b16 %v277
    %v342 = vunpack.c.h.b16 %v277
    %v343 = vunpack.c.l.b16 %v278
    %v344 = vunpack.c.h.b16 %v278
    %v345 = vunpack.c.l.b16 %v279
    %v346 = vunpack.c.h.b16 %v279
    %v347 = vunpack.c.l.b16 %v280
    %v348 = vunpack.c.h.b16 %v280
    %v349 = vunpack.c.l.b16 %v281
    %v350 = vunpack.c.h.b16 %v281
    %v351 = vunpack.c.l.b16 %v282
    %v352 = vunpack.c.h.b16 %v282
    %v353 = vunpack.c.l.b16 %v283
    %v354 = vunpack.c.h.b16 %v283
    %v355 = vunpack.c.l.b16 %v284
    %v356 = vunpack.c.h.b16 %v284
    %v357 = vunpack.c.l.b16 %v285
    %v358 = vunpack.c.h.b16 %v285
    %v359 = vunpack.c.l.b16 %v286
    %v360 = vunpack.c.h.b16 %v286
    %v361 = vunpack.c.l.b16 %v287
    %v362 = vunpack.c.h.b16 %v287
    %v363 = vunpack.c.l.b16 %v288
    %v364 = vunpack.c.h.b16 %v288
    %v365 = vunpack.c.l.b16 %v289
    %v366 = vunpack.c.h.b16 %v289
    %v367 = vunpack.c.l.b16 %v290
    %v368 = vunpack.c.h.b16 %v290
    %v369 = vunpack.c.l.b16 %v291
    %v370 = vunpack.c.h.b16 %v291
    %v371 = vunpack.c.l.b16 %v292
    %v372 = vunpack.c.h.b16 %v292
    %v373 = vunpack.c.l.b16 %v293
    %v374 = vunpack.c.h.b16 %v293
    %v375 = vunpack.c.l.b16 %v294
    %v376 = vunpack.c.h.b16 %v294
    %v377 = vunpack.c.l.b16 %v295
    %v378 = vunpack.c.h.b16 %v295
    %v379 = vunpack.c.l.b16 %v296
    %v380 = vunpack.c.h.b16 %v296
    %v381 = vpack.c.b16 %v335, %v333
    %v382 = vpack.c.b16 %v336, %v334
    %v383 = vpack.c.b16 %v339, %v337
    %v384 = vpack.c.b16 %v340, %v338
    %v385 = vpack.c.b16 %v343, %v341
    %v386 = vpack.c.b16 %v344, %v342
    %v387 = vpack.c.b16 %v347, %v345
    %v388 = vpack.c.b16 %v348, %v346
    %v389 = vpack.c.b16 %v351, %v349
    %v390 = vpack.c.b16 %v352, %v350
    %v391 = vpack.c.b16 %v355, %v353
    %v392 = vpack.c.b16 %v356, %v354
    %v393 = vpack.c.b16 %v359, %v357
    %v394 = vpack.c.b16 %v360, %v358
    %v395 = vpack.c.b16 %v363, %v361
    %v396 = vpack.c.b16 %v364, %v362
    %v397 = vpack.c.b16 %v367, %v365
    %v398 = vpack.c.b16 %v368, %v366
    %v399 = vpack.c.b16 %v371, %v369
    %v400 = vpack.c.b16 %v372, %v370
    %v401 = vpack.c.b16 %v375, %v373
    %v402 = vpack.c.b16 %v376, %v374
    %v403 = vpack.c.b16 %v379, %v377
    %v404 = vpack.c.b16 %v380, %v378
    %v429 = vsel %vm185, %v137, 0
    %v431 = vsel %vm185, %v138, 0
    %v433 = vsel %vm185, %v139, 0
    %v435 = vsel %vm185, %v140, 0
    %v437 = vsel %vm185, %v141, 0
    %v439 = vsel %vm185, %v142, 0
    %v441 = vsel %vm185, %v143, 0
    %v443 = vsel %vm185, %v144, 0
    %445 = vmatprep.subr.bf16.mxu0 %v382
    %446 = vmatpush1.bf16.msra.mxu0 %v381
    %447 = vmatprep.subr.bf16.mxu0 %v384
    %448 = vmatpush1.bf16.msra.mxu0 %v383
    %449 = vmatprep.subr.bf16.mxu0 %v386
    %450 = vmatpush1.bf16.msra.mxu0 %v385
    %451 = vmatprep.subr.bf16.mxu0 %v388
    %452 = vmatpush1.bf16.msra.mxu0 %v387
    %453 = vmatprep.subr.bf16.mxu0 %v390
    %454 = vmatpush1.bf16.msra.mxu0 %v389
    %455 = vmatprep.subr.bf16.mxu0 %v392
    %456 = vmatpush1.bf16.msra.mxu0 %v391
    %457 = vmatprep.subr.bf16.mxu0 %v394
    %458 = vmatpush1.bf16.msra.mxu0 %v393
    %459 = vmatprep.subr.bf16.mxu0 %v396
    %460 = vmatpush1.bf16.msra.mxu0 %v395
    %461 = vmatprep.subr.bf16.mxu0 %v398
    %462 = vmatpush1.bf16.msra.mxu0 %v397
    %463 = vmatprep.subr.bf16.mxu0 %v400
    %464 = vmatpush1.bf16.msra.mxu0 %v399
    %465 = vmatprep.subr.bf16.mxu0 %v402
    %466 = vmatpush1.bf16.msra.mxu0 %v401
    %467 = vmatprep.subr.bf16.mxu0 %v404
    %468 = vmatpush1.bf16.msra.mxu0 %v403
    %469 = vmatprep.subr.bf16.mxu0 0
    %470 = vmatpush1.bf16.msra.mxu0 0
    %471 = vmatprep.subr.bf16.mxu0 0
    %472 = vmatpush1.bf16.msra.mxu0 0
    %473 = vmatprep.subr.bf16.mxu0 0
    %474 = vmatpush1.bf16.msra.mxu0 0
    %475 = vmatprep.subr.bf16.mxu0 0
    %476 = vmatpush1.bf16.msra.mxu0 0
    %477 = vmatprep.mubr.bf16.mxu0 %v429
    %478 = vmatmul.mubr.bf16.gmra.mrb[0].mxu0 %v188
    %v479 = vpop.f32.mrb[0].mxu0
    %v480 = vadd.f32 %v302, %v479
    %v481 = vpop.f32.mrb[0].mxu0
    %v482 = vadd.f32 %v306, %v481
    %v483 = vpop.f32.mrb[0].mxu0
    %v484 = vadd.f32 %v302, %v483
    %v485 = vpop.f32.mrb[0].mxu0
    %v486 = vadd.f32 %v306, %v485
    %487 = vmatprep.mubr.bf16.mxu0 %v431
    %488 = vmatmul.mubr.bf16.gmra.mrb[0].mxu0 %v191
    %v489 = vpop.f32.mrb[0].mxu0
    %v490 = vadd.f32 %v302, %v489
    %v491 = vpop.f32.mrb[0].mxu0
    %v492 = vadd.f32 %v306, %v491
    %v493 = vpop.f32.mrb[0].mxu0
    %v494 = vadd.f32 %v302, %v493
    %v495 = vpop.f32.mrb[0].mxu0
    %v496 = vadd.f32 %v306, %v495
    %497 = vmatprep.mubr.bf16.mxu0 %v433
    %498 = vmatmul.mubr.bf16.gmra.mrb[0].mxu0 %v195
    %v499 = vpop.f32.mrb[0].mxu0
    %v500 = vadd.f32 %v302, %v499
    %v501 = vpop.f32.mrb[0].mxu0
    %v502 = vadd.f32 %v306, %v501
    %v503 = vpop.f32.mrb[0].mxu0
    %v504 = vadd.f32 %v302, %v503
    %v505 = vpop.f32.mrb[0].mxu0
    %v506 = vadd.f32 %v306, %v505
    %507 = vmatprep.mubr.bf16.mxu0 %v435
    %508 = vmatmul.mubr.bf16.gmra.mrb[0].mxu0 %v199
    %v509 = vpop.f32.mrb[0].mxu0
    %v510 = vadd.f32 %v302, %v509
    %v511 = vpop.f32.mrb[0].mxu0
    %v512 = vadd.f32 %v306, %v511
    %v513 = vpop.f32.mrb[0].mxu0
    %v514 = vadd.f32 %v302, %v513
    %v515 = vpop.f32.mrb[0].mxu0
    %v516 = vadd.f32 %v306, %v515
    %517 = vmatprep.mubr.bf16.mxu0 %v437
    %518 = vmatmul.mubr.bf16.gmra.mrb[0].mxu0 %v203
    %v519 = vpop.f32.mrb[0].mxu0
    %v520 = vadd.f32 %v302, %v519
    %v521 = vpop.f32.mrb[0].mxu0
    %v522 = vadd.f32 %v306, %v521
    %v523 = vpop.f32.mrb[0].mxu0
    %v524 = vadd.f32 %v302, %v523
    %v525 = vpop.f32.mrb[0].mxu0
    %v526 = vadd.f32 %v306, %v525
    %527 = vmatprep.mubr.bf16.mxu0 %v439
    %528 = vmatmul.mubr.bf16.gmra.mrb[0].mxu0 %v207
    %v529 = vpop.f32.mrb[0].mxu0
    %v530 = vadd.f32 %v302, %v529
    %v531 = vpop.f32.mrb[0].mxu0
    %v532 = vadd.f32 %v306, %v531
    %v533 = vpop.f32.mrb[0].mxu0
    %v534 = vadd.f32 %v302, %v533
    %v535 = vpop.f32.mrb[0].mxu0
    %v536 = vadd.f32 %v306, %v535
    %537 = vmatprep.mubr.bf16.mxu0 %v441
    %538 = vmatmul.mubr.bf16.gmra.mrb[0].mxu0 %v211
    %v539 = vpop.f32.mrb[0].mxu0
    %v540 = vadd.f32 %v302, %v539
    %v541 = vpop.f32.mrb[0].mxu0
    %v542 = vadd.f32 %v306, %v541
    %v543 = vpop.f32.mrb[0].mxu0
    %v544 = vadd.f32 %v302, %v543
    %v545 = vpop.f32.mrb[0].mxu0
    %v546 = vadd.f32 %v306, %v545
    %547 = vmatprep.mubr.bf16.mxu0 %v443
    %548 = vmatmul.mubr.bf16.gmra.mrb[0].mxu0 %v215
    %v549 = vpop.f32.mrb[0].mxu0
    %v550 = vadd.f32 %v302, %v549
    %v551 = vpop.f32.mrb[0].mxu0
    %v552 = vadd.f32 %v306, %v551
    %v553 = vpop.f32.mrb[0].mxu0
    %v554 = vadd.f32 %v302, %v553
    %v555 = vpop.f32.mrb[0].mxu0
    %v556 = vadd.f32 %v306, %v555
    %557 = vdwg.mxu0
    %v558 = vmax.f32 %v480, -1.0
    %v559 = vmax.f32 %v482, -1.0
    %v560 = vmax.f32 %v484, -1.0
    %v561 = vmax.f32 %v486, -1.0
    %v562 = vmax.f32 %v490, -1.0
    %v563 = vmax.f32 %v492, -1.0
    %v564 = vmax.f32 %v494, -1.0
    %v565 = vmax.f32 %v496, -1.0
    %v566 = vmax.f32 %v500, -1.0
    %v567 = vmax.f32 %v502, -1.0
    %v568 = vmax.f32 %v504, -1.0
    %v569 = vmax.f32 %v506, -1.0
    %v570 = vmax.f32 %v510, -1.0
    %v571 = vmax.f32 %v512, -1.0
    %v572 = vmax.f32 %v514, -1.0
    %v573 = vmax.f32 %v516, -1.0
    %v574 = vmax.f32 %v520, -1.0
    %v575 = vmax.f32 %v522, -1.0
    %v576 = vmax.f32 %v524, -1.0
    %v577 = vmax.f32 %v526, -1.0
    %v578 = vmax.f32 %v530, -1.0
    %v579 = vmax.f32 %v532, -1.0
    %v580 = vmax.f32 %v534, -1.0
    %v581 = vmax.f32 %v536, -1.0
    %v582 = vmax.f32 %v540, -1.0
    %v583 = vmax.f32 %v542, -1.0
    %v584 = vmax.f32 %v544, -1.0
    %v585 = vmax.f32 %v546, -1.0
    %v586 = vmax.f32 %v550, -1.0
    %v587 = vmax.f32 %v552, -1.0
    %v588 = vmax.f32 %v554, -1.0
    %v589 = vmax.f32 %v556, -1.0
    %v590 = vmin.f32 %v558, 1.0
    %v591 = vmin.f32 %v559, 1.0
    %v592 = vmin.f32 %v560, 1.0
    %v593 = vmin.f32 %v561, 1.0
    %v594 = vmin.f32 %v562, 1.0
    %v595 = vmin.f32 %v563, 1.0
    %v596 = vmin.f32 %v564, 1.0
    %v597 = vmin.f32 %v565, 1.0
    %v598 = vmin.f32 %v566, 1.0
    %v599 = vmin.f32 %v567, 1.0
    %v600 = vmin.f32 %v568, 1.0
    %v601 = vmin.f32 %v569, 1.0
    %v602 = vmin.f32 %v570, 1.0
    %v603 = vmin.f32 %v571, 1.0
    %v604 = vmin.f32 %v572, 1.0
    %v605 = vmin.f32 %v573, 1.0
    %v606 = vmin.f32 %v574, 1.0
    %v607 = vmin.f32 %v575, 1.0
    %v608 = vmin.f32 %v576, 1.0
    %v609 = vmin.f32 %v577, 1.0
    %v610 = vmin.f32 %v578, 1.0
    %v611 = vmin.f32 %v579, 1.0
    %v612 = vmin.f32 %v580, 1.0
    %v613 = vmin.f32 %v581, 1.0
    %v614 = vmin.f32 %v582, 1.0
    %v615 = vmin.f32 %v583, 1.0
    %v616 = vmin.f32 %v584, 1.0
    %v617 = vmin.f32 %v585, 1.0
    %v618 = vmin.f32 %v586, 1.0
    %v619 = vmin.f32 %v587, 1.0
    %v620 = vmin.f32 %v588, 1.0
    %v621 = vmin.f32 %v589, 1.0
    %v622 = vpack.c.bf16 %v592, %v590
    %v623 = vpack.c.bf16 %v593, %v591
    %v624 = vpack.c.bf16 %v596, %v594
    %v625 = vpack.c.bf16 %v597, %v595
    %v626 = vpack.c.bf16 %v600, %v598
    %v627 = vpack.c.bf16 %v601, %v599
    %v628 = vpack.c.bf16 %v604, %v602
    %v629 = vpack.c.bf16 %v605, %v603
    %v630 = vpack.c.bf16 %v608, %v606
    %v631 = vpack.c.bf16 %v609, %v607
    %v632 = vpack.c.bf16 %v612, %v610
    %v633 = vpack.c.bf16 %v613, %v611
    %v634 = vpack.c.bf16 %v616, %v614
    %v635 = vpack.c.bf16 %v617, %v615
    %v636 = vpack.c.bf16 %v620, %v618
    %v637 = vpack.c.bf16 %v621, %v619
    %v638 = vsel %vm185, %v153, 0
    %v640 = vsel %vm185, %v154, 0
    %v642 = vsel %vm185, %v155, 0
    %v644 = vsel %vm185, %v156, 0
    %v646 = vsel %vm185, %v157, 0
    %v648 = vsel %vm185, %v158, 0
    %v651 = vsel %vm185, %v159, 0
    %v654 = vsel %vm185, %v160, 0
    %656 = vmatprep.subr.bf16.mxu0 %v382
    %657 = vmatpush1.bf16.msra.mxu0 %v381
    %658 = vmatprep.subr.bf16.mxu0 %v384
    %659 = vmatpush1.bf16.msra.mxu0 %v383
    %660 = vmatprep.subr.bf16.mxu0 %v386
    %661 = vmatpush1.bf16.msra.mxu0 %v385
    %662 = vmatprep.subr.bf16.mxu0 %v388
    %663 = vmatpush1.bf16.msra.mxu0 %v387
    %664 = vmatprep.subr.bf16.mxu0 %v390
    %665 = vmatpush1.bf16.msra.mxu0 %v389
    %666 = vmatprep.subr.bf16.mxu0 %v392
    %667 = vmatpush1.bf16.msra.mxu0 %v391
    %668 = vmatprep.subr.bf16.mxu0 %v394
    %669 = vmatpush1.bf16.msra.mxu0 %v393
    %670 = vmatprep.subr.bf16.mxu0 %v396
    %671 = vmatpush1.bf16.msra.mxu0 %v395
    %672 = vmatprep.subr.bf16.mxu0 %v398
    %673 = vmatpush1.bf16.msra.mxu0 %v397
    %674 = vmatprep.subr.bf16.mxu0 %v400
    %675 = vmatpush1.bf16.msra.mxu0 %v399
    %676 = vmatprep.subr.bf16.mxu0 %v402
    %677 = vmatpush1.bf16.msra.mxu0 %v401
    %678 = vmatprep.subr.bf16.mxu0 %v404
    %679 = vmatpush1.bf16.msra.mxu0 %v403
    %680 = vmatprep.subr.bf16.mxu0 0
    %681 = vmatpush1.bf16.msra.mxu0 0
    %682 = vmatprep.subr.bf16.mxu0 0
    %683 = vmatpush1.bf16.msra.mxu0 0
    %684 = vmatprep.subr.bf16.mxu0 0
    %685 = vmatpush1.bf16.msra.mxu0 0
    %686 = vmatprep.subr.bf16.mxu0 0
    %687 = vmatpush1.bf16.msra.mxu0 0
    %688 = vmatprep.mubr.bf16.mxu0 %v638
    %689 = vmatmul.mubr.bf16.gmra.mrb[0].mxu0 %v243
    %v690 = vpop.f32.mrb[0].mxu0
    %v691 = vadd.f32 %v302, %v690
    %v692 = vpop.f32.mrb[0].mxu0
    %v693 = vadd.f32 %v306, %v692
    %v694 = vpop.f32.mrb[0].mxu0
    %v695 = vadd.f32 %v302, %v694
    %v696 = vpop.f32.mrb[0].mxu0
    %v697 = vadd.f32 %v306, %v696
    %698 = vmatprep.mubr.bf16.mxu0 %v640
    %699 = vmatmul.mubr.bf16.gmra.mrb[0].mxu0 %v247
    %v700 = vpop.f32.mrb[0].mxu0
    %v701 = vadd.f32 %v302, %v700
    %v702 = vpop.f32.mrb[0].mxu0
    %v703 = vadd.f32 %v306, %v702
    %v704 = vpop.f32.mrb[0].mxu0
    %v705 = vadd.f32 %v302, %v704
    %v706 = vpop.f32.mrb[0].mxu0
    %v707 = vadd.f32 %v306, %v706
    %708 = vmatprep.mubr.bf16.mxu0 %v642
    %709 = vmatmul.mubr.bf16.gmra.mrb[0].mxu0 %v251
    %v710 = vpop.f32.mrb[0].mxu0
    %v711 = vadd.f32 %v302, %v710
    %v712 = vpop.f32.mrb[0].mxu0
    %v713 = vadd.f32 %v306, %v712
    %v714 = vpop.f32.mrb[0].mxu0
    %v715 = vadd.f32 %v302, %v714
    %v716 = vpop.f32.mrb[0].mxu0
    %v717 = vadd.f32 %v306, %v716
    %718 = vmatprep.mubr.bf16.mxu0 %v644
    %719 = vmatmul.mubr.bf16.gmra.mrb[0].mxu0 %v255
    %v720 = vpop.f32.mrb[0].mxu0
    %v721 = vadd.f32 %v302, %v720
    %v722 = vpop.f32.mrb[0].mxu0
    %v723 = vadd.f32 %v306, %v722
    %v724 = vpop.f32.mrb[0].mxu0
    %v725 = vadd.f32 %v302, %v724
    %v726 = vpop.f32.mrb[0].mxu0
    %v727 = vadd.f32 %v306, %v726
    %728 = vmatprep.mubr.bf16.mxu0 %v646
    %729 = vmatmul.mubr.bf16.gmra.mrb[0].mxu0 %v259
    %v730 = vpop.f32.mrb[0].mxu0
    %v731 = vadd.f32 %v302, %v730
    %v732 = vpop.f32.mrb[0].mxu0
    %v733 = vadd.f32 %v306, %v732
    %v734 = vpop.f32.mrb[0].mxu0
    %v735 = vadd.f32 %v302, %v734
    %v736 = vpop.f32.mrb[0].mxu0
    %v737 = vadd.f32 %v306, %v736
    %738 = vmatprep.mubr.bf16.mxu0 %v648
    %739 = vmatmul.mubr.bf16.gmra.mrb[0].mxu0 %v263
    %v740 = vpop.f32.mrb[0].mxu0
    %v741 = vadd.f32 %v302, %v740
    %v742 = vpop.f32.mrb[0].mxu0
    %v743 = vadd.f32 %v306, %v742
    %v744 = vpop.f32.mrb[0].mxu0
    %v745 = vadd.f32 %v302, %v744
    %v746 = vpop.f32.mrb[0].mxu0
    %v747 = vadd.f32 %v306, %v746
    %748 = vmatprep.mubr.bf16.mxu0 %v651
    %749 = vmatmul.mubr.bf16.gmra.mrb[0].mxu0 %v267
    %v750 = vpop.f32.mrb[0].mxu0
    %v751 = vadd.f32 %v302, %v750
    %v752 = vpop.f32.mrb[0].mxu0
    %v753 = vadd.f32 %v306, %v752
    %v754 = vpop.f32.mrb[0].mxu0
    %v755 = vadd.f32 %v302, %v754
    %v756 = vpop.f32.mrb[0].mxu0
    %v757 = vadd.f32 %v306, %v756
    %758 = vmatprep.mubr.bf16.mxu0 %v654
    %759 = vmatmul.mubr.bf16.gmra.mrb[0].mxu0 %v271
    %v760 = vpop.f32.mrb[0].mxu0
    %v761 = vadd.f32 %v302, %v760
    %v762 = vpop.f32.mrb[0].mxu0
    %v763 = vadd.f32 %v306, %v762
    %v764 = vpop.f32.mrb[0].mxu0
    %v765 = vadd.f32 %v302, %v764
    %v766 = vpop.f32.mrb[0].mxu0
    %v767 = vadd.f32 %v306, %v766
    %768 = vdwg.mxu0
    %v769 = vmax.f32 %v691, -1.0
    %v770 = vmax.f32 %v693, -1.0
    %v771 = vmax.f32 %v695, -1.0
    %v772 = vmax.f32 %v697, -1.0
    %v773 = vmax.f32 %v701, -1.0
    %v774 = vmax.f32 %v703, -1.0
    %v775 = vmax.f32 %v705, -1.0
    %v776 = vmax.f32 %v707, -1.0
    %v777 = vmax.f32 %v711, -1.0
    %v778 = vmax.f32 %v713, -1.0
    %v779 = vmax.f32 %v715, -1.0
    %v780 = vmax.f32 %v717, -1.0
    %v781 = vmax.f32 %v721, -1.0
    %v782 = vmax.f32 %v723, -1.0
    %v783 = vmax.f32 %v725, -1.0
    %v784 = vmax.f32 %v727, -1.0
    %v785 = vmax.f32 %v731, -1.0
    %v786 = vmax.f32 %v733, -1.0
    %v787 = vmax.f32 %v735, -1.0
    %v788 = vmax.f32 %v737, -1.0
    %v789 = vmax.f32 %v741, -1.0
    %v790 = vmax.f32 %v743, -1.0
    %v791 = vmax.f32 %v745, -1.0
    %v792 = vmax.f32 %v747, -1.0
    %v793 = vmax.f32 %v751, -1.0
    %v794 = vmax.f32 %v753, -1.0
    %v795 = vmax.f32 %v755, -1.0
    %v796 = vmax.f32 %v757, -1.0
    %v797 = vmax.f32 %v761, -1.0
    %v798 = vmax.f32 %v763, -1.0
    %v799 = vmax.f32 %v765, -1.0
    %v800 = vmax.f32 %v767, -1.0
    %v801 = vmin.f32 %v769, 1.0
    %v802 = vmin.f32 %v770, 1.0
    %v803 = vmin.f32 %v771, 1.0
    %v804 = vmin.f32 %v772, 1.0
    %v805 = vmin.f32 %v773, 1.0
    %v806 = vmin.f32 %v774, 1.0
    %v807 = vmin.f32 %v775, 1.0
    %v808 = vmin.f32 %v776, 1.0
    %v809 = vmin.f32 %v777, 1.0
    %v810 = vmin.f32 %v778, 1.0
    %v811 = vmin.f32 %v779, 1.0
    %v812 = vmin.f32 %v780, 1.0
    %v813 = vmin.f32 %v781, 1.0
    %v814 = vmin.f32 %v782, 1.0
    %v815 = vmin.f32 %v783, 1.0
    %v816 = vmin.f32 %v784, 1.0
    %v817 = vmin.f32 %v785, 1.0
    %v818 = vmin.f32 %v786, 1.0
    %v819 = vmin.f32 %v787, 1.0
    %v820 = vmin.f32 %v788, 1.0
    %v821 = vmin.f32 %v789, 1.0
    %v822 = vmin.f32 %v790, 1.0
    %v823 = vmin.f32 %v791, 1.0
    %v824 = vmin.f32 %v792, 1.0
    %v825 = vmin.f32 %v793, 1.0
    %v826 = vmin.f32 %v794, 1.0
    %v827 = vmin.f32 %v795, 1.0
    %v828 = vmin.f32 %v796, 1.0
    %v829 = vmin.f32 %v797, 1.0
    %v830 = vmin.f32 %v798, 1.0
    %v831 = vmin.f32 %v799, 1.0
    %v832 = vmin.f32 %v800, 1.0
    %v833 = vpack.c.bf16 %v803, %v801
    %v834 = vpack.c.bf16 %v804, %v802
    %v835 = vpack.c.bf16 %v807, %v805
    %v836 = vpack.c.bf16 %v808, %v806
    %v837 = vpack.c.bf16 %v811, %v809
    %v838 = vpack.c.bf16 %v812, %v810
    %v839 = vpack.c.bf16 %v815, %v813
    %v840 = vpack.c.bf16 %v816, %v814
    %v841 = vpack.c.bf16 %v819, %v817
    %v842 = vpack.c.bf16 %v820, %v818
    %v843 = vpack.c.bf16 %v823, %v821
    %v844 = vpack.c.bf16 %v824, %v822
    %v845 = vpack.c.bf16 %v827, %v825
    %v846 = vpack.c.bf16 %v828, %v826
    %v847 = vpack.c.bf16 %v831, %v829
    %v848 = vpack.c.bf16 %v832, %v830
    %v849 = vld [vmem:[%s3] sm:$0xff]
    %v850 = vld [vmem:[%s3 + $0x8] sm:$0xff]
    %v851 = vld [vmem:[%s3 + $0x10] sm:$0xff]
    %v852 = vld [vmem:[%s3 + $0x18] sm:$0xff]
    %v853 = vld [vmem:[%s3 + $0x20] sm:$0xff]
    %v854 = vld [vmem:[%s3 + $0x28] sm:$0xff]
    %v855 = vld [vmem:[%s3 + $0x30] sm:$0xff]
    %v856 = vld [vmem:[%s3 + $0x38] sm:$0xff]
    %v857 = vld [vmem:[%s3 + $0x40] sm:$0xff]
    %v858 = vld [vmem:[%s3 + $0x48] sm:$0xff]
    %v859 = vld [vmem:[%s3 + $0x50] sm:$0xff]
    %v860 = vld [vmem:[%s3 + $0x58] sm:$0xff]
    %v861 = vld [vmem:[%s3 + $0x60] sm:$0xff]
    %v862 = vld [vmem:[%s3 + $0x68] sm:$0xff]
    %v863 = vld [vmem:[%s3 + $0x70] sm:$0xff]
    %v864 = vld [vmem:[%s3 + $0x78] sm:$0xff]
    %v865 = vld [vmem:[%s3 + $0x80] sm:$0xff]
    %v866 = vld [vmem:[%s3 + $0x88] sm:$0xff]
    %v867 = vld [vmem:[%s3 + $0x90] sm:$0xff]
    %v868 = vld [vmem:[%s3 + $0x98] sm:$0xff]
    %v869 = vld [vmem:[%s3 + $0xa0] sm:$0xff]
    %v870 = vld [vmem:[%s3 + $0xa8] sm:$0xff]
    %v871 = vld [vmem:[%s3 + $0xb0] sm:$0xff]
    %v872 = vld [vmem:[%s3 + $0xb8] sm:$0xff]
    %v873 = vld [vmem:[%s3 + $0xc0] sm:$0xff]
    %v874 = vld [vmem:[%s3 + $0xc8] sm:$0xff]
    %v875 = vld [vmem:[%s3 + $0xd0] sm:$0xff]
    %v876 = vld [vmem:[%s3 + $0xd8] sm:$0xff]
    %v877 = vld [vmem:[%s3 + $0xe0] sm:$0xff]
    %v878 = vld [vmem:[%s3 + $0xe8] sm:$0xff]
    %v879 = vld [vmem:[%s3 + $0xf0] sm:$0xff]
    %v880 = vld [vmem:[%s3 + $0xf8] sm:$0xff]
    %v881 = vld [vmem:[%s3 + $0x100] sm:$0xff]
    %v882 = vld [vmem:[%s3 + $0x108] sm:$0xff]
    %v883 = vld [vmem:[%s3 + $0x110] sm:$0xff]
    %v884 = vld [vmem:[%s3 + $0x118] sm:$0xff]
    %v885 = vld [vmem:[%s3 + $0x120] sm:$0xff]
    %v886 = vld [vmem:[%s3 + $0x128] sm:$0xff]
    %v887 = vld [vmem:[%s3 + $0x130] sm:$0xff]
    %v888 = vld [vmem:[%s3 + $0x138] sm:$0xff]
    %v889 = vld [vmem:[%s3 + $0x140] sm:$0xff]
    %v890 = vld [vmem:[%s3 + $0x148] sm:$0xff]
    %v891 = vld [vmem:[%s3 + $0x150] sm:$0xff]
    %v892 = vld [vmem:[%s3 + $0x158] sm:$0xff]
    %v893 = vld [vmem:[%s3 + $0x160] sm:$0xff]
    %v894 = vld [vmem:[%s3 + $0x168] sm:$0xff]
    %v895 = vld [vmem:[%s3 + $0x170] sm:$0xff]
    %v896 = vld [vmem:[%s3 + $0x178] sm:$0xff]
    %v897 = vld [vmem:[%s3 + $0x180] sm:$0xff]
    %v898 = vld [vmem:[%s3 + $0x188] sm:$0xff]
    %v899 = vld [vmem:[%s3 + $0x190] sm:$0xff]
    %v900 = vld [vmem:[%s3 + $0x198] sm:$0xff]
    %v901 = vld [vmem:[%s3 + $0x1a0] sm:$0xff]
    %v902 = vld [vmem:[%s3 + $0x1a8] sm:$0xff]
    %v903 = vld [vmem:[%s3 + $0x1b0] sm:$0xff]
    %v904 = vld [vmem:[%s3 + $0x1b8] sm:$0xff]
    %v905 = vld [vmem:[%s3 + $0x1c0] sm:$0xff]
    %v906 = vld [vmem:[%s3 + $0x1c8] sm:$0xff]
    %v907 = vld [vmem:[%s3 + $0x1d0] sm:$0xff]
    %v908 = vld [vmem:[%s3 + $0x1d8] sm:$0xff]
    %v909 = vld [vmem:[%s3 + $0x1e0] sm:$0xff]
    %v910 = vld [vmem:[%s3 + $0x1e8] sm:$0xff]
    %v911 = vld [vmem:[%s3 + $0x1f0] sm:$0xff]
    %v912 = vld [vmem:[%s3 + $0x1f8] sm:$0xff]
    %v913 = vld [vmem:[%s3 + $0x200] sm:$0xff]
    %v914 = vld [vmem:[%s3 + $0x208] sm:$0xff]
    %v915 = vld [vmem:[%s3 + $0x210] sm:$0xff]
    %v916 = vld [vmem:[%s3 + $0x218] sm:$0xff]
    %v917 = vld [vmem:[%s3 + $0x220] sm:$0xff]
    %v918 = vld [vmem:[%s3 + $0x228] sm:$0xff]
    %v919 = vld [vmem:[%s3 + $0x230] sm:$0xff]
    %v920 = vld [vmem:[%s3 + $0x238] sm:$0xff]
    %v921 = vld [vmem:[%s3 + $0x240] sm:$0xff]
    %v922 = vld [vmem:[%s3 + $0x248] sm:$0xff]
    %v923 = vld [vmem:[%s3 + $0x250] sm:$0xff]
    %v924 = vld [vmem:[%s3 + $0x258] sm:$0xff]
    %v925 = vld [vmem:[%s3 + $0x260] sm:$0xff]
    %v926 = vld [vmem:[%s3 + $0x268] sm:$0xff]
    %v927 = vld [vmem:[%s3 + $0x270] sm:$0xff]
    %v928 = vld [vmem:[%s3 + $0x278] sm:$0xff]
    %v929 = vld [vmem:[%s3 + $0x280] sm:$0xff]
    %v930 = vld [vmem:[%s3 + $0x288] sm:$0xff]
    %v931 = vld [vmem:[%s3 + $0x290] sm:$0xff]
    %v932 = vld [vmem:[%s3 + $0x298] sm:$0xff]
    %v933 = vld [vmem:[%s3 + $0x2a0] sm:$0xff]
    %v934 = vld [vmem:[%s3 + $0x2a8] sm:$0xff]
    %v935 = vld [vmem:[%s3 + $0x2b0] sm:$0xff]
    %v936 = vld [vmem:[%s3 + $0x2b8] sm:$0xff]
    %v937 = vld [vmem:[%s3 + $0x2c0] sm:$0xff]
    %v938 = vld [vmem:[%s3 + $0x2c8] sm:$0xff]
    %v939 = vld [vmem:[%s3 + $0x2d0] sm:$0xff]
    %v940 = vld [vmem:[%s3 + $0x2d8] sm:$0xff]
    %v941 = vld [vmem:[%s3 + $0x2e0] sm:$0xff]
    %v942 = vld [vmem:[%s3 + $0x2e8] sm:$0xff]
    %v943 = vld [vmem:[%s3 + $0x2f0] sm:$0xff]
    %v944 = vld [vmem:[%s3 + $0x2f8] sm:$0xff]
    %v945 = vld [vmem:[%s4] sm:$0x3]
    %v947 = vlaneseq
    %v948 = vshrl.u32 %v947, 7
    %v949 = vsub.s32 0, %v948
    %v950 = vrot.slane %v945, %v949
    %v951 = vlaneseq
    %v952 = vshrl.u32 %v951, 7
    %v953 = vsub.s32 1, %v952
    %v954 = vrot.slane %v945, %v953
    %v1053 = vunpack.c.l.b16 %v849
    %v1054 = vunpack.c.h.b16 %v849
    %v1055 = vunpack.c.l.b16 %v850
    %v1056 = vunpack.c.h.b16 %v850
    %v1057 = vunpack.c.l.b16 %v851
    %v1058 = vunpack.c.h.b16 %v851
    %v1059 = vunpack.c.l.b16 %v852
    %v1060 = vunpack.c.h.b16 %v852
    %v1061 = vunpack.c.l.b16 %v853
    %v1062 = vunpack.c.h.b16 %v853
    %v1063 = vunpack.c.l.b16 %v854
    %v1064 = vunpack.c.h.b16 %v854
    %v1065 = vunpack.c.l.b16 %v855
    %v1066 = vunpack.c.h.b16 %v855
    %v1067 = vunpack.c.l.b16 %v856
    %v1068 = vunpack.c.h.b16 %v856
    %v1069 = vunpack.c.l.b16 %v857
    %v1070 = vunpack.c.h.b16 %v857
    %v1071 = vunpack.c.l.b16 %v858
    %v1072 = vunpack.c.h.b16 %v858
    %v1073 = vunpack.c.l.b16 %v859
    %v1074 = vunpack.c.h.b16 %v859
    %v1075 = vunpack.c.l.b16 %v860
    %v1076 = vunpack.c.h.b16 %v860
    %v1077 = vunpack.c.l.b16 %v861
    %v1078 = vunpack.c.h.b16 %v861
    %v1079 = vunpack.c.l.b16 %v862
    %v1080 = vunpack.c.h.b16 %v862
    %v1081 = vunpack.c.l.b16 %v863
    %v1082 = vunpack.c.h.b16 %v863
    %v1083 = vunpack.c.l.b16 %v864
    %v1084 = vunpack.c.h.b16 %v864
    %v1085 = vunpack.c.l.b16 %v865
    %v1086 = vunpack.c.h.b16 %v865
    %v1087 = vunpack.c.l.b16 %v866
    %v1088 = vunpack.c.h.b16 %v866
    %v1089 = vunpack.c.l.b16 %v867
    %v1090 = vunpack.c.h.b16 %v867
    %v1091 = vunpack.c.l.b16 %v868
    %v1092 = vunpack.c.h.b16 %v868
    %v1093 = vunpack.c.l.b16 %v869
    %v1094 = vunpack.c.h.b16 %v869
    %v1095 = vunpack.c.l.b16 %v870
    %v1096 = vunpack.c.h.b16 %v870
    %v1097 = vunpack.c.l.b16 %v871
    %v1098 = vunpack.c.h.b16 %v871
    %v1099 = vunpack.c.l.b16 %v872
    %v1100 = vunpack.c.h.b16 %v872
    %v1101 = vunpack.c.l.b16 %v873
    %v1102 = vunpack.c.h.b16 %v873
    %v1103 = vunpack.c.l.b16 %v874
    %v1104 = vunpack.c.h.b16 %v874
    %v1105 = vunpack.c.l.b16 %v875
    %v1106 = vunpack.c.h.b16 %v875
    %v1107 = vunpack.c.l.b16 %v876
    %v1108 = vunpack.c.h.b16 %v876
    %v1109 = vunpack.c.l.b16 %v877
    %v1110 = vunpack.c.h.b16 %v877
    %v1111 = vunpack.c.l.b16 %v878
    %v1112 = vunpack.c.h.b16 %v878
    %v1113 = vunpack.c.l.b16 %v879
    %v1114 = vunpack.c.h.b16 %v879
    %v1115 = vunpack.c.l.b16 %v880
    %v1116 = vunpack.c.h.b16 %v880
    %v1117 = vunpack.c.l.b16 %v881
    %v1118 = vunpack.c.h.b16 %v881
    %v1119 = vunpack.c.l.b16 %v882
    %v1120 = vunpack.c.h.b16 %v882
    %v1121 = vunpack.c.l.b16 %v883
    %v1122 = vunpack.c.h.b16 %v883
    %v1123 = vunpack.c.l.b16 %v884
    %v1124 = vunpack.c.h.b16 %v884
    %v1125 = vunpack.c.l.b16 %v885
    %v1126 = vunpack.c.h.b16 %v885
    %v1127 = vunpack.c.l.b16 %v886
    %v1128 = vunpack.c.h.b16 %v886
    %v1129 = vunpack.c.l.b16 %v887
    %v1130 = vunpack.c.h.b16 %v887
    %v1131 = vunpack.c.l.b16 %v888
    %v1132 = vunpack.c.h.b16 %v888
    %v1133 = vunpack.c.l.b16 %v889
    %v1134 = vunpack.c.h.b16 %v889
    %v1135 = vunpack.c.l.b16 %v890
    %v1136 = vunpack.c.h.b16 %v890
    %v1137 = vunpack.c.l.b16 %v891
    %v1138 = vunpack.c.h.b16 %v891
    %v1139 = vunpack.c.l.b16 %v892
    %v1140 = vunpack.c.h.b16 %v892
    %v1141 = vunpack.c.l.b16 %v893
    %v1142 = vunpack.c.h.b16 %v893
    %v1143 = vunpack.c.l.b16 %v894
    %v1144 = vunpack.c.h.b16 %v894
    %v1145 = vunpack.c.l.b16 %v895
    %v1146 = vunpack.c.h.b16 %v895
    %v1147 = vunpack.c.l.b16 %v896
    %v1148 = vunpack.c.h.b16 %v896
    %v1149 = vunpack.c.l.b16 %v897
    %v1150 = vunpack.c.h.b16 %v897
    %v1151 = vunpack.c.l.b16 %v898
    %v1152 = vunpack.c.h.b16 %v898
    %v1153 = vunpack.c.l.b16 %v899
    %v1154 = vunpack.c.h.b16 %v899
    %v1155 = vunpack.c.l.b16 %v900
    %v1156 = vunpack.c.h.b16 %v900
    %v1157 = vunpack.c.l.b16 %v901
    %v1158 = vunpack.c.h.b16 %v901
    %v1159 = vunpack.c.l.b16 %v902
    %v1160 = vunpack.c.h.b16 %v902
    %v1161 = vunpack.c.l.b16 %v903
    %v1162 = vunpack.c.h.b16 %v903
    %v1163 = vunpack.c.l.b16 %v904
    %v1164 = vunpack.c.h.b16 %v904
    %v1165 = vunpack.c.l.b16 %v905
    %v1166 = vunpack.c.h.b16 %v905
    %v1167 = vunpack.c.l.b16 %v906
    %v1168 = vunpack.c.h.b16 %v906
    %v1169 = vunpack.c.l.b16 %v907
    %v1170 = vunpack.c.h.b16 %v907
    %v1171 = vunpack.c.l.b16 %v908
    %v1172 = vunpack.c.h.b16 %v908
    %v1173 = vunpack.c.l.b16 %v909
    %v1174 = vunpack.c.h.b16 %v909
    %v1175 = vunpack.c.l.b16 %v910
    %v1176 = vunpack.c.h.b16 %v910
    %v1177 = vunpack.c.l.b16 %v911
    %v1178 = vunpack.c.h.b16 %v911
    %v1179 = vunpack.c.l.b16 %v912
    %v1180 = vunpack.c.h.b16 %v912
    %v1181 = vunpack.c.l.b16 %v913
    %v1182 = vunpack.c.h.b16 %v913
    %v1183 = vunpack.c.l.b16 %v914
    %v1184 = vunpack.c.h.b16 %v914
    %v1185 = vunpack.c.l.b16 %v915
    %v1186 = vunpack.c.h.b16 %v915
    %v1187 = vunpack.c.l.b16 %v916
    %v1188 = vunpack.c.h.b16 %v916
    %v1189 = vunpack.c.l.b16 %v917
    %v1190 = vunpack.c.h.b16 %v917
    %v1191 = vunpack.c.l.b16 %v918
    %v1192 = vunpack.c.h.b16 %v918
    %v1193 = vunpack.c.l.b16 %v919
    %v1194 = vunpack.c.h.b16 %v919
    %v1195 = vunpack.c.l.b16 %v920
    %v1196 = vunpack.c.h.b16 %v920
    %v1197 = vunpack.c.l.b16 %v921
    %v1198 = vunpack.c.h.b16 %v921
    %v1199 = vunpack.c.l.b16 %v922
    %v1200 = vunpack.c.h.b16 %v922
    %v1201 = vunpack.c.l.b16 %v923
    %v1202 = vunpack.c.h.b16 %v923
    %v1203 = vunpack.c.l.b16 %v924
    %v1204 = vunpack.c.h.b16 %v924
    %v1205 = vunpack.c.l.b16 %v925
    %v1206 = vunpack.c.h.b16 %v925
    %v1207 = vunpack.c.l.b16 %v926
    %v1208 = vunpack.c.h.b16 %v926
    %v1209 = vunpack.c.l.b16 %v927
    %v1210 = vunpack.c.h.b16 %v927
    %v1211 = vunpack.c.l.b16 %v928
    %v1212 = vunpack.c.h.b16 %v928
    %v1213 = vunpack.c.l.b16 %v929
    %v1214 = vunpack.c.h.b16 %v929
    %v1215 = vunpack.c.l.b16 %v930
    %v1216 = vunpack.c.h.b16 %v930
    %v1217 = vunpack.c.l.b16 %v931
    %v1218 = vunpack.c.h.b16 %v931
    %v1219 = vunpack.c.l.b16 %v932
    %v1220 = vunpack.c.h.b16 %v932
    %v1221 = vunpack.c.l.b16 %v933
    %v1222 = vunpack.c.h.b16 %v933
    %v1223 = vunpack.c.l.b16 %v934
    %v1224 = vunpack.c.h.b16 %v934
    %v1225 = vunpack.c.l.b16 %v935
    %v1226 = vunpack.c.h.b16 %v935
    %v1227 = vunpack.c.l.b16 %v936
    %v1228 = vunpack.c.h.b16 %v936
    %v1229 = vunpack.c.l.b16 %v937
    %v1230 = vunpack.c.h.b16 %v937
    %v1231 = vunpack.c.l.b16 %v938
    %v1232 = vunpack.c.h.b16 %v938
    %v1233 = vunpack.c.l.b16 %v939
    %v1234 = vunpack.c.h.b16 %v939
    %v1235 = vunpack.c.l.b16 %v940
    %v1236 = vunpack.c.h.b16 %v940
    %v1237 = vunpack.c.l.b16 %v941
    %v1238 = vunpack.c.h.b16 %v941
    %v1239 = vunpack.c.l.b16 %v942
    %v1240 = vunpack.c.h.b16 %v942
    %v1241 = vunpack.c.l.b16 %v943
    %v1242 = vunpack.c.h.b16 %v943
    %v1243 = vunpack.c.l.b16 %v944
    %v1244 = vunpack.c.h.b16 %v944
    %v1245 = vpack.c.b16 %v1055, %v1053
    %v1246 = vpack.c.b16 %v1056, %v1054
    %v1247 = vpack.c.b16 %v1059, %v1057
    %v1248 = vpack.c.b16 %v1060, %v1058
    %v1249 = vpack.c.b16 %v1063, %v1061
    %v1250 = vpack.c.b16 %v1064, %v1062
    %v1251 = vpack.c.b16 %v1067, %v1065
    %v1252 = vpack.c.b16 %v1068, %v1066
    %v1253 = vpack.c.b16 %v1071, %v1069
    %v1254 = vpack.c.b16 %v1072, %v1070
    %v1255 = vpack.c.b16 %v1075, %v1073
    %v1256 = vpack.c.b16 %v1076, %v1074
    %v1257 = vpack.c.b16 %v1079, %v1077
    %v1258 = vpack.c.b16 %v1080, %v1078
    %v1259 = vpack.c.b16 %v1083, %v1081
    %v1260 = vpack.c.b16 %v1084, %v1082
    %v1261 = vpack.c.b16 %v1087, %v1085
    %v1262 = vpack.c.b16 %v1088, %v1086
    %v1263 = vpack.c.b16 %v1091, %v1089
    %v1264 = vpack.c.b16 %v1092, %v1090
    %v1265 = vpack.c.b16 %v1095, %v1093
    %v1266 = vpack.c.b16 %v1096, %v1094
    %v1267 = vpack.c.b16 %v1099, %v1097
    %v1268 = vpack.c.b16 %v1100, %v1098
    %v1269 = vpack.c.b16 %v1103, %v1101
    %v1270 = vpack.c.b16 %v1104, %v1102
    %v1271 = vpack.c.b16 %v1107, %v1105
    %v1272 = vpack.c.b16 %v1108, %v1106
    %v1273 = vpack.c.b16 %v1111, %v1109
    %v1274 = vpack.c.b16 %v1112, %v1110
    %v1275 = vpack.c.b16 %v1115, %v1113
    %v1276 = vpack.c.b16 %v1116, %v1114
    %v1277 = vpack.c.b16 %v1119, %v1117
    %v1278 = vpack.c.b16 %v1120, %v1118
    %v1279 = vpack.c.b16 %v1123, %v1121
    %v1280 = vpack.c.b16 %v1124, %v1122
    %v1281 = vpack.c.b16 %v1127, %v1125
    %v1282 = vpack.c.b16 %v1128, %v1126
    %v1283 = vpack.c.b16 %v1131, %v1129
    %v1284 = vpack.c.b16 %v1132, %v1130
    %v1285 = vpack.c.b16 %v1135, %v1133
    %v1286 = vpack.c.b16 %v1136, %v1134
    %v1287 = vpack.c.b16 %v1139, %v1137
    %v1288 = vpack.c.b16 %v1140, %v1138
    %v1289 = vpack.c.b16 %v1143, %v1141
    %v1290 = vpack.c.b16 %v1144, %v1142
    %v1291 = vpack.c.b16 %v1147, %v1145
    %v1292 = vpack.c.b16 %v1148, %v1146
    %v1293 = vpack.c.b16 %v1151, %v1149
    %v1294 = vpack.c.b16 %v1152, %v1150
    %v1295 = vpack.c.b16 %v1155, %v1153
    %v1296 = vpack.c.b16 %v1156, %v1154
    %v1297 = vpack.c.b16 %v1159, %v1157
    %v1298 = vpack.c.b16 %v1160, %v1158
    %v1299 = vpack.c.b16 %v1163, %v1161
    %v1300 = vpack.c.b16 %v1164, %v1162
    %v1301 = vpack.c.b16 %v1167, %v1165
    %v1302 = vpack.c.b16 %v1168, %v1166
    %v1303 = vpack.c.b16 %v1171, %v1169
    %v1304 = vpack.c.b16 %v1172, %v1170
    %v1305 = vpack.c.b16 %v1175, %v1173
    %v1306 = vpack.c.b16 %v1176, %v1174
    %v1307 = vpack.c.b16 %v1179, %v1177
    %v1308 = vpack.c.b16 %v1180, %v1178
    %v1309 = vpack.c.b16 %v1183, %v1181
    %v1310 = vpack.c.b16 %v1184, %v1182
    %v1311 = vpack.c.b16 %v1187, %v1185
    %v1312 = vpack.c.b16 %v1188, %v1186
    %v1313 = vpack.c.b16 %v1191, %v1189
    %v1314 = vpack.c.b16 %v1192, %v1190
    %v1315 = vpack.c.b16 %v1195, %v1193
    %v1316 = vpack.c.b16 %v1196, %v1194
    %v1317 = vpack.c.b16 %v1199, %v1197
    %v1318 = vpack.c.b16 %v1200, %v1198
    %v1319 = vpack.c.b16 %v1203, %v1201
    %v1320 = vpack.c.b16 %v1204, %v1202
    %v1321 = vpack.c.b16 %v1207, %v1205
    %v1322 = vpack.c.b16 %v1208, %v1206
    %v1323 = vpack.c.b16 %v1211, %v1209
    %v1324 = vpack.c.b16 %v1212, %v1210
    %v1325 = vpack.c.b16 %v1215, %v1213
    %v1326 = vpack.c.b16 %v1216, %v1214
    %v1327 = vpack.c.b16 %v1219, %v1217
    %v1328 = vpack.c.b16 %v1220, %v1218
    %v1329 = vpack.c.b16 %v1223, %v1221
    %v1330 = vpack.c.b16 %v1224, %v1222
    %v1331 = vpack.c.b16 %v1227, %v1225
    %v1332 = vpack.c.b16 %v1228, %v1226
    %v1333 = vpack.c.b16 %v1231, %v1229
    %v1334 = vpack.c.b16 %v1232, %v1230
    %v1335 = vpack.c.b16 %v1235, %v1233
    %v1336 = vpack.c.b16 %v1236, %v1234
    %v1337 = vpack.c.b16 %v1239, %v1237
    %v1338 = vpack.c.b16 %v1240, %v1238
    %v1339 = vpack.c.b16 %v1243, %v1241
    %v1340 = vpack.c.b16 %v1244, %v1242
    %1437 = vmatprep.subr.bf16.mxu0 %v1246
    %1438 = vmatpush1.bf16.msra.mxu0 %v1245
    %1439 = vmatprep.subr.bf16.mxu0 %v1248
    %1440 = vmatpush1.bf16.msra.mxu0 %v1247
    %1441 = vmatprep.subr.bf16.mxu0 %v1250
    %1442 = vmatpush1.bf16.msra.mxu0 %v1249
    %1443 = vmatprep.subr.bf16.mxu0 %v1252
    %1444 = vmatpush1.bf16.msra.mxu0 %v1251
    %1445 = vmatprep.subr.bf16.mxu0 %v1254
    %1446 = vmatpush1.bf16.msra.mxu0 %v1253
    %1447 = vmatprep.subr.bf16.mxu0 %v1256
    %1448 = vmatpush1.bf16.msra.mxu0 %v1255
    %1449 = vmatprep.subr.bf16.mxu0 %v1258
    %1450 = vmatpush1.bf16.msra.mxu0 %v1257
    %1451 = vmatprep.subr.bf16.mxu0 %v1260
    %1452 = vmatpush1.bf16.msra.mxu0 %v1259
    %1453 = vmatprep.subr.bf16.mxu0 %v1262
    %1454 = vmatpush1.bf16.msra.mxu0 %v1261
    %1455 = vmatprep.subr.bf16.mxu0 %v1264
    %1456 = vmatpush1.bf16.msra.mxu0 %v1263
    %1457 = vmatprep.subr.bf16.mxu0 %v1266
    %1458 = vmatpush1.bf16.msra.mxu0 %v1265
    %1459 = vmatprep.subr.bf16.mxu0 %v1268
    %1460 = vmatpush1.bf16.msra.mxu0 %v1267
    %1461 = vmatprep.subr.bf16.mxu0 %v1270
    %1462 = vmatpush1.bf16.msra.mxu0 %v1269
    %1463 = vmatprep.subr.bf16.mxu0 %v1272
    %1464 = vmatpush1.bf16.msra.mxu0 %v1271
    %1465 = vmatprep.subr.bf16.mxu0 %v1274
    %1466 = vmatpush1.bf16.msra.mxu0 %v1273
    %1467 = vmatprep.subr.bf16.mxu0 %v1276
    %1468 = vmatpush1.bf16.msra.mxu0 %v1275
    %1469 = vmatprep.mubr.bf16.mxu0 0
    %1470 = vmatmul.mubr.bf16.gmra.mrb[0].mxu0 0
    %v1471 = vpop.f32.mrb[0].mxu0
    %v1472 = vadd.f32 %v950, %v1471
    %v1473 = vpop.f32.mrb[0].mxu0
    %v1474 = vadd.f32 %v954, %v1473
    %v1475 = vpop.f32.mrb[0].mxu0
    %v1476 = vadd.f32 %v950, %v1475
    %v1477 = vpop.f32.mrb[0].mxu0
    %v1478 = vadd.f32 %v954, %v1477
    %1479 = vmatprep.mubr.bf16.mxu0 0
    %1480 = vmatmul.mubr.bf16.gmra.mrb[0].mxu0 0
    %v1481 = vpop.f32.mrb[0].mxu0
    %v1482 = vadd.f32 %v950, %v1481
    %v1483 = vpop.f32.mrb[0].mxu0
    %v1484 = vadd.f32 %v954, %v1483
    %v1485 = vpop.f32.mrb[0].mxu0
    %v1486 = vadd.f32 %v950, %v1485
    %v1487 = vpop.f32.mrb[0].mxu0
    %v1488 = vadd.f32 %v954, %v1487
    %1489 = vmatprep.mubr.bf16.mxu0 %v834
    %1490 = vmatmul.mubr.bf16.gmra.mrb[0].mxu0 %v833
    %v1491 = vpop.f32.mrb[0].mxu0
    %v1492 = vadd.f32 %v950, %v1491
    %v1493 = vpop.f32.mrb[0].mxu0
    %v1494 = vadd.f32 %v954, %v1493
    %v1495 = vpop.f32.mrb[0].mxu0
    %v1496 = vadd.f32 %v950, %v1495
    %v1497 = vpop.f32.mrb[0].mxu0
    %v1498 = vadd.f32 %v954, %v1497
    %1499 = vmatprep.mubr.bf16.mxu0 %v836
    %1500 = vmatmul.mubr.bf16.gmra.mrb[0].mxu0 %v835
    %v1501 = vpop.f32.mrb[0].mxu0
    %v1502 = vadd.f32 %v950, %v1501
    %v1503 = vpop.f32.mrb[0].mxu0
    %v1504 = vadd.f32 %v954, %v1503
    %v1505 = vpop.f32.mrb[0].mxu0
    %v1506 = vadd.f32 %v950, %v1505
    %v1507 = vpop.f32.mrb[0].mxu0
    %v1508 = vadd.f32 %v954, %v1507
    %1509 = vmatprep.mubr.bf16.mxu0 %v838
    %1510 = vmatmul.mubr.bf16.gmra.mrb[0].mxu0 %v837
    %v1511 = vpop.f32.mrb[0].mxu0
    %v1512 = vadd.f32 %v950, %v1511
    %v1513 = vpop.f32.mrb[0].mxu0
    %v1514 = vadd.f32 %v954, %v1513
    %v1515 = vpop.f32.mrb[0].mxu0
    %v1516 = vadd.f32 %v950, %v1515
    %v1517 = vpop.f32.mrb[0].mxu0
    %v1518 = vadd.f32 %v954, %v1517
    %1519 = vmatprep.mubr.bf16.mxu0 %v840
    %1520 = vmatmul.mubr.bf16.gmra.mrb[0].mxu0 %v839
    %v1521 = vpop.f32.mrb[0].mxu0
    %v1522 = vadd.f32 %v950, %v1521
    %v1523 = vpop.f32.mrb[0].mxu0
    %v1524 = vadd.f32 %v954, %v1523
    %v1525 = vpop.f32.mrb[0].mxu0
    %v1526 = vadd.f32 %v950, %v1525
    %v1527 = vpop.f32.mrb[0].mxu0
    %v1528 = vadd.f32 %v954, %v1527
    %1529 = vmatprep.mubr.bf16.mxu0 %v842
    %1530 = vmatmul.mubr.bf16.gmra.mrb[0].mxu0 %v841
    %v1531 = vpop.f32.mrb[0].mxu0
    %v1532 = vadd.f32 %v950, %v1531
    %v1533 = vpop.f32.mrb[0].mxu0
    %v1534 = vadd.f32 %v954, %v1533
    %v1535 = vpop.f32.mrb[0].mxu0
    %v1536 = vadd.f32 %v950, %v1535
    %v1537 = vpop.f32.mrb[0].mxu0
    %v1538 = vadd.f32 %v954, %v1537
    %1539 = vmatprep.mubr.bf16.mxu0 %v844
    %1540 = vmatmul.mubr.bf16.gmra.mrb[0].mxu0 %v843
    %v1541 = vpop.f32.mrb[0].mxu0
    %v1542 = vadd.f32 %v950, %v1541
    %v1543 = vpop.f32.mrb[0].mxu0
    %v1544 = vadd.f32 %v954, %v1543
    %v1545 = vpop.f32.mrb[0].mxu0
    %v1546 = vadd.f32 %v950, %v1545
    %v1547 = vpop.f32.mrb[0].mxu0
    %v1548 = vadd.f32 %v954, %v1547
    %1549 = vdwg.mxu0
    %1550 = vmatprep.subr.bf16.mxu0 %v1278
    %1551 = vmatpush1.bf16.msra.mxu0 %v1277
    %1552 = vmatprep.subr.bf16.mxu0 %v1280
    %1553 = vmatpush1.bf16.msra.mxu0 %v1279
    %1554 = vmatprep.subr.bf16.mxu0 %v1282
    %1555 = vmatpush1.bf16.msra.mxu0 %v1281
    %1556 = vmatprep.subr.bf16.mxu0 %v1284
    %1557 = vmatpush1.bf16.msra.mxu0 %v1283
    %1558 = vmatprep.subr.bf16.mxu0 %v1286
    %1559 = vmatpush1.bf16.msra.mxu0 %v1285
    %1560 = vmatprep.subr.bf16.mxu0 %v1288
    %1561 = vmatpush1.bf16.msra.mxu0 %v1287
    %1562 = vmatprep.subr.bf16.mxu0 %v1290
    %1563 = vmatpush1.bf16.msra.mxu0 %v1289
    %1564 = vmatprep.subr.bf16.mxu0 %v1292
    %1565 = vmatpush1.bf16.msra.mxu0 %v1291
    %1566 = vmatprep.subr.bf16.mxu0 %v1294
    %1567 = vmatpush1.bf16.msra.mxu0 %v1293
    %1568 = vmatprep.subr.bf16.mxu0 %v1296
    %1569 = vmatpush1.bf16.msra.mxu0 %v1295
    %1570 = vmatprep.subr.bf16.mxu0 %v1298
    %1571 = vmatpush1.bf16.msra.mxu0 %v1297
    %1572 = vmatprep.subr.bf16.mxu0 %v1300
    %1573 = vmatpush1.bf16.msra.mxu0 %v1299
    %1574 = vmatprep.subr.bf16.mxu0 %v1302
    %1575 = vmatpush1.bf16.msra.mxu0 %v1301
    %1576 = vmatprep.subr.bf16.mxu0 %v1304
    %1577 = vmatpush1.bf16.msra.mxu0 %v1303
    %1578 = vmatprep.subr.bf16.mxu0 %v1306
    %1579 = vmatpush1.bf16.msra.mxu0 %v1305
    %1580 = vmatprep.subr.bf16.mxu0 %v1308
    %1581 = vmatpush1.bf16.msra.mxu0 %v1307
    %1582 = vmatprep.mubr.bf16.mxu0 %v623
    %1583 = vmatmul.mubr.bf16.gmra.mrb[0].mxu0 %v622
    %v1584 = vpop.f32.mrb[0].mxu0
    %v1585 = vadd.f32 %v1472, %v1584
    %v1586 = vpop.f32.mrb[0].mxu0
    %v1587 = vadd.f32 %v1474, %v1586
    %v1588 = vpop.f32.mrb[0].mxu0
    %v1589 = vadd.f32 %v1476, %v1588
    %v1590 = vpop.f32.mrb[0].mxu0
    %v1591 = vadd.f32 %v1478, %v1590
    %1592 = vmatprep.mubr.bf16.mxu0 %v625
    %1593 = vmatmul.mubr.bf16.gmra.mrb[0].mxu0 %v624
    %v1594 = vpop.f32.mrb[0].mxu0
    %v1595 = vadd.f32 %v1482, %v1594
    %v1596 = vpop.f32.mrb[0].mxu0
    %v1597 = vadd.f32 %v1484, %v1596
    %v1598 = vpop.f32.mrb[0].mxu0
    %v1599 = vadd.f32 %v1486, %v1598
    %v1600 = vpop.f32.mrb[0].mxu0
    %v1601 = vadd.f32 %v1488, %v1600
    %1602 = vmatprep.mubr.bf16.mxu0 %v627
    %1603 = vmatmul.mubr.bf16.gmra.mrb[0].mxu0 %v626
    %v1604 = vpop.f32.mrb[0].mxu0
    %v1605 = vadd.f32 %v1492, %v1604
    %v1606 = vpop.f32.mrb[0].mxu0
    %v1607 = vadd.f32 %v1494, %v1606
    %v1608 = vpop.f32.mrb[0].mxu0
    %v1609 = vadd.f32 %v1496, %v1608
    %v1610 = vpop.f32.mrb[0].mxu0
    %v1611 = vadd.f32 %v1498, %v1610
    %1612 = vmatprep.mubr.bf16.mxu0 %v629
    %1613 = vmatmul.mubr.bf16.gmra.mrb[0].mxu0 %v628
    %v1614 = vpop.f32.mrb[0].mxu0
    %v1615 = vadd.f32 %v1502, %v1614
    %v1616 = vpop.f32.mrb[0].mxu0
    %v1617 = vadd.f32 %v1504, %v1616
    %v1618 = vpop.f32.mrb[0].mxu0
    %v1619 = vadd.f32 %v1506, %v1618
    %v1620 = vpop.f32.mrb[0].mxu0
    %v1621 = vadd.f32 %v1508, %v1620
    %1622 = vmatprep.mubr.bf16.mxu0 %v631
    %1623 = vmatmul.mubr.bf16.gmra.mrb[0].mxu0 %v630
    %v1624 = vpop.f32.mrb[0].mxu0
    %v1625 = vadd.f32 %v1512, %v1624
    %v1626 = vpop.f32.mrb[0].mxu0
    %v1627 = vadd.f32 %v1514, %v1626
    %v1628 = vpop.f32.mrb[0].mxu0
    %v1629 = vadd.f32 %v1516, %v1628
    %v1630 = vpop.f32.mrb[0].mxu0
    %v1631 = vadd.f32 %v1518, %v1630
    %1632 = vmatprep.mubr.bf16.mxu0 %v633
    %1633 = vmatmul.mubr.bf16.gmra.mrb[0].mxu0 %v632
    %v1634 = vpop.f32.mrb[0].mxu0
    %v1635 = vadd.f32 %v1522, %v1634
    %v1636 = vpop.f32.mrb[0].mxu0
    %v1637 = vadd.f32 %v1524, %v1636
    %v1638 = vpop.f32.mrb[0].mxu0
    %v1639 = vadd.f32 %v1526, %v1638
    %v1640 = vpop.f32.mrb[0].mxu0
    %v1641 = vadd.f32 %v1528, %v1640
    %1642 = vmatprep.mubr.bf16.mxu0 %v635
    %1643 = vmatmul.mubr.bf16.gmra.mrb[0].mxu0 %v634
    %v1644 = vpop.f32.mrb[0].mxu0
    %v1645 = vadd.f32 %v1532, %v1644
    %v1646 = vpop.f32.mrb[0].mxu0
    %v1647 = vadd.f32 %v1534, %v1646
    %v1648 = vpop.f32.mrb[0].mxu0
    %v1649 = vadd.f32 %v1536, %v1648
    %v1650 = vpop.f32.mrb[0].mxu0
    %v1651 = vadd.f32 %v1538, %v1650
    %1652 = vmatprep.mubr.bf16.mxu0 %v637
    %1653 = vmatmul.mubr.bf16.gmra.mrb[0].mxu0 %v636
    %v1654 = vpop.f32.mrb[0].mxu0
    %v1655 = vadd.f32 %v1542, %v1654
    %v1656 = vpop.f32.mrb[0].mxu0
    %v1657 = vadd.f32 %v1544, %v1656
    %v1658 = vpop.f32.mrb[0].mxu0
    %v1659 = vadd.f32 %v1546, %v1658
    %v1660 = vpop.f32.mrb[0].mxu0
    %v1661 = vadd.f32 %v1548, %v1660
    %1662 = vdwg.mxu0
    %1663 = vmatprep.subr.bf16.mxu0 %v1310
    %1664 = vmatpush1.bf16.msra.mxu0 %v1309
    %1665 = vmatprep.subr.bf16.mxu0 %v1312
    %1666 = vmatpush1.bf16.msra.mxu0 %v1311
    %1667 = vmatprep.subr.bf16.mxu0 %v1314
    %1668 = vmatpush1.bf16.msra.mxu0 %v1313
    %1669 = vmatprep.subr.bf16.mxu0 %v1316
    %1670 = vmatpush1.bf16.msra.mxu0 %v1315
    %1671 = vmatprep.subr.bf16.mxu0 %v1318
    %1672 = vmatpush1.bf16.msra.mxu0 %v1317
    %1673 = vmatprep.subr.bf16.mxu0 %v1320
    %1674 = vmatpush1.bf16.msra.mxu0 %v1319
    %1675 = vmatprep.subr.bf16.mxu0 %v1322
    %1676 = vmatpush1.bf16.msra.mxu0 %v1321
    %1677 = vmatprep.subr.bf16.mxu0 %v1324
    %1678 = vmatpush1.bf16.msra.mxu0 %v1323
    %1679 = vmatprep.subr.bf16.mxu0 %v1326
    %1680 = vmatpush1.bf16.msra.mxu0 %v1325
    %1681 = vmatprep.subr.bf16.mxu0 %v1328
    %1682 = vmatpush1.bf16.msra.mxu0 %v1327
    %1683 = vmatprep.subr.bf16.mxu0 %v1330
    %1684 = vmatpush1.bf16.msra.mxu0 %v1329
    %1685 = vmatprep.subr.bf16.mxu0 %v1332
    %1686 = vmatpush1.bf16.msra.mxu0 %v1331
    %1687 = vmatprep.subr.bf16.mxu0 %v1334
    %1688 = vmatpush1.bf16.msra.mxu0 %v1333
    %1689 = vmatprep.subr.bf16.mxu0 %v1336
    %1690 = vmatpush1.bf16.msra.mxu0 %v1335
    %1691 = vmatprep.subr.bf16.mxu0 %v1338
    %1692 = vmatpush1.bf16.msra.mxu0 %v1337
    %1693 = vmatprep.subr.bf16.mxu0 %v1340
    %1694 = vmatpush1.bf16.msra.mxu0 %v1339
    %1695 = vmatprep.mubr.bf16.mxu0 %v834
    %1696 = vmatmul.mubr.bf16.gmra.mrb[0].mxu0 %v833
    %v1697 = vpop.f32.mrb[0].mxu0
    %v1698 = vadd.f32 %v1585, %v1697
    %v1699 = vpop.f32.mrb[0].mxu0
    %v1700 = vadd.f32 %v1587, %v1699
    %v1701 = vpop.f32.mrb[0].mxu0
    %v1702 = vadd.f32 %v1589, %v1701
    %v1703 = vpop.f32.mrb[0].mxu0
    %v1704 = vadd.f32 %v1591, %v1703
    %1705 = vmatprep.mubr.bf16.mxu0 %v836
    %1706 = vmatmul.mubr.bf16.gmra.mrb[0].mxu0 %v835
    %v1707 = vpop.f32.mrb[0].mxu0
    %v1708 = vadd.f32 %v1595, %v1707
    %v1709 = vpop.f32.mrb[0].mxu0
    %v1710 = vadd.f32 %v1597, %v1709
    %v1711 = vpop.f32.mrb[0].mxu0
    %v1712 = vadd.f32 %v1599, %v1711
    %v1713 = vpop.f32.mrb[0].mxu0
    %v1714 = vadd.f32 %v1601, %v1713
    %1715 = vmatprep.mubr.bf16.mxu0 %v838
    %1716 = vmatmul.mubr.bf16.gmra.mrb[0].mxu0 %v837
    %v1717 = vpop.f32.mrb[0].mxu0
    %v1718 = vadd.f32 %v1605, %v1717
    %v1719 = vpop.f32.mrb[0].mxu0
    %v1720 = vadd.f32 %v1607, %v1719
    %v1721 = vpop.f32.mrb[0].mxu0
    %v1722 = vadd.f32 %v1609, %v1721
    %v1723 = vpop.f32.mrb[0].mxu0
    %v1724 = vadd.f32 %v1611, %v1723
    %1725 = vmatprep.mubr.bf16.mxu0 %v840
    %1726 = vmatmul.mubr.bf16.gmra.mrb[0].mxu0 %v839
    %v1727 = vpop.f32.mrb[0].mxu0
    %v1728 = vadd.f32 %v1615, %v1727
    %v1729 = vpop.f32.mrb[0].mxu0
    %v1730 = vadd.f32 %v1617, %v1729
    %v1731 = vpop.f32.mrb[0].mxu0
    %v1732 = vadd.f32 %v1619, %v1731
    %v1733 = vpop.f32.mrb[0].mxu0
    %v1734 = vadd.f32 %v1621, %v1733
    %1735 = vmatprep.mubr.bf16.mxu0 %v842
    %1736 = vmatmul.mubr.bf16.gmra.mrb[0].mxu0 %v841
    %v1737 = vpop.f32.mrb[0].mxu0
    %v1738 = vadd.f32 %v1625, %v1737
    %v1739 = vpop.f32.mrb[0].mxu0
    %v1740 = vadd.f32 %v1627, %v1739
    %v1741 = vpop.f32.mrb[0].mxu0
    %v1742 = vadd.f32 %v1629, %v1741
    %v1743 = vpop.f32.mrb[0].mxu0
    %v1744 = vadd.f32 %v1631, %v1743
    %1745 = vmatprep.mubr.bf16.mxu0 %v844
    %1746 = vmatmul.mubr.bf16.gmra.mrb[0].mxu0 %v843
    %v1747 = vpop.f32.mrb[0].mxu0
    %v1748 = vadd.f32 %v1635, %v1747
    %v1749 = vpop.f32.mrb[0].mxu0
    %v1750 = vadd.f32 %v1637, %v1749
    %v1751 = vpop.f32.mrb[0].mxu0
    %v1752 = vadd.f32 %v1639, %v1751
    %v1753 = vpop.f32.mrb[0].mxu0
    %v1754 = vadd.f32 %v1641, %v1753
    %1755 = vmatprep.mubr.bf16.mxu0 %v846
    %1756 = vmatmul.mubr.bf16.gmra.mrb[0].mxu0 %v845
    %v1757 = vpop.f32.mrb[0].mxu0
    %v1758 = vadd.f32 %v1645, %v1757
    %v1759 = vpop.f32.mrb[0].mxu0
    %v1760 = vadd.f32 %v1647, %v1759
    %v1761 = vpop.f32.mrb[0].mxu0
    %v1762 = vadd.f32 %v1649, %v1761
    %v1763 = vpop.f32.mrb[0].mxu0
    %v1764 = vadd.f32 %v1651, %v1763
    %1765 = vmatprep.mubr.bf16.mxu0 %v848
    %1766 = vmatmul.mubr.bf16.gmra.mrb[0].mxu0 %v847
    %v1767 = vpop.f32.mrb[0].mxu0
    %v1768 = vadd.f32 %v1655, %v1767
    %v1769 = vpop.f32.mrb[0].mxu0
    %v1770 = vadd.f32 %v1657, %v1769
    %v1771 = vpop.f32.mrb[0].mxu0
    %v1772 = vadd.f32 %v1659, %v1771
    %v1773 = vpop.f32.mrb[0].mxu0
    %v1774 = vadd.f32 %v1661, %v1773
    %1775 = vdwg.mxu0
    %v1776 = vmax.f32 %v1698, -1.0
    %v1777 = vmax.f32 %v1700, -1.0
    %v1778 = vmax.f32 %v1702, -1.0
    %v1779 = vmax.f32 %v1704, -1.0
    %v1780 = vmax.f32 %v1708, -1.0
    %v1781 = vmax.f32 %v1710, -1.0
    %v1782 = vmax.f32 %v1712, -1.0
    %v1783 = vmax.f32 %v1714, -1.0
    %v1784 = vmax.f32 %v1718, -1.0
    %v1785 = vmax.f32 %v1720, -1.0
    %v1786 = vmax.f32 %v1722, -1.0
    %v1787 = vmax.f32 %v1724, -1.0
    %v1788 = vmax.f32 %v1728, -1.0
    %v1789 = vmax.f32 %v1730, -1.0
    %v1790 = vmax.f32 %v1732, -1.0
    %v1791 = vmax.f32 %v1734, -1.0
    %v1792 = vmax.f32 %v1738, -1.0
    %v1793 = vmax.f32 %v1740, -1.0
    %v1794 = vmax.f32 %v1742, -1.0
    %v1795 = vmax.f32 %v1744, -1.0
    %v1796 = vmax.f32 %v1748, -1.0
    %v1797 = vmax.f32 %v1750, -1.0
    %v1798 = vmax.f32 %v1752, -1.0
    %v1799 = vmax.f32 %v1754, -1.0
    %v1800 = vmax.f32 %v1758, -1.0
    %v1801 = vmax.f32 %v1760, -1.0
    %v1802 = vmax.f32 %v1762, -1.0
    %v1803 = vmax.f32 %v1764, -1.0
    %v1804 = vmax.f32 %v1768, -1.0
    %v1805 = vmax.f32 %v1770, -1.0
    %v1806 = vmax.f32 %v1772, -1.0
    %v1807 = vmax.f32 %v1774, -1.0
    %v1808 = vmin.f32 %v1776, 1.0
    %v1809 = vmin.f32 %v1777, 1.0
    %v1810 = vmin.f32 %v1778, 1.0
    %v1811 = vmin.f32 %v1779, 1.0
    %v1812 = vmin.f32 %v1780, 1.0
    %v1813 = vmin.f32 %v1781, 1.0
    %v1814 = vmin.f32 %v1782, 1.0
    %v1815 = vmin.f32 %v1783, 1.0
    %v1816 = vmin.f32 %v1784, 1.0
    %v1817 = vmin.f32 %v1785, 1.0
    %v1818 = vmin.f32 %v1786, 1.0
    %v1819 = vmin.f32 %v1787, 1.0
    %v1820 = vmin.f32 %v1788, 1.0
    %v1821 = vmin.f32 %v1789, 1.0
    %v1822 = vmin.f32 %v1790, 1.0
    %v1823 = vmin.f32 %v1791, 1.0
    %v1824 = vmin.f32 %v1792, 1.0
    %v1825 = vmin.f32 %v1793, 1.0
    %v1826 = vmin.f32 %v1794, 1.0
    %v1827 = vmin.f32 %v1795, 1.0
    %v1828 = vmin.f32 %v1796, 1.0
    %v1829 = vmin.f32 %v1797, 1.0
    %v1830 = vmin.f32 %v1798, 1.0
    %v1831 = vmin.f32 %v1799, 1.0
    %v1832 = vmin.f32 %v1800, 1.0
    %v1833 = vmin.f32 %v1801, 1.0
    %v1834 = vmin.f32 %v1802, 1.0
    %v1835 = vmin.f32 %v1803, 1.0
    %v1836 = vmin.f32 %v1804, 1.0
    %v1837 = vmin.f32 %v1805, 1.0
    %v1838 = vmin.f32 %v1806, 1.0
    %v1839 = vmin.f32 %v1807, 1.0
    %v1840 = vpack.c.bf16 %v1810, %v1808
    %v1841 = vpack.c.bf16 %v1811, %v1809
    %v1842 = vpack.c.bf16 %v1814, %v1812
    %v1843 = vpack.c.bf16 %v1815, %v1813
    %v1844 = vpack.c.bf16 %v1818, %v1816
    %v1845 = vpack.c.bf16 %v1819, %v1817
    %v1846 = vpack.c.bf16 %v1822, %v1820
    %v1847 = vpack.c.bf16 %v1823, %v1821
    %v1848 = vpack.c.bf16 %v1826, %v1824
    %v1849 = vpack.c.bf16 %v1827, %v1825
    %v1850 = vpack.c.bf16 %v1830, %v1828
    %v1851 = vpack.c.bf16 %v1831, %v1829
    %v1852 = vpack.c.bf16 %v1834, %v1832
    %v1853 = vpack.c.bf16 %v1835, %v1833
    %v1854 = vpack.c.bf16 %v1838, %v1836
    %v1855 = vpack.c.bf16 %v1839, %v1837
    %v1856 = vld [vmem:[%s5] sm:$0xff]
    %v1857 = vld [vmem:[%s5 + $0x8] sm:$0xff]
    %v1858 = vld [vmem:[%s5 + $0x10] sm:$0xff]
    %v1859 = vld [vmem:[%s5 + $0x18] sm:$0xff]
    %v1860 = vld [vmem:[%s5 + $0x20] sm:$0xff]
    %v1861 = vld [vmem:[%s5 + $0x28] sm:$0xff]
    %v1862 = vld [vmem:[%s5 + $0x30] sm:$0xff]
    %v1863 = vld [vmem:[%s5 + $0x38] sm:$0xff]
    %v1864 = vld [vmem:[%s5 + $0x40] sm:$0xff]
    %v1865 = vld [vmem:[%s5 + $0x48] sm:$0xff]
    %v1866 = vld [vmem:[%s5 + $0x50] sm:$0xff]
    %v1867 = vld [vmem:[%s5 + $0x58] sm:$0xff]
    %v1868 = vld [vmem:[%s5 + $0x60] sm:$0xff]
    %v1869 = vld [vmem:[%s5 + $0x68] sm:$0xff]
    %v1870 = vld [vmem:[%s5 + $0x70] sm:$0xff]
    %v1871 = vld [vmem:[%s5 + $0x78] sm:$0xff]
    %v1872 = vld [vmem:[%s5 + $0x80] sm:$0xff]
    %v1873 = vld [vmem:[%s5 + $0x88] sm:$0xff]
    %v1874 = vld [vmem:[%s5 + $0x90] sm:$0xff]
    %v1875 = vld [vmem:[%s5 + $0x98] sm:$0xff]
    %v1876 = vld [vmem:[%s5 + $0xa0] sm:$0xff]
    %v1877 = vld [vmem:[%s5 + $0xa8] sm:$0xff]
    %v1878 = vld [vmem:[%s5 + $0xb0] sm:$0xff]
    %v1879 = vld [vmem:[%s5 + $0xb8] sm:$0xff]
    %v1880 = vld [vmem:[%s5 + $0xc0] sm:$0xff]
    %v1881 = vld [vmem:[%s5 + $0xc8] sm:$0xff]
    %v1882 = vld [vmem:[%s5 + $0xd0] sm:$0xff]
    %v1883 = vld [vmem:[%s5 + $0xd8] sm:$0xff]
    %v1884 = vld [vmem:[%s5 + $0xe0] sm:$0xff]
    %v1885 = vld [vmem:[%s5 + $0xe8] sm:$0xff]
    %v1886 = vld [vmem:[%s5 + $0xf0] sm:$0xff]
    %v1887 = vld [vmem:[%s5 + $0xf8] sm:$0xff]
    %v1888 = vld [vmem:[#allocation4] sm:$0x3]
    %v1890 = vlaneseq
    %v1891 = vshrl.u32 %v1890, 7
    %v1892 = vsub.s32 0, %v1891
    %v1893 = vrot.slane %v1888, %v1892
    %v1894 = vlaneseq
    %v1895 = vshrl.u32 %v1894, 7
    %v1896 = vsub.s32 1, %v1895
    %v1897 = vrot.slane %v1888, %v1896
    %v1932 = vunpack.c.l.b16 %v1856
    %v1933 = vunpack.c.h.b16 %v1856
    %v1934 = vunpack.c.l.b16 %v1857
    %v1935 = vunpack.c.h.b16 %v1857
    %v1936 = vunpack.c.l.b16 %v1858
    %v1937 = vunpack.c.h.b16 %v1858
    %v1938 = vunpack.c.l.b16 %v1859
    %v1939 = vunpack.c.h.b16 %v1859
    %v1940 = vunpack.c.l.b16 %v1860
    %v1941 = vunpack.c.h.b16 %v1860
    %v1942 = vunpack.c.l.b16 %v1861
    %v1943 = vunpack.c.h.b16 %v1861
    %v1944 = vunpack.c.l.b16 %v1862
    %v1945 = vunpack.c.h.b16 %v1862
    %v1946 = vunpack.c.l.b16 %v1863
    %v1947 = vunpack.c.h.b16 %v1863
    %v1948 = vunpack.c.l.b16 %v1864
    %v1949 = vunpack.c.h.b16 %v1864
    %v1950 = vunpack.c.l.b16 %v1865
    %v1951 = vunpack.c.h.b16 %v1865
    %v1952 = vunpack.c.l.b16 %v1866
    %v1953 = vunpack.c.h.b16 %v1866
    %v1954 = vunpack.c.l.b16 %v1867
    %v1955 = vunpack.c.h.b16 %v1867
    %v1956 = vunpack.c.l.b16 %v1868
    %v1957 = vunpack.c.h.b16 %v1868
    %v1958 = vunpack.c.l.b16 %v1869
    %v1959 = vunpack.c.h.b16 %v1869
    %v1960 = vunpack.c.l.b16 %v1870
    %v1961 = vunpack.c.h.b16 %v1870
    %v1962 = vunpack.c.l.b16 %v1871
    %v1963 = vunpack.c.h.b16 %v1871
    %v1964 = vunpack.c.l.b16 %v1872
    %v1965 = vunpack.c.h.b16 %v1872
    %v1966 = vunpack.c.l.b16 %v1873
    %v1967 = vunpack.c.h.b16 %v1873
    %v1968 = vunpack.c.l.b16 %v1874
    %v1969 = vunpack.c.h.b16 %v1874
    %v1970 = vunpack.c.l.b16 %v1875
    %v1971 = vunpack.c.h.b16 %v1875
    %v1972 = vunpack.c.l.b16 %v1876
    %v1973 = vunpack.c.h.b16 %v1876
    %v1974 = vunpack.c.l.b16 %v1877
    %v1975 = vunpack.c.h.b16 %v1877
    %v1976 = vunpack.c.l.b16 %v1878
    %v1977 = vunpack.c.h.b16 %v1878
    %v1978 = vunpack.c.l.b16 %v1879
    %v1979 = vunpack.c.h.b16 %v1879
    %v1980 = vunpack.c.l.b16 %v1880
    %v1981 = vunpack.c.h.b16 %v1880
    %v1982 = vunpack.c.l.b16 %v1881
    %v1983 = vunpack.c.h.b16 %v1881
    %v1984 = vunpack.c.l.b16 %v1882
    %v1985 = vunpack.c.h.b16 %v1882
    %v1986 = vunpack.c.l.b16 %v1883
    %v1987 = vunpack.c.h.b16 %v1883
    %v1988 = vunpack.c.l.b16 %v1884
    %v1989 = vunpack.c.h.b16 %v1884
    %v1990 = vunpack.c.l.b16 %v1885
    %v1991 = vunpack.c.h.b16 %v1885
    %v1992 = vunpack.c.l.b16 %v1886
    %v1993 = vunpack.c.h.b16 %v1886
    %v1994 = vunpack.c.l.b16 %v1887
    %v1995 = vunpack.c.h.b16 %v1887
    %v1996 = vpack.c.b16 %v1934, %v1932
    %v1997 = vpack.c.b16 %v1935, %v1933
    %v1998 = vpack.c.b16 %v1938, %v1936
    %v1999 = vpack.c.b16 %v1939, %v1937
    %v2000 = vpack.c.b16 %v1942, %v1940
    %v2001 = vpack.c.b16 %v1943, %v1941
    %v2002 = vpack.c.b16 %v1946, %v1944
    %v2003 = vpack.c.b16 %v1947, %v1945
    %v2004 = vpack.c.b16 %v1950, %v1948
    %v2005 = vpack.c.b16 %v1951, %v1949
    %v2006 = vpack.c.b16 %v1954, %v1952
    %v2007 = vpack.c.b16 %v1955, %v1953
    %v2008 = vpack.c.b16 %v1958, %v1956
    %v2009 = vpack.c.b16 %v1959, %v1957
    %v2010 = vpack.c.b16 %v1962, %v1960
    %v2011 = vpack.c.b16 %v1963, %v1961
    %v2012 = vpack.c.b16 %v1966, %v1964
    %v2013 = vpack.c.b16 %v1967, %v1965
    %v2014 = vpack.c.b16 %v1970, %v1968
    %v2015 = vpack.c.b16 %v1971, %v1969
    %v2016 = vpack.c.b16 %v1974, %v1972
    %v2017 = vpack.c.b16 %v1975, %v1973
    %v2018 = vpack.c.b16 %v1978, %v1976
    %v2019 = vpack.c.b16 %v1979, %v1977
    %v2020 = vpack.c.b16 %v1982, %v1980
    %v2021 = vpack.c.b16 %v1983, %v1981
    %v2022 = vpack.c.b16 %v1986, %v1984
    %v2023 = vpack.c.b16 %v1987, %v1985
    %v2024 = vpack.c.b16 %v1990, %v1988
    %v2025 = vpack.c.b16 %v1991, %v1989
    %v2026 = vpack.c.b16 %v1994, %v1992
    %v2027 = vpack.c.b16 %v1995, %v1993
    %2060 = vmatprep.subr.bf16.mxu0 %v1997
    %2061 = vmatpush1.bf16.msra.mxu0 %v1996
    %2062 = vmatprep.subr.bf16.mxu0 %v1999
    %2063 = vmatpush1.bf16.msra.mxu0 %v1998
    %2064 = vmatprep.subr.bf16.mxu0 %v2001
    %2065 = vmatpush1.bf16.msra.mxu0 %v2000
    %2066 = vmatprep.subr.bf16.mxu0 %v2003
    %2067 = vmatpush1.bf16.msra.mxu0 %v2002
    %2068 = vmatprep.subr.bf16.mxu0 %v2005
    %2069 = vmatpush1.bf16.msra.mxu0 %v2004
    %2070 = vmatprep.subr.bf16.mxu0 %v2007
    %2071 = vmatpush1.bf16.msra.mxu0 %v2006
    %2072 = vmatprep.subr.bf16.mxu0 %v2009
    %2073 = vmatpush1.bf16.msra.mxu0 %v2008
    %2074 = vmatprep.subr.bf16.mxu0 %v2011
    %2075 = vmatpush1.bf16.msra.mxu0 %v2010
    %2076 = vmatprep.subr.bf16.mxu0 %v2013
    %2077 = vmatpush1.bf16.msra.mxu0 %v2012
    %2078 = vmatprep.subr.bf16.mxu0 %v2015
    %2079 = vmatpush1.bf16.msra.mxu0 %v2014
    %2080 = vmatprep.subr.bf16.mxu0 %v2017
    %2081 = vmatpush1.bf16.msra.mxu0 %v2016
    %2082 = vmatprep.subr.bf16.mxu0 %v2019
    %2083 = vmatpush1.bf16.msra.mxu0 %v2018
    %2084 = vmatprep.subr.bf16.mxu0 %v2021
    %2085 = vmatpush1.bf16.msra.mxu0 %v2020
    %2086 = vmatprep.subr.bf16.mxu0 %v2023
    %2087 = vmatpush1.bf16.msra.mxu0 %v2022
    %2088 = vmatprep.subr.bf16.mxu0 %v2025
    %2089 = vmatpush1.bf16.msra.mxu0 %v2024
    %2090 = vmatprep.subr.bf16.mxu0 %v2027
    %2091 = vmatpush1.bf16.msra.mxu0 %v2026
    %2092 = vmatprep.mubr.bf16.mxu0 %v1841
    %2093 = vmatmul.mubr.bf16.gmra.mrb[0].mxu0 %v1840
    %v2094 = vpop.f32.mrb[0].mxu0
    %v2095 = vadd.f32 %v1893, %v2094
    %v2096 = vpop.f32.mrb[0].mxu0
    %v2097 = vadd.f32 %v1897, %v2096
    %v2098 = vpop.f32.mrb[0].mxu0
    %v2099 = vadd.f32 %v1893, %v2098
    %v2100 = vpop.f32.mrb[0].mxu0
    %v2101 = vadd.f32 %v1897, %v2100
    %2102 = vmatprep.mubr.bf16.mxu0 %v1843
    %2103 = vmatmul.mubr.bf16.gmra.mrb[0].mxu0 %v1842
    %v2104 = vpop.f32.mrb[0].mxu0
    %v2105 = vadd.f32 %v1893, %v2104
    %v2106 = vpop.f32.mrb[0].mxu0
    %v2107 = vadd.f32 %v1897, %v2106
    %v2108 = vpop.f32.mrb[0].mxu0
    %v2109 = vadd.f32 %v1893, %v2108
    %v2110 = vpop.f32.mrb[0].mxu0
    %v2111 = vadd.f32 %v1897, %v2110
    %2112 = vmatprep.mubr.bf16.mxu0 %v1845
    %2113 = vmatmul.mubr.bf16.gmra.mrb[0].mxu0 %v1844
    %v2114 = vpop.f32.mrb[0].mxu0
    %v2115 = vadd.f32 %v1893, %v2114
    %v2116 = vpop.f32.mrb[0].mxu0
    %v2117 = vadd.f32 %v1897, %v2116
    %v2118 = vpop.f32.mrb[0].mxu0
    %v2119 = vadd.f32 %v1893, %v2118
    %v2120 = vpop.f32.mrb[0].mxu0
    %v2121 = vadd.f32 %v1897, %v2120
    %2122 = vmatprep.mubr.bf16.mxu0 %v1847
    %2123 = vmatmul.mubr.bf16.gmra.mrb[0].mxu0 %v1846
    %v2124 = vpop.f32.mrb[0].mxu0
    %v2125 = vadd.f32 %v1893, %v2124
    %v2126 = vpop.f32.mrb[0].mxu0
    %v2127 = vadd.f32 %v1897, %v2126
    %v2128 = vpop.f32.mrb[0].mxu0
    %v2129 = vadd.f32 %v1893, %v2128
    %v2130 = vpop.f32.mrb[0].mxu0
    %v2131 = vadd.f32 %v1897, %v2130
    %2132 = vmatprep.mubr.bf16.mxu0 %v1849
    %2133 = vmatmul.mubr.bf16.gmra.mrb[0].mxu0 %v1848
    %v2134 = vpop.f32.mrb[0].mxu0
    %v2135 = vadd.f32 %v1893, %v2134
    %v2136 = vpop.f32.mrb[0].mxu0
    %v2137 = vadd.f32 %v1897, %v2136
    %v2138 = vpop.f32.mrb[0].mxu0
    %v2139 = vadd.f32 %v1893, %v2138
    %v2140 = vpop.f32.mrb[0].mxu0
    %v2141 = vadd.f32 %v1897, %v2140
    %2142 = vmatprep.mubr.bf16.mxu0 %v1851
    %2143 = vmatmul.mubr.bf16.gmra.mrb[0].mxu0 %v1850
    %v2144 = vpop.f32.mrb[0].mxu0
    %v2145 = vadd.f32 %v1893, %v2144
    %v2146 = vpop.f32.mrb[0].mxu0
    %v2147 = vadd.f32 %v1897, %v2146
    %v2148 = vpop.f32.mrb[0].mxu0
    %v2149 = vadd.f32 %v1893, %v2148
    %v2150 = vpop.f32.mrb[0].mxu0
    %v2151 = vadd.f32 %v1897, %v2150
    %2152 = vmatprep.mubr.bf16.mxu0 %v1853
    %2153 = vmatmul.mubr.bf16.gmra.mrb[0].mxu0 %v1852
    %v2154 = vpop.f32.mrb[0].mxu0
    %v2155 = vadd.f32 %v1893, %v2154
    %v2156 = vpop.f32.mrb[0].mxu0
    %v2157 = vadd.f32 %v1897, %v2156
    %v2158 = vpop.f32.mrb[0].mxu0
    %v2159 = vadd.f32 %v1893, %v2158
    %v2160 = vpop.f32.mrb[0].mxu0
    %v2161 = vadd.f32 %v1897, %v2160
    %2162 = vmatprep.mubr.bf16.mxu0 %v1855
    %2163 = vmatmul.mubr.bf16.gmra.mrb[0].mxu0 %v1854
    %v2164 = vpop.f32.mrb[0].mxu0
    %v2165 = vadd.f32 %v1893, %v2164
    %v2166 = vpop.f32.mrb[0].mxu0
    %v2167 = vadd.f32 %v1897, %v2166
    %v2168 = vpop.f32.mrb[0].mxu0
    %v2169 = vadd.f32 %v1893, %v2168
    %v2170 = vpop.f32.mrb[0].mxu0
    %v2171 = vadd.f32 %v1897, %v2170
    %2172 = vdwg.mxu0
    %v2173 = vmax.f32 %v2095, -1.0
    %v2174 = vmax.f32 %v2097, -1.0
    %v2175 = vmax.f32 %v2099, -1.0
    %v2176 = vmax.f32 %v2101, -1.0
    %v2177 = vmax.f32 %v2105, -1.0
    %v2178 = vmax.f32 %v2107, -1.0
    %v2179 = vmax.f32 %v2109, -1.0
    %v2180 = vmax.f32 %v2111, -1.0
    %v2181 = vmax.f32 %v2115, -1.0
    %v2182 = vmax.f32 %v2117, -1.0
    %v2183 = vmax.f32 %v2119, -1.0
    %v2184 = vmax.f32 %v2121, -1.0
    %v2185 = vmax.f32 %v2125, -1.0
    %v2186 = vmax.f32 %v2127, -1.0
    %v2187 = vmax.f32 %v2129, -1.0
    %v2188 = vmax.f32 %v2131, -1.0
    %v2189 = vmax.f32 %v2135, -1.0
    %v2190 = vmax.f32 %v2137, -1.0
    %v2191 = vmax.f32 %v2139, -1.0
    %v2192 = vmax.f32 %v2141, -1.0
    %v2193 = vmax.f32 %v2145, -1.0
    %v2194 = vmax.f32 %v2147, -1.0
    %v2195 = vmax.f32 %v2149, -1.0
    %v2196 = vmax.f32 %v2151, -1.0
    %v2197 = vmax.f32 %v2155, -1.0
    %v2198 = vmax.f32 %v2157, -1.0
    %v2199 = vmax.f32 %v2159, -1.0
    %v2200 = vmax.f32 %v2161, -1.0
    %v2201 = vmax.f32 %v2165, -1.0
    %v2202 = vmax.f32 %v2167, -1.0
    %v2203 = vmax.f32 %v2169, -1.0
    %v2204 = vmax.f32 %v2171, -1.0
    %v2205 = vmin.f32 %v2173, 1.0
    %v2206 = vmin.f32 %v2174, 1.0
    %v2207 = vmin.f32 %v2175, 1.0
    %v2208 = vmin.f32 %v2176, 1.0
    %v2209 = vmin.f32 %v2177, 1.0
    %v2210 = vmin.f32 %v2178, 1.0
    %v2211 = vmin.f32 %v2179, 1.0
    %v2212 = vmin.f32 %v2180, 1.0
    %v2213 = vmin.f32 %v2181, 1.0
    %v2214 = vmin.f32 %v2182, 1.0
    %v2215 = vmin.f32 %v2183, 1.0
    %v2216 = vmin.f32 %v2184, 1.0
    %v2217 = vmin.f32 %v2185, 1.0
    %v2218 = vmin.f32 %v2186, 1.0
    %v2219 = vmin.f32 %v2187, 1.0
    %v2220 = vmin.f32 %v2188, 1.0
    %v2221 = vmin.f32 %v2189, 1.0
    %v2222 = vmin.f32 %v2190, 1.0
    %v2223 = vmin.f32 %v2191, 1.0
    %v2224 = vmin.f32 %v2192, 1.0
    %v2225 = vmin.f32 %v2193, 1.0
    %v2226 = vmin.f32 %v2194, 1.0
    %v2227 = vmin.f32 %v2195, 1.0
    %v2228 = vmin.f32 %v2196, 1.0
    %v2229 = vmin.f32 %v2197, 1.0
    %v2230 = vmin.f32 %v2198, 1.0
    %v2231 = vmin.f32 %v2199, 1.0
    %v2232 = vmin.f32 %v2200, 1.0
    %v2233 = vmin.f32 %v2201, 1.0
    %v2234 = vmin.f32 %v2202, 1.0
    %v2235 = vmin.f32 %v2203, 1.0
    %v2236 = vmin.f32 %v2204, 1.0
    %v2237 = vpack.c.bf16 %v2207, %v2205
    %v2238 = vpack.c.bf16 %v2208, %v2206
    %v2239 = vpack.c.bf16 %v2211, %v2209
    %v2240 = vpack.c.bf16 %v2212, %v2210
    %v2241 = vpack.c.bf16 %v2215, %v2213
    %v2242 = vpack.c.bf16 %v2216, %v2214
    %v2243 = vpack.c.bf16 %v2219, %v2217
    %v2244 = vpack.c.bf16 %v2220, %v2218
    %v2245 = vpack.c.bf16 %v2223, %v2221
    %v2246 = vpack.c.bf16 %v2224, %v2222
    %v2247 = vpack.c.bf16 %v2227, %v2225
    %v2248 = vpack.c.bf16 %v2228, %v2226
    %v2249 = vpack.c.bf16 %v2231, %v2229
    %v2250 = vpack.c.bf16 %v2232, %v2230
    %v2251 = vpack.c.bf16 %v2235, %v2233
    %v2252 = vpack.c.bf16 %v2236, %v2234
    %v2253 = vld [vmem:[%s6] sm:$0xff]
    %v2254 = vld [vmem:[%s6 + $0x8] sm:$0xff]
    %v2255 = vld [vmem:[%s6 + $0x10] sm:$0xff]
    %v2256 = vld [vmem:[%s6 + $0x18] sm:$0xff]
    %v2257 = vld [vmem:[%s6 + $0x20] sm:$0xff]
    %v2258 = vld [vmem:[%s6 + $0x28] sm:$0xff]
    %v2259 = vld [vmem:[%s6 + $0x30] sm:$0xff]
    %v2260 = vld [vmem:[%s6 + $0x38] sm:$0xff]
    %v2261 = vld [vmem:[%s6 + $0x40] sm:$0xff]
    %v2262 = vld [vmem:[%s6 + $0x48] sm:$0xff]
    %v2263 = vld [vmem:[%s6 + $0x50] sm:$0xff]
    %v2264 = vld [vmem:[%s6 + $0x58] sm:$0xff]
    %v2265 = vld [vmem:[%s6 + $0x60] sm:$0xff]
    %v2266 = vld [vmem:[%s6 + $0x68] sm:$0xff]
    %v2267 = vld [vmem:[%s6 + $0x70] sm:$0xff]
    %v2268 = vld [vmem:[%s6 + $0x78] sm:$0xff]
    %v2269 = vld [vmem:[%s6 + $0x80] sm:$0xff]
    %v2270 = vld [vmem:[%s6 + $0x88] sm:$0xff]
    %v2271 = vld [vmem:[%s6 + $0x90] sm:$0xff]
    %v2272 = vld [vmem:[%s6 + $0x98] sm:$0xff]
    %v2273 = vld [vmem:[%s6 + $0xa0] sm:$0xff]
    %v2274 = vld [vmem:[%s6 + $0xa8] sm:$0xff]
    %v2275 = vld [vmem:[%s6 + $0xb0] sm:$0xff]
    %v2276 = vld [vmem:[%s6 + $0xb8] sm:$0xff]
    %v2277 = vld [vmem:[%s6 + $0xc0] sm:$0xff]
    %v2278 = vld [vmem:[%s6 + $0xc8] sm:$0xff]
    %v2279 = vld [vmem:[%s6 + $0xd0] sm:$0xff]
    %v2280 = vld [vmem:[%s6 + $0xd8] sm:$0xff]
    %v2281 = vld [vmem:[%s6 + $0xe0] sm:$0xff]
    %v2282 = vld [vmem:[%s6 + $0xe8] sm:$0xff]
    %v2283 = vld [vmem:[%s6 + $0xf0] sm:$0xff]
    %v2284 = vld [vmem:[%s6 + $0xf8] sm:$0xff]
    %v2285 = vld [vmem:[%s6 + $0x100] sm:$0xff]
    %v2286 = vld [vmem:[%s6 + $0x108] sm:$0xff]
    %v2287 = vld [vmem:[%s6 + $0x110] sm:$0xff]
    %v2288 = vld [vmem:[%s6 + $0x118] sm:$0xff]
    %v2289 = vld [vmem:[%s6 + $0x120] sm:$0xff]
    %v2290 = vld [vmem:[%s6 + $0x128] sm:$0xff]
    %v2291 = vld [vmem:[%s6 + $0x130] sm:$0xff]
    %v2292 = vld [vmem:[%s6 + $0x138] sm:$0xff]
    %v2293 = vld [vmem:[%s6 + $0x140] sm:$0xff]
    %v2294 = vld [vmem:[%s6 + $0x148] sm:$0xff]
    %v2295 = vld [vmem:[%s6 + $0x150] sm:$0xff]
    %v2296 = vld [vmem:[%s6 + $0x158] sm:$0xff]
    %v2297 = vld [vmem:[%s6 + $0x160] sm:$0xff]
    %v2298 = vld [vmem:[%s6 + $0x168] sm:$0xff]
    %v2299 = vld [vmem:[%s6 + $0x170] sm:$0xff]
    %v2300 = vld [vmem:[%s6 + $0x178] sm:$0xff]
    %v2301 = vld [vmem:[%s6 + $0x180] sm:$0xff]
    %v2302 = vld [vmem:[%s6 + $0x188] sm:$0xff]
    %v2303 = vld [vmem:[%s6 + $0x190] sm:$0xff]
    %v2304 = vld [vmem:[%s6 + $0x198] sm:$0xff]
    %v2305 = vld [vmem:[%s6 + $0x1a0] sm:$0xff]
    %v2306 = vld [vmem:[%s6 + $0x1a8] sm:$0xff]
    %v2307 = vld [vmem:[%s6 + $0x1b0] sm:$0xff]
    %v2308 = vld [vmem:[%s6 + $0x1b8] sm:$0xff]
    %v2309 = vld [vmem:[%s6 + $0x1c0] sm:$0xff]
    %v2310 = vld [vmem:[%s6 + $0x1c8] sm:$0xff]
    %v2311 = vld [vmem:[%s6 + $0x1d0] sm:$0xff]
    %v2312 = vld [vmem:[%s6 + $0x1d8] sm:$0xff]
    %v2313 = vld [vmem:[%s6 + $0x1e0] sm:$0xff]
    %v2314 = vld [vmem:[%s6 + $0x1e8] sm:$0xff]
    %v2315 = vld [vmem:[%s6 + $0x1f0] sm:$0xff]
    %v2316 = vld [vmem:[%s6 + $0x1f8] sm:$0xff]
    %v2381 = vunpack.c.l.b16 %v2253
    %v2382 = vunpack.c.h.b16 %v2253
    %v2383 = vunpack.c.l.b16 %v2254
    %v2384 = vunpack.c.h.b16 %v2254
    %v2385 = vunpack.c.l.b16 %v2255
    %v2386 = vunpack.c.h.b16 %v2255
    %v2387 = vunpack.c.l.b16 %v2256
    %v2388 = vunpack.c.h.b16 %v2256
    %v2389 = vunpack.c.l.b16 %v2257
    %v2390 = vunpack.c.h.b16 %v2257
    %v2391 = vunpack.c.l.b16 %v2258
    %v2392 = vunpack.c.h.b16 %v2258
    %v2393 = vunpack.c.l.b16 %v2259
    %v2394 = vunpack.c.h.b16 %v2259
    %v2395 = vunpack.c.l.b16 %v2260
    %v2396 = vunpack.c.h.b16 %v2260
    %v2397 = vunpack.c.l.b16 %v2261
    %v2398 = vunpack.c.h.b16 %v2261
    %v2399 = vunpack.c.l.b16 %v2262
    %v2400 = vunpack.c.h.b16 %v2262
    %v2401 = vunpack.c.l.b16 %v2263
    %v2402 = vunpack.c.h.b16 %v2263
    %v2403 = vunpack.c.l.b16 %v2264
    %v2404 = vunpack.c.h.b16 %v2264
    %v2405 = vunpack.c.l.b16 %v2265
    %v2406 = vunpack.c.h.b16 %v2265
    %v2407 = vunpack.c.l.b16 %v2266
    %v2408 = vunpack.c.h.b16 %v2266
    %v2409 = vunpack.c.l.b16 %v2267
    %v2410 = vunpack.c.h.b16 %v2267
    %v2411 = vunpack.c.l.b16 %v2268
    %v2412 = vunpack.c.h.b16 %v2268
    %v2413 = vunpack.c.l.b16 %v2269
    %v2414 = vunpack.c.h.b16 %v2269
    %v2415 = vunpack.c.l.b16 %v2270
    %v2416 = vunpack.c.h.b16 %v2270
    %v2417 = vunpack.c.l.b16 %v2271
    %v2418 = vunpack.c.h.b16 %v2271
    %v2419 = vunpack.c.l.b16 %v2272
    %v2420 = vunpack.c.h.b16 %v2272
    %v2421 = vunpack.c.l.b16 %v2273
    %v2422 = vunpack.c.h.b16 %v2273
    %v2423 = vunpack.c.l.b16 %v2274
    %v2424 = vunpack.c.h.b16 %v2274
    %v2425 = vunpack.c.l.b16 %v2275
    %v2426 = vunpack.c.h.b16 %v2275
    %v2427 = vunpack.c.l.b16 %v2276
    %v2428 = vunpack.c.h.b16 %v2276
    %v2429 = vunpack.c.l.b16 %v2277
    %v2430 = vunpack.c.h.b16 %v2277
    %v2431 = vunpack.c.l.b16 %v2278
    %v2432 = vunpack.c.h.b16 %v2278
    %v2433 = vunpack.c.l.b16 %v2279
    %v2434 = vunpack.c.h.b16 %v2279
    %v2435 = vunpack.c.l.b16 %v2280
    %v2436 = vunpack.c.h.b16 %v2280
    %v2437 = vunpack.c.l.b16 %v2281
    %v2438 = vunpack.c.h.b16 %v2281
    %v2439 = vunpack.c.l.b16 %v2282
    %v2440 = vunpack.c.h.b16 %v2282
    %v2441 = vunpack.c.l.b16 %v2283
    %v2442 = vunpack.c.h.b16 %v2283
    %v2443 = vunpack.c.l.b16 %v2284
    %v2444 = vunpack.c.h.b16 %v2284
    %v2445 = vunpack.c.l.b16 %v2285
    %v2446 = vunpack.c.h.b16 %v2285
    %v2447 = vunpack.c.l.b16 %v2286
    %v2448 = vunpack.c.h.b16 %v2286
    %v2449 = vunpack.c.l.b16 %v2287
    %v2450 = vunpack.c.h.b16 %v2287
    %v2451 = vunpack.c.l.b16 %v2288
    %v2452 = vunpack.c.h.b16 %v2288
    %v2453 = vunpack.c.l.b16 %v2289
    %v2454 = vunpack.c.h.b16 %v2289
    %v2455 = vunpack.c.l.b16 %v2290
    %v2456 = vunpack.c.h.b16 %v2290
    %v2457 = vunpack.c.l.b16 %v2291
    %v2458 = vunpack.c.h.b16 %v2291
    %v2459 = vunpack.c.l.b16 %v2292
    %v2460 = vunpack.c.h.b16 %v2292
    %v2461 = vunpack.c.l.b16 %v2293
    %v2462 = vunpack.c.h.b16 %v2293
    %v2463 = vunpack.c.l.b16 %v2294
    %v2464 = vunpack.c.h.b16 %v2294
    %v2465 = vunpack.c.l.b16 %v2295
    %v2466 = vunpack.c.h.b16 %v2295
    %v2467 = vunpack.c.l.b16 %v2296
    %v2468 = vunpack.c.h.b16 %v2296
    %v2469 = vunpack.c.l.b16 %v2297
    %v2470 = vunpack.c.h.b16 %v2297
    %v2471 = vunpack.c.l.b16 %v2298
    %v2472 = vunpack.c.h.b16 %v2298
    %v2473 = vunpack.c.l.b16 %v2299
    %v2474 = vunpack.c.h.b16 %v2299
    %v2475 = vunpack.c.l.b16 %v2300
    %v2476 = vunpack.c.h.b16 %v2300
    %v2477 = vunpack.c.l.b16 %v2301
    %v2478 = vunpack.c.h.b16 %v2301
    %v2479 = vunpack.c.l.b16 %v2302
    %v2480 = vunpack.c.h.b16 %v2302
    %v2481 = vunpack.c.l.b16 %v2303
    %v2482 = vunpack.c.h.b16 %v2303
    %v2483 = vunpack.c.l.b16 %v2304
    %v2484 = vunpack.c.h.b16 %v2304
    %v2485 = vunpack.c.l.b16 %v2305
    %v2486 = vunpack.c.h.b16 %v2305
    %v2487 = vunpack.c.l.b16 %v2306
    %v2488 = vunpack.c.h.b16 %v2306
    %v2489 = vunpack.c.l.b16 %v2307
    %v2490 = vunpack.c.h.b16 %v2307
    %v2491 = vunpack.c.l.b16 %v2308
    %v2492 = vunpack.c.h.b16 %v2308
    %v2493 = vunpack.c.l.b16 %v2309
    %v2494 = vunpack.c.h.b16 %v2309
    %v2495 = vunpack.c.l.b16 %v2310
    %v2496 = vunpack.c.h.b16 %v2310
    %v2497 = vunpack.c.l.b16 %v2311
    %v2498 = vunpack.c.h.b16 %v2311
    %v2499 = vunpack.c.l.b16 %v2312
    %v2500 = vunpack.c.h.b16 %v2312
    %v2501 = vunpack.c.l.b16 %v2313
    %v2502 = vunpack.c.h.b16 %v2313
    %v2503 = vunpack.c.l.b16 %v2314
    %v2504 = vunpack.c.h.b16 %v2314
    %v2505 = vunpack.c.l.b16 %v2315
    %v2506 = vunpack.c.h.b16 %v2315
    %v2507 = vunpack.c.l.b16 %v2316
    %v2508 = vunpack.c.h.b16 %v2316
    %v2509 = vpack.c.b16 %v2383, %v2381
    %v2510 = vpack.c.b16 %v2384, %v2382
    %v2511 = vpack.c.b16 %v2387, %v2385
    %v2512 = vpack.c.b16 %v2388, %v2386
    %v2513 = vpack.c.b16 %v2391, %v2389
    %v2514 = vpack.c.b16 %v2392, %v2390
    %v2515 = vpack.c.b16 %v2395, %v2393
    %v2516 = vpack.c.b16 %v2396, %v2394
    %v2517 = vpack.c.b16 %v2399, %v2397
    %v2518 = vpack.c.b16 %v2400, %v2398
    %v2519 = vpack.c.b16 %v2403, %v2401
    %v2520 = vpack.c.b16 %v2404, %v2402
    %v2521 = vpack.c.b16 %v2407, %v2405
    %v2522 = vpack.c.b16 %v2408, %v2406
    %v2523 = vpack.c.b16 %v2411, %v2409
    %v2524 = vpack.c.b16 %v2412, %v2410
    %v2525 = vpack.c.b16 %v2415, %v2413
    %v2526 = vpack.c.b16 %v2416, %v2414
    %v2527 = vpack.c.b16 %v2419, %v2417
    %v2528 = vpack.c.b16 %v2420, %v2418
    %v2529 = vpack.c.b16 %v2423, %v2421
    %v2530 = vpack.c.b16 %v2424, %v2422
    %v2531 = vpack.c.b16 %v2427, %v2425
    %v2532 = vpack.c.b16 %v2428, %v2426
    %v2533 = vpack.c.b16 %v2431, %v2429
    %v2534 = vpack.c.b16 %v2432, %v2430
    %v2535 = vpack.c.b16 %v2435, %v2433
    %v2536 = vpack.c.b16 %v2436, %v2434
    %v2537 = vpack.c.b16 %v2439, %v2437
    %v2538 = vpack.c.b16 %v2440, %v2438
    %v2539 = vpack.c.b16 %v2443, %v2441
    %v2540 = vpack.c.b16 %v2444, %v2442
    %v2541 = vpack.c.b16 %v2447, %v2445
    %v2542 = vpack.c.b16 %v2448, %v2446
    %v2543 = vpack.c.b16 %v2451, %v2449
    %v2544 = vpack.c.b16 %v2452, %v2450
    %v2545 = vpack.c.b16 %v2455, %v2453
    %v2546 = vpack.c.b16 %v2456, %v2454
    %v2547 = vpack.c.b16 %v2459, %v2457
    %v2548 = vpack.c.b16 %v2460, %v2458
    %v2549 = vpack.c.b16 %v2463, %v2461
    %v2550 = vpack.c.b16 %v2464, %v2462
    %v2551 = vpack.c.b16 %v2467, %v2465
    %v2552 = vpack.c.b16 %v2468, %v2466
    %v2553 = vpack.c.b16 %v2471, %v2469
    %v2554 = vpack.c.b16 %v2472, %v2470
    %v2555 = vpack.c.b16 %v2475, %v2473
    %v2556 = vpack.c.b16 %v2476, %v2474
    %v2557 = vpack.c.b16 %v2479, %v2477
    %v2558 = vpack.c.b16 %v2480, %v2478
    %v2559 = vpack.c.b16 %v2483, %v2481
    %v2560 = vpack.c.b16 %v2484, %v2482
    %v2561 = vpack.c.b16 %v2487, %v2485
    %v2562 = vpack.c.b16 %v2488, %v2486
    %v2563 = vpack.c.b16 %v2491, %v2489
    %v2564 = vpack.c.b16 %v2492, %v2490
    %v2565 = vpack.c.b16 %v2495, %v2493
    %v2566 = vpack.c.b16 %v2496, %v2494
    %v2567 = vpack.c.b16 %v2499, %v2497
    %v2568 = vpack.c.b16 %v2500, %v2498
    %v2569 = vpack.c.b16 %v2503, %v2501
    %v2570 = vpack.c.b16 %v2504, %v2502
    %v2571 = vpack.c.b16 %v2507, %v2505
    %v2572 = vpack.c.b16 %v2508, %v2506
    %2637 = vmatprep.subr.bf16.mxu0 %v2510
    %2638 = vmatpush1.bf16.msra.mxu0 %v2509
    %2639 = vmatprep.subr.bf16.mxu0 %v2512
    %2640 = vmatpush1.bf16.msra.mxu0 %v2511
    %2641 = vmatprep.subr.bf16.mxu0 %v2514
    %2642 = vmatpush1.bf16.msra.mxu0 %v2513
    %2643 = vmatprep.subr.bf16.mxu0 %v2516
    %2644 = vmatpush1.bf16.msra.mxu0 %v2515
    %2645 = vmatprep.subr.bf16.mxu0 %v2518
    %2646 = vmatpush1.bf16.msra.mxu0 %v2517
    %2647 = vmatprep.subr.bf16.mxu0 %v2520
    %2648 = vmatpush1.bf16.msra.mxu0 %v2519
    %2649 = vmatprep.subr.bf16.mxu0 %v2522
    %2650 = vmatpush1.bf16.msra.mxu0 %v2521
    %2651 = vmatprep.subr.bf16.mxu0 %v2524
    %2652 = vmatpush1.bf16.msra.mxu0 %v2523
    %2653 = vmatprep.subr.bf16.mxu0 %v2526
    %2654 = vmatpush1.bf16.msra.mxu0 %v2525
    %2655 = vmatprep.subr.bf16.mxu0 %v2528
    %2656 = vmatpush1.bf16.msra.mxu0 %v2527
    %2657 = vmatprep.subr.bf16.mxu0 %v2530
    %2658 = vmatpush1.bf16.msra.mxu0 %v2529
    %2659 = vmatprep.subr.bf16.mxu0 %v2532
    %2660 = vmatpush1.bf16.msra.mxu0 %v2531
    %2661 = vmatprep.subr.bf16.mxu0 %v2534
    %2662 = vmatpush1.bf16.msra.mxu0 %v2533
    %2663 = vmatprep.subr.bf16.mxu0 %v2536
    %2664 = vmatpush1.bf16.msra.mxu0 %v2535
    %2665 = vmatprep.subr.bf16.mxu0 %v2538
    %2666 = vmatpush1.bf16.msra.mxu0 %v2537
    %2667 = vmatprep.subr.bf16.mxu0 %v2540
    %2668 = vmatpush1.bf16.msra.mxu0 %v2539
    %2669 = vmatprep.mubr.bf16.mxu0 %v1841
    %2670 = vmatmul.mubr.bf16.gmra.mrb[0].mxu0 %v1840
    %v2671 = vpop.f32.mrb[0].mxu0
    %v2672 = vadd.f32 %v1893, %v2671
    %v2673 = vpop.f32.mrb[0].mxu0
    %v2674 = vadd.f32 %v1897, %v2673
    %v2675 = vpop.f32.mrb[0].mxu0
    %v2676 = vadd.f32 %v1893, %v2675
    %v2677 = vpop.f32.mrb[0].mxu0
    %v2678 = vadd.f32 %v1897, %v2677
    %2679 = vmatprep.mubr.bf16.mxu0 %v1843
    %2680 = vmatmul.mubr.bf16.gmra.mrb[0].mxu0 %v1842
    %v2681 = vpop.f32.mrb[0].mxu0
    %v2682 = vadd.f32 %v1893, %v2681
    %v2683 = vpop.f32.mrb[0].mxu0
    %v2684 = vadd.f32 %v1897, %v2683
    %v2685 = vpop.f32.mrb[0].mxu0
    %v2686 = vadd.f32 %v1893, %v2685
    %v2687 = vpop.f32.mrb[0].mxu0
    %v2688 = vadd.f32 %v1897, %v2687
    %2689 = vmatprep.mubr.bf16.mxu0 %v1845
    %2690 = vmatmul.mubr.bf16.gmra.mrb[0].mxu0 %v1844
    %v2691 = vpop.f32.mrb[0].mxu0
    %v2692 = vadd.f32 %v1893, %v2691
    %v2693 = vpop.f32.mrb[0].mxu0
    %v2694 = vadd.f32 %v1897, %v2693
    %v2695 = vpop.f32.mrb[0].mxu0
    %v2696 = vadd.f32 %v1893, %v2695
    %v2697 = vpop.f32.mrb[0].mxu0
    %v2698 = vadd.f32 %v1897, %v2697
    %2699 = vmatprep.mubr.bf16.mxu0 %v1847
    %2700 = vmatmul.mubr.bf16.gmra.mrb[0].mxu0 %v1846
    %v2701 = vpop.f32.mrb[0].mxu0
    %v2702 = vadd.f32 %v1893, %v2701
    %v2703 = vpop.f32.mrb[0].mxu0
    %v2704 = vadd.f32 %v1897, %v2703
    %v2705 = vpop.f32.mrb[0].mxu0
    %v2706 = vadd.f32 %v1893, %v2705
    %v2707 = vpop.f32.mrb[0].mxu0
    %v2708 = vadd.f32 %v1897, %v2707
    %2709 = vmatprep.mubr.bf16.mxu0 %v1849
    %2710 = vmatmul.mubr.bf16.gmra.mrb[0].mxu0 %v1848
    %v2711 = vpop.f32.mrb[0].mxu0
    %v2712 = vadd.f32 %v1893, %v2711
    %v2713 = vpop.f32.mrb[0].mxu0
    %v2714 = vadd.f32 %v1897, %v2713
    %v2715 = vpop.f32.mrb[0].mxu0
    %v2716 = vadd.f32 %v1893, %v2715
    %v2717 = vpop.f32.mrb[0].mxu0
    %v2718 = vadd.f32 %v1897, %v2717
    %2719 = vmatprep.mubr.bf16.mxu0 %v1851
    %2720 = vmatmul.mubr.bf16.gmra.mrb[0].mxu0 %v1850
    %v2721 = vpop.f32.mrb[0].mxu0
    %v2722 = vadd.f32 %v1893, %v2721
    %v2723 = vpop.f32.mrb[0].mxu0
    %v2724 = vadd.f32 %v1897, %v2723
    %v2725 = vpop.f32.mrb[0].mxu0
    %v2726 = vadd.f32 %v1893, %v2725
    %v2727 = vpop.f32.mrb[0].mxu0
    %v2728 = vadd.f32 %v1897, %v2727
    %2729 = vmatprep.mubr.bf16.mxu0 %v1853
    %2730 = vmatmul.mubr.bf16.gmra.mrb[0].mxu0 %v1852
    %v2731 = vpop.f32.mrb[0].mxu0
    %v2732 = vadd.f32 %v1893, %v2731
    %v2733 = vpop.f32.mrb[0].mxu0
    %v2734 = vadd.f32 %v1897, %v2733
    %v2735 = vpop.f32.mrb[0].mxu0
    %v2736 = vadd.f32 %v1893, %v2735
    %v2737 = vpop.f32.mrb[0].mxu0
    %v2738 = vadd.f32 %v1897, %v2737
    %2739 = vmatprep.mubr.bf16.mxu0 %v1855
    %2740 = vmatmul.mubr.bf16.gmra.mrb[0].mxu0 %v1854
    %v2741 = vpop.f32.mrb[0].mxu0
    %v2742 = vadd.f32 %v1893, %v2741
    %v2743 = vpop.f32.mrb[0].mxu0
    %v2744 = vadd.f32 %v1897, %v2743
    %v2745 = vpop.f32.mrb[0].mxu0
    %v2746 = vadd.f32 %v1893, %v2745
    %v2747 = vpop.f32.mrb[0].mxu0
    %v2748 = vadd.f32 %v1897, %v2747
    %2749 = vdwg.mxu0
    %2750 = vmatprep.subr.bf16.mxu0 %v2542
    %2751 = vmatpush1.bf16.msra.mxu0 %v2541
    %2752 = vmatprep.subr.bf16.mxu0 %v2544
    %2753 = vmatpush1.bf16.msra.mxu0 %v2543
    %2754 = vmatprep.subr.bf16.mxu0 %v2546
    %2755 = vmatpush1.bf16.msra.mxu0 %v2545
    %2756 = vmatprep.subr.bf16.mxu0 %v2548
    %2757 = vmatpush1.bf16.msra.mxu0 %v2547
    %2758 = vmatprep.subr.bf16.mxu0 %v2550
    %2759 = vmatpush1.bf16.msra.mxu0 %v2549
    %2760 = vmatprep.subr.bf16.mxu0 %v2552
    %2761 = vmatpush1.bf16.msra.mxu0 %v2551
    %2762 = vmatprep.subr.bf16.mxu0 %v2554
    %2763 = vmatpush1.bf16.msra.mxu0 %v2553
    %2764 = vmatprep.subr.bf16.mxu0 %v2556
    %2765 = vmatpush1.bf16.msra.mxu0 %v2555
    %2766 = vmatprep.subr.bf16.mxu0 %v2558
    %2767 = vmatpush1.bf16.msra.mxu0 %v2557
    %2768 = vmatprep.subr.bf16.mxu0 %v2560
    %2769 = vmatpush1.bf16.msra.mxu0 %v2559
    %2770 = vmatprep.subr.bf16.mxu0 %v2562
    %2771 = vmatpush1.bf16.msra.mxu0 %v2561
    %2772 = vmatprep.subr.bf16.mxu0 %v2564
    %2773 = vmatpush1.bf16.msra.mxu0 %v2563
    %2774 = vmatprep.subr.bf16.mxu0 %v2566
    %2775 = vmatpush1.bf16.msra.mxu0 %v2565
    %2776 = vmatprep.subr.bf16.mxu0 %v2568
    %2777 = vmatpush1.bf16.msra.mxu0 %v2567
    %2778 = vmatprep.subr.bf16.mxu0 %v2570
    %2779 = vmatpush1.bf16.msra.mxu0 %v2569
    %2780 = vmatprep.subr.bf16.mxu0 %v2572
    %2781 = vmatpush1.bf16.msra.mxu0 %v2571
    %2782 = vmatprep.mubr.bf16.mxu0 %v1845
    %2783 = vmatmul.mubr.bf16.gmra.mrb[0].mxu0 %v1844
    %v2784 = vpop.f32.mrb[0].mxu0
    %v2785 = vadd.f32 %v2672, %v2784
    %v2786 = vpop.f32.mrb[0].mxu0
    %v2787 = vadd.f32 %v2674, %v2786
    %v2788 = vpop.f32.mrb[0].mxu0
    %v2789 = vadd.f32 %v2676, %v2788
    %v2790 = vpop.f32.mrb[0].mxu0
    %v2791 = vadd.f32 %v2678, %v2790
    %2792 = vmatprep.mubr.bf16.mxu0 %v1847
    %2793 = vmatmul.mubr.bf16.gmra.mrb[0].mxu0 %v1846
    %v2794 = vpop.f32.mrb[0].mxu0
    %v2795 = vadd.f32 %v2682, %v2794
    %v2796 = vpop.f32.mrb[0].mxu0
    %v2797 = vadd.f32 %v2684, %v2796
    %v2798 = vpop.f32.mrb[0].mxu0
    %v2799 = vadd.f32 %v2686, %v2798
    %v2800 = vpop.f32.mrb[0].mxu0
    %v2801 = vadd.f32 %v2688, %v2800
    %2802 = vmatprep.mubr.bf16.mxu0 %v1849
    %2803 = vmatmul.mubr.bf16.gmra.mrb[0].mxu0 %v1848
    %v2804 = vpop.f32.mrb[0].mxu0
    %v2805 = vadd.f32 %v2692, %v2804
    %v2806 = vpop.f32.mrb[0].mxu0
    %v2807 = vadd.f32 %v2694, %v2806
    %v2808 = vpop.f32.mrb[0].mxu0
    %v2809 = vadd.f32 %v2696, %v2808
    %v2810 = vpop.f32.mrb[0].mxu0
    %v2811 = vadd.f32 %v2698, %v2810
    %2812 = vmatprep.mubr.bf16.mxu0 %v1851
    %2813 = vmatmul.mubr.bf16.gmra.mrb[0].mxu0 %v1850
    %v2814 = vpop.f32.mrb[0].mxu0
    %v2815 = vadd.f32 %v2702, %v2814
    %v2816 = vpop.f32.mrb[0].mxu0
    %v2817 = vadd.f32 %v2704, %v2816
    %v2818 = vpop.f32.mrb[0].mxu0
    %v2819 = vadd.f32 %v2706, %v2818
    %v2820 = vpop.f32.mrb[0].mxu0
    %v2821 = vadd.f32 %v2708, %v2820
    %2822 = vmatprep.mubr.bf16.mxu0 %v1853
    %2823 = vmatmul.mubr.bf16.gmra.mrb[0].mxu0 %v1852
    %v2824 = vpop.f32.mrb[0].mxu0
    %v2825 = vadd.f32 %v2712, %v2824
    %v2826 = vpop.f32.mrb[0].mxu0
    %v2827 = vadd.f32 %v2714, %v2826
    %v2828 = vpop.f32.mrb[0].mxu0
    %v2829 = vadd.f32 %v2716, %v2828
    %v2830 = vpop.f32.mrb[0].mxu0
    %v2831 = vadd.f32 %v2718, %v2830
    %2832 = vmatprep.mubr.bf16.mxu0 %v1855
    %2833 = vmatmul.mubr.bf16.gmra.mrb[0].mxu0 %v1854
    %v2834 = vpop.f32.mrb[0].mxu0
    %v2835 = vadd.f32 %v2722, %v2834
    %v2836 = vpop.f32.mrb[0].mxu0
    %v2837 = vadd.f32 %v2724, %v2836
    %v2838 = vpop.f32.mrb[0].mxu0
    %v2839 = vadd.f32 %v2726, %v2838
    %v2840 = vpop.f32.mrb[0].mxu0
    %v2841 = vadd.f32 %v2728, %v2840
    %2842 = vmatprep.mubr.bf16.mxu0 0
    %2843 = vmatmul.mubr.bf16.gmra.mrb[0].mxu0 0
    %v2844 = vpop.f32.mrb[0].mxu0
    %v2845 = vadd.f32 %v2732, %v2844
    %v2846 = vpop.f32.mrb[0].mxu0
    %v2847 = vadd.f32 %v2734, %v2846
    %v2848 = vpop.f32.mrb[0].mxu0
    %v2849 = vadd.f32 %v2736, %v2848
    %v2850 = vpop.f32.mrb[0].mxu0
    %v2851 = vadd.f32 %v2738, %v2850
    %2852 = vmatprep.mubr.bf16.mxu0 0
    %2853 = vmatmul.mubr.bf16.gmra.mrb[0].mxu0 0
    %v2854 = vpop.f32.mrb[0].mxu0
    %v2855 = vadd.f32 %v2742, %v2854
    %v2856 = vpop.f32.mrb[0].mxu0
    %v2857 = vadd.f32 %v2744, %v2856
    %v2858 = vpop.f32.mrb[0].mxu0
    %v2859 = vadd.f32 %v2746, %v2858
    %v2860 = vpop.f32.mrb[0].mxu0
    %v2861 = vadd.f32 %v2748, %v2860
    %2862 = vdwg.mxu0
    %v2863 = vmax.f32 %v2785, -1.0
    %v2864 = vmax.f32 %v2787, -1.0
    %v2865 = vmax.f32 %v2789, -1.0
    %v2866 = vmax.f32 %v2791, -1.0
    %v2867 = vmax.f32 %v2795, -1.0
    %v2868 = vmax.f32 %v2797, -1.0
    %v2869 = vmax.f32 %v2799, -1.0
    %v2870 = vmax.f32 %v2801, -1.0
    %v2871 = vmax.f32 %v2805, -1.0
    %v2872 = vmax.f32 %v2807, -1.0
    %v2873 = vmax.f32 %v2809, -1.0
    %v2874 = vmax.f32 %v2811, -1.0
    %v2875 = vmax.f32 %v2815, -1.0
    %v2876 = vmax.f32 %v2817, -1.0
    %v2877 = vmax.f32 %v2819, -1.0
    %v2878 = vmax.f32 %v2821, -1.0
    %v2879 = vmax.f32 %v2825, -1.0
    %v2880 = vmax.f32 %v2827, -1.0
    %v2881 = vmax.f32 %v2829, -1.0
    %v2882 = vmax.f32 %v2831, -1.0
    %v2883 = vmax.f32 %v2835, -1.0
    %v2884 = vmax.f32 %v2837, -1.0
    %v2885 = vmax.f32 %v2839, -1.0
    %v2886 = vmax.f32 %v2841, -1.0
    %v2887 = vmax.f32 %v2845, -1.0
    %v2888 = vmax.f32 %v2847, -1.0
    %v2889 = vmax.f32 %v2849, -1.0
    %v2890 = vmax.f32 %v2851, -1.0
    %v2891 = vmax.f32 %v2855, -1.0
    %v2892 = vmax.f32 %v2857, -1.0
    %v2893 = vmax.f32 %v2859, -1.0
    %v2894 = vmax.f32 %v2861, -1.0
    %v2895 = vmin.f32 %v2863, 1.0
    %v2896 = vmin.f32 %v2864, 1.0
    %v2897 = vmin.f32 %v2865, 1.0
    %v2898 = vmin.f32 %v2866, 1.0
    %v2899 = vmin.f32 %v2867, 1.0
    %v2900 = vmin.f32 %v2868, 1.0
    %v2901 = vmin.f32 %v2869, 1.0
    %v2902 = vmin.f32 %v2870, 1.0
    %v2903 = vmin.f32 %v2871, 1.0
    %v2904 = vmin.f32 %v2872, 1.0
    %v2905 = vmin.f32 %v2873, 1.0
    %v2906 = vmin.f32 %v2874, 1.0
    %v2907 = vmin.f32 %v2875, 1.0
    %v2908 = vmin.f32 %v2876, 1.0
    %v2909 = vmin.f32 %v2877, 1.0
    %v2910 = vmin.f32 %v2878, 1.0
    %v2911 = vmin.f32 %v2879, 1.0
    %v2912 = vmin.f32 %v2880, 1.0
    %v2913 = vmin.f32 %v2881, 1.0
    %v2914 = vmin.f32 %v2882, 1.0
    %v2915 = vmin.f32 %v2883, 1.0
    %v2916 = vmin.f32 %v2884, 1.0
    %v2917 = vmin.f32 %v2885, 1.0
    %v2918 = vmin.f32 %v2886, 1.0
    %v2919 = vmin.f32 %v2887, 1.0
    %v2920 = vmin.f32 %v2888, 1.0
    %v2921 = vmin.f32 %v2889, 1.0
    %v2922 = vmin.f32 %v2890, 1.0
    %v2923 = vmin.f32 %v2891, 1.0
    %v2924 = vmin.f32 %v2892, 1.0
    %v2925 = vmin.f32 %v2893, 1.0
    %v2926 = vmin.f32 %v2894, 1.0
    %v2927 = vpack.c.bf16 %v2897, %v2895
    %v2928 = vpack.c.bf16 %v2898, %v2896
    %v2929 = vpack.c.bf16 %v2901, %v2899
    %v2930 = vpack.c.bf16 %v2902, %v2900
    %v2931 = vpack.c.bf16 %v2905, %v2903
    %v2932 = vpack.c.bf16 %v2906, %v2904
    %v2933 = vpack.c.bf16 %v2909, %v2907
    %v2934 = vpack.c.bf16 %v2910, %v2908
    %v2935 = vpack.c.bf16 %v2913, %v2911
    %v2936 = vpack.c.bf16 %v2914, %v2912
    %v2937 = vpack.c.bf16 %v2917, %v2915
    %v2938 = vpack.c.bf16 %v2918, %v2916
    %v2939 = vpack.c.bf16 %v2921, %v2919
    %v2940 = vpack.c.bf16 %v2922, %v2920
    %v2941 = vpack.c.bf16 %v2925, %v2923
    %v2942 = vpack.c.bf16 %v2926, %v2924
    %v2943 = vld [vmem:[%s8] sm:$0xf]
    %v2944 = vld [vmem:[%s8 + $0x4] sm:$0xf]
    %v2945 = vld [vmem:[%s8 + $0x8] sm:$0xf]
    %v2946 = vld [vmem:[%s8 + $0xc] sm:$0xf]
    %v2947 = vld [vmem:[%s8 + $0x10] sm:$0xf]
    %v2948 = vld [vmem:[%s8 + $0x14] sm:$0xf]
    %v2949 = vld [vmem:[%s8 + $0x18] sm:$0xf]
    %v2950 = vld [vmem:[%s8 + $0x1c] sm:$0xf]
    %v2951 = vld [vmem:[%s8 + $0x20] sm:$0xf]
    %v2952 = vld [vmem:[%s8 + $0x24] sm:$0xf]
    %v2953 = vld [vmem:[%s8 + $0x28] sm:$0xf]
    %v2954 = vld [vmem:[%s8 + $0x2c] sm:$0xf]
    %v2955 = vld [vmem:[%s8 + $0x30] sm:$0xf]
    %v2956 = vld [vmem:[%s8 + $0x34] sm:$0xf]
    %v2957 = vld [vmem:[%s8 + $0x38] sm:$0xf]
    %v2958 = vld [vmem:[%s8 + $0x3c] sm:$0xf]
    %v2959 = vld [vmem:[%s8 + $0x40] sm:$0xf]
    %v2960 = vld [vmem:[%s8 + $0x44] sm:$0xf]
    %v2961 = vld [vmem:[%s8 + $0x48] sm:$0xf]
    %v2962 = vld [vmem:[%s8 + $0x4c] sm:$0xf]
    %v2963 = vld [vmem:[%s8 + $0x50] sm:$0xf]
    %v2964 = vld [vmem:[%s8 + $0x54] sm:$0xf]
    %v2965 = vld [vmem:[%s8 + $0x58] sm:$0xf]
    %v2966 = vld [vmem:[%s8 + $0x5c] sm:$0xf]
    %v2967 = vld [vmem:[%s8 + $0x60] sm:$0xf]
    %v2968 = vld [vmem:[%s8 + $0x64] sm:$0xf]
    %v2969 = vld [vmem:[%s8 + $0x68] sm:$0xf]
    %v2970 = vld [vmem:[%s8 + $0x6c] sm:$0xf]
    %v2971 = vld [vmem:[%s8 + $0x70] sm:$0xf]
    %v2972 = vld [vmem:[%s8 + $0x74] sm:$0xf]
    %v2973 = vld [vmem:[%s8 + $0x78] sm:$0xf]
    %v2974 = vld [vmem:[%s8 + $0x7c] sm:$0xf]
    %v2975 = vld [vmem:[%s10] sm:$0x1]
    %v2977 = vlaneseq
    %v2978 = vshrl.u32 %v2977, 7
    %v2979 = vsub.s32 0, %v2978
    %v2980 = vrot.slane %v2975, %v2979
    %v3014 = vunpack.c.l.b16 %v2943
    %v3015 = vunpack.c.l.b16 %v2944
    %v3016 = vunpack.c.l.b16 %v2945
    %v3017 = vunpack.c.l.b16 %v2946
    %v3018 = vunpack.c.l.b16 %v2947
    %v3019 = vunpack.c.l.b16 %v2948
    %v3020 = vunpack.c.l.b16 %v2949
    %v3021 = vunpack.c.l.b16 %v2950
    %v3022 = vunpack.c.l.b16 %v2951
    %v3023 = vunpack.c.l.b16 %v2952
    %v3024 = vunpack.c.l.b16 %v2953
    %v3025 = vunpack.c.l.b16 %v2954
    %v3026 = vunpack.c.l.b16 %v2955
    %v3027 = vunpack.c.l.b16 %v2956
    %v3028 = vunpack.c.l.b16 %v2957
    %v3029 = vunpack.c.l.b16 %v2958
    %v3030 = vunpack.c.l.b16 %v2959
    %v3031 = vunpack.c.l.b16 %v2960
    %v3032 = vunpack.c.l.b16 %v2961
    %v3033 = vunpack.c.l.b16 %v2962
    %v3034 = vunpack.c.l.b16 %v2963
    %v3035 = vunpack.c.l.b16 %v2964
    %v3036 = vunpack.c.l.b16 %v2965
    %v3037 = vunpack.c.l.b16 %v2966
    %v3038 = vunpack.c.l.b16 %v2967
    %v3039 = vunpack.c.l.b16 %v2968
    %v3040 = vunpack.c.l.b16 %v2969
    %v3041 = vunpack.c.l.b16 %v2970
    %v3042 = vunpack.c.l.b16 %v2971
    %v3043 = vunpack.c.l.b16 %v2972
    %v3044 = vunpack.c.l.b16 %v2973
    %v3045 = vunpack.c.l.b16 %v2974
    %v3046 = vpack.c.b16 %v3015, %v3014
    %v3047 = vpack.c.b16 %v3017, %v3016
    %v3048 = vpack.c.b16 %v3019, %v3018
    %v3049 = vpack.c.b16 %v3021, %v3020
    %v3050 = vpack.c.b16 %v3023, %v3022
    %v3051 = vpack.c.b16 %v3025, %v3024
    %v3052 = vpack.c.b16 %v3027, %v3026
    %v3053 = vpack.c.b16 %v3029, %v3028
    %v3054 = vpack.c.b16 %v3031, %v3030
    %v3055 = vpack.c.b16 %v3033, %v3032
    %v3056 = vpack.c.b16 %v3035, %v3034
    %v3057 = vpack.c.b16 %v3037, %v3036
    %v3058 = vpack.c.b16 %v3039, %v3038
    %v3059 = vpack.c.b16 %v3041, %v3040
    %v3060 = vpack.c.b16 %v3043, %v3042
    %v3061 = vpack.c.b16 %v3045, %v3044
    %3078 = vmatprep.subr.bf16.mxu0 0
    %3079 = vmatpush1.bf16.msra.mxu0 %v3046
    %3080 = vmatprep.subr.bf16.mxu0 0
    %3081 = vmatpush1.bf16.msra.mxu0 %v3047
    %3082 = vmatprep.subr.bf16.mxu0 0
    %3083 = vmatpush1.bf16.msra.mxu0 %v3048
    %3084 = vmatprep.subr.bf16.mxu0 0
    %3085 = vmatpush1.bf16.msra.mxu0 %v3049
    %3086 = vmatprep.subr.bf16.mxu0 0
    %3087 = vmatpush1.bf16.msra.mxu0 %v3050
    %3088 = vmatprep.subr.bf16.mxu0 0
    %3089 = vmatpush1.bf16.msra.mxu0 %v3051
    %3090 = vmatprep.subr.bf16.mxu0 0
    %3091 = vmatpush1.bf16.msra.mxu0 %v3052
    %3092 = vmatprep.subr.bf16.mxu0 0
    %3093 = vmatpush1.bf16.msra.mxu0 %v3053
    %3094 = vmatprep.subr.bf16.mxu0 0
    %3095 = vmatpush1.bf16.msra.mxu0 %v3054
    %3096 = vmatprep.subr.bf16.mxu0 0
    %3097 = vmatpush1.bf16.msra.mxu0 %v3055
    %3098 = vmatprep.subr.bf16.mxu0 0
    %3099 = vmatpush1.bf16.msra.mxu0 %v3056
    %3100 = vmatprep.subr.bf16.mxu0 0
    %3101 = vmatpush1.bf16.msra.mxu0 %v3057
    %3102 = vmatprep.subr.bf16.mxu0 0
    %3103 = vmatpush1.bf16.msra.mxu0 %v3058
    %3104 = vmatprep.subr.bf16.mxu0 0
    %3105 = vmatpush1.bf16.msra.mxu0 %v3059
    %3106 = vmatprep.subr.bf16.mxu0 0
    %3107 = vmatpush1.bf16.msra.mxu0 %v3060
    %3108 = vmatprep.subr.bf16.mxu0 0
    %3109 = vmatpush1.bf16.msra.mxu0 %v3061
    %3110 = vmatprep.mubr.bf16.mxu0 %v2238
    %3111 = vmatmul.mubr.bf16.gmra.mrb[0].mxu0 %v2237
    %v3112 = vpop.f32.mrb[0].mxu0
    %v3113 = vadd.f32 %v2980, %v3112
    %v3114 = vpop.f32.mrb[0].mxu0
    %v3115 = vpop.f32.mrb[0].mxu0
    %v3116 = vadd.f32 %v2980, %v3115
    %v3117 = vpop.f32.mrb[0].mxu0
    %3118 = vmatprep.mubr.bf16.mxu0 %v2240
    %3119 = vmatmul.mubr.bf16.gmra.mrb[0].mxu0 %v2239
    %v3120 = vpop.f32.mrb[0].mxu0
    %v3121 = vadd.f32 %v2980, %v3120
    %v3122 = vpop.f32.mrb[0].mxu0
    %v3123 = vpop.f32.mrb[0].mxu0
    %v3124 = vadd.f32 %v2980, %v3123
    %v3125 = vpop.f32.mrb[0].mxu0
    %3126 = vmatprep.mubr.bf16.mxu0 %v2242
    %3127 = vmatmul.mubr.bf16.gmra.mrb[0].mxu0 %v2241
    %v3128 = vpop.f32.mrb[0].mxu0
    %v3129 = vadd.f32 %v2980, %v3128
    %v3130 = vpop.f32.mrb[0].mxu0
    %v3131 = vpop.f32.mrb[0].mxu0
    %v3132 = vadd.f32 %v2980, %v3131
    %v3133 = vpop.f32.mrb[0].mxu0
    %3134 = vmatprep.mubr.bf16.mxu0 %v2244
    %3135 = vmatmul.mubr.bf16.gmra.mrb[0].mxu0 %v2243
    %v3136 = vpop.f32.mrb[0].mxu0
    %v3137 = vadd.f32 %v2980, %v3136
    %v3138 = vpop.f32.mrb[0].mxu0
    %v3139 = vpop.f32.mrb[0].mxu0
    %v3140 = vadd.f32 %v2980, %v3139
    %v3141 = vpop.f32.mrb[0].mxu0
    %3142 = vmatprep.mubr.bf16.mxu0 %v2246
    %3143 = vmatmul.mubr.bf16.gmra.mrb[0].mxu0 %v2245
    %v3144 = vpop.f32.mrb[0].mxu0
    %v3145 = vadd.f32 %v2980, %v3144
    %v3146 = vpop.f32.mrb[0].mxu0
    %v3147 = vpop.f32.mrb[0].mxu0
    %v3148 = vadd.f32 %v2980, %v3147
    %v3149 = vpop.f32.mrb[0].mxu0
    %3150 = vmatprep.mubr.bf16.mxu0 %v2248
    %3151 = vmatmul.mubr.bf16.gmra.mrb[0].mxu0 %v2247
    %v3152 = vpop.f32.mrb[0].mxu0
    %v3153 = vadd.f32 %v2980, %v3152
    %v3154 = vpop.f32.mrb[0].mxu0
    %v3155 = vpop.f32.mrb[0].mxu0
    %v3156 = vadd.f32 %v2980, %v3155
    %v3157 = vpop.f32.mrb[0].mxu0
    %3158 = vmatprep.mubr.bf16.mxu0 %v2250
    %3159 = vmatmul.mubr.bf16.gmra.mrb[0].mxu0 %v2249
    %v3160 = vpop.f32.mrb[0].mxu0
    %v3161 = vadd.f32 %v2980, %v3160
    %v3162 = vpop.f32.mrb[0].mxu0
    %v3163 = vpop.f32.mrb[0].mxu0
    %v3164 = vadd.f32 %v2980, %v3163
    %v3165 = vpop.f32.mrb[0].mxu0
    %3166 = vmatprep.mubr.bf16.mxu0 %v2252
    %3167 = vmatmul.mubr.bf16.gmra.mrb[0].mxu0 %v2251
    %v3168 = vpop.f32.mrb[0].mxu0
    %v3169 = vadd.f32 %v2980, %v3168
    %v3170 = vpop.f32.mrb[0].mxu0
    %v3171 = vpop.f32.mrb[0].mxu0
    %v3172 = vadd.f32 %v2980, %v3171
    %v3173 = vpop.f32.mrb[0].mxu0
    %3174 = vmatprep.mubr.bf16.mxu0 %v2928
    %3175 = vmatmul.mubr.bf16.gmra.mrb[0].mxu0 %v2927
    %v3176 = vpop.f32.mrb[0].mxu0
    %v3177 = vadd.f32 %v2980, %v3176
    %v3178 = vpop.f32.mrb[0].mxu0
    %v3179 = vpop.f32.mrb[0].mxu0
    %v3180 = vadd.f32 %v2980, %v3179
    %v3181 = vpop.f32.mrb[0].mxu0
    %3182 = vmatprep.mubr.bf16.mxu0 %v2930
    %3183 = vmatmul.mubr.bf16.gmra.mrb[0].mxu0 %v2929
    %v3184 = vpop.f32.mrb[0].mxu0
    %v3185 = vadd.f32 %v2980, %v3184
    %v3186 = vpop.f32.mrb[0].mxu0
    %v3187 = vpop.f32.mrb[0].mxu0
    %v3188 = vadd.f32 %v2980, %v3187
    %v3189 = vpop.f32.mrb[0].mxu0
    %3190 = vmatprep.mubr.bf16.mxu0 %v2932
    %3191 = vmatmul.mubr.bf16.gmra.mrb[0].mxu0 %v2931
    %v3192 = vpop.f32.mrb[0].mxu0
    %v3193 = vadd.f32 %v2980, %v3192
    %v3194 = vpop.f32.mrb[0].mxu0
    %v3195 = vpop.f32.mrb[0].mxu0
    %v3196 = vadd.f32 %v2980, %v3195
    %v3197 = vpop.f32.mrb[0].mxu0
    %3198 = vmatprep.mubr.bf16.mxu0 %v2934
    %3199 = vmatmul.mubr.bf16.gmra.mrb[0].mxu0 %v2933
    %v3200 = vpop.f32.mrb[0].mxu0
    %v3201 = vadd.f32 %v2980, %v3200
    %v3202 = vpop.f32.mrb[0].mxu0
    %v3203 = vpop.f32.mrb[0].mxu0
    %v3204 = vadd.f32 %v2980, %v3203
    %v3205 = vpop.f32.mrb[0].mxu0
    %3206 = vmatprep.mubr.bf16.mxu0 %v2936
    %3207 = vmatmul.mubr.bf16.gmra.mrb[0].mxu0 %v2935
    %v3208 = vpop.f32.mrb[0].mxu0
    %v3209 = vadd.f32 %v2980, %v3208
    %v3210 = vpop.f32.mrb[0].mxu0
    %v3211 = vpop.f32.mrb[0].mxu0
    %v3212 = vadd.f32 %v2980, %v3211
    %v3213 = vpop.f32.mrb[0].mxu0
    %3214 = vmatprep.mubr.bf16.mxu0 %v2938
    %3215 = vmatmul.mubr.bf16.gmra.mrb[0].mxu0 %v2937
    %v3216 = vpop.f32.mrb[0].mxu0
    %v3217 = vadd.f32 %v2980, %v3216
    %v3218 = vpop.f32.mrb[0].mxu0
    %v3219 = vpop.f32.mrb[0].mxu0
    %v3220 = vadd.f32 %v2980, %v3219
    %v3221 = vpop.f32.mrb[0].mxu0
    %3222 = vmatprep.mubr.bf16.mxu0 %v2940
    %3223 = vmatmul.mubr.bf16.gmra.mrb[0].mxu0 %v2939
    %v3224 = vpop.f32.mrb[0].mxu0
    %v3225 = vadd.f32 %v2980, %v3224
    %v3226 = vpop.f32.mrb[0].mxu0
    %v3227 = vpop.f32.mrb[0].mxu0
    %v3228 = vadd.f32 %v2980, %v3227
    %v3229 = vpop.f32.mrb[0].mxu0
    %3230 = vmatprep.mubr.bf16.mxu0 %v2942
    %3231 = vmatmul.mubr.bf16.gmra.mrb[0].mxu0 %v2941
    %v3232 = vpop.f32.mrb[0].mxu0
    %v3233 = vadd.f32 %v2980, %v3232
    %v3234 = vpop.f32.mrb[0].mxu0
    %v3235 = vpop.f32.mrb[0].mxu0
    %v3236 = vadd.f32 %v2980, %v3235
    %v3237 = vpop.f32.mrb[0].mxu0
    %3238 = vdwg.mxu0
    %v3239 = vmax.f32 %v3113, -1.0
    %v3240 = vmax.f32 %v3116, -1.0
    %v3241 = vmax.f32 %v3121, -1.0
    %v3242 = vmax.f32 %v3124, -1.0
    %v3243 = vmax.f32 %v3129, -1.0
    %v3244 = vmax.f32 %v3132, -1.0
    %v3245 = vmax.f32 %v3137, -1.0
    %v3246 = vmax.f32 %v3140, -1.0
    %v3247 = vmax.f32 %v3145, -1.0
    %v3248 = vmax.f32 %v3148, -1.0
    %v3249 = vmax.f32 %v3153, -1.0
    %v3250 = vmax.f32 %v3156, -1.0
    %v3251 = vmax.f32 %v3161, -1.0
    %v3252 = vmax.f32 %v3164, -1.0
    %v3253 = vmax.f32 %v3169, -1.0
    %v3254 = vmax.f32 %v3172, -1.0
    %v3255 = vmax.f32 %v3177, -1.0
    %v3256 = vmax.f32 %v3180, -1.0
    %v3257 = vmax.f32 %v3185, -1.0
    %v3258 = vmax.f32 %v3188, -1.0
    %v3259 = vmax.f32 %v3193, -1.0
    %v3260 = vmax.f32 %v3196, -1.0
    %v3261 = vmax.f32 %v3201, -1.0
    %v3262 = vmax.f32 %v3204, -1.0
    %v3263 = vmax.f32 %v3209, -1.0
    %v3264 = vmax.f32 %v3212, -1.0
    %v3265 = vmax.f32 %v3217, -1.0
    %v3266 = vmax.f32 %v3220, -1.0
    %v3267 = vmax.f32 %v3225, -1.0
    %v3268 = vmax.f32 %v3228, -1.0
    %v3269 = vmax.f32 %v3233, -1.0
    %v3270 = vmax.f32 %v3236, -1.0
    %v3271 = vmin.f32 %v3239, 1.0
    %v3272 = vmin.f32 %v3240, 1.0
    %v3273 = vmin.f32 %v3241, 1.0
    %v3274 = vmin.f32 %v3242, 1.0
    %v3275 = vmin.f32 %v3243, 1.0
    %v3276 = vmin.f32 %v3244, 1.0
    %v3277 = vmin.f32 %v3245, 1.0
    %v3278 = vmin.f32 %v3246, 1.0
    %v3279 = vmin.f32 %v3247, 1.0
    %v3280 = vmin.f32 %v3248, 1.0
    %v3281 = vmin.f32 %v3249, 1.0
    %v3282 = vmin.f32 %v3250, 1.0
    %v3283 = vmin.f32 %v3251, 1.0
    %v3284 = vmin.f32 %v3252, 1.0
    %v3285 = vmin.f32 %v3253, 1.0
    %v3286 = vmin.f32 %v3254, 1.0
    %v3287 = vmin.f32 %v3255, 1.0
    %v3288 = vmin.f32 %v3256, 1.0
    %v3289 = vmin.f32 %v3257, 1.0
    %v3290 = vmin.f32 %v3258, 1.0
    %v3291 = vmin.f32 %v3259, 1.0
    %v3292 = vmin.f32 %v3260, 1.0
    %v3293 = vmin.f32 %v3261, 1.0
    %v3294 = vmin.f32 %v3262, 1.0
    %v3295 = vmin.f32 %v3263, 1.0
    %v3296 = vmin.f32 %v3264, 1.0
    %v3297 = vmin.f32 %v3265, 1.0
    %v3298 = vmin.f32 %v3266, 1.0
    %v3299 = vmin.f32 %v3267, 1.0
    %v3300 = vmin.f32 %v3268, 1.0
    %v3301 = vmin.f32 %v3269, 1.0
    %v3302 = vmin.f32 %v3270, 1.0
    %v3303 = vld [vmem:[%s9] sm:$0xf]
    %v3304 = vld [vmem:[%s9 + $0x4] sm:$0xf]
    %v3305 = vld [vmem:[%s9 + $0x8] sm:$0xf]
    %v3306 = vld [vmem:[%s9 + $0xc] sm:$0xf]
    %v3307 = vld [vmem:[%s9 + $0x10] sm:$0xf]
    %v3308 = vld [vmem:[%s9 + $0x14] sm:$0xf]
    %v3309 = vld [vmem:[%s9 + $0x18] sm:$0xf]
    %v3310 = vld [vmem:[%s9 + $0x1c] sm:$0xf]
    %v3311 = vld [vmem:[%s9 + $0x20] sm:$0xf]
    %v3312 = vld [vmem:[%s9 + $0x24] sm:$0xf]
    %v3313 = vld [vmem:[%s9 + $0x28] sm:$0xf]
    %v3314 = vld [vmem:[%s9 + $0x2c] sm:$0xf]
    %v3315 = vld [vmem:[%s9 + $0x30] sm:$0xf]
    %v3316 = vld [vmem:[%s9 + $0x34] sm:$0xf]
    %v3317 = vld [vmem:[%s9 + $0x38] sm:$0xf]
    %v3318 = vld [vmem:[%s9 + $0x3c] sm:$0xf]
    %v3319 = vld [vmem:[%s9 + $0x40] sm:$0xf]
    %v3320 = vld [vmem:[%s9 + $0x44] sm:$0xf]
    %v3321 = vld [vmem:[%s9 + $0x48] sm:$0xf]
    %v3322 = vld [vmem:[%s9 + $0x4c] sm:$0xf]
    %v3323 = vld [vmem:[%s9 + $0x50] sm:$0xf]
    %v3324 = vld [vmem:[%s9 + $0x54] sm:$0xf]
    %v3325 = vld [vmem:[%s9 + $0x58] sm:$0xf]
    %v3326 = vld [vmem:[%s9 + $0x5c] sm:$0xf]
    %v3327 = vld [vmem:[%s9 + $0x60] sm:$0xf]
    %v3328 = vld [vmem:[%s9 + $0x64] sm:$0xf]
    %v3329 = vld [vmem:[%s9 + $0x68] sm:$0xf]
    %v3330 = vld [vmem:[%s9 + $0x6c] sm:$0xf]
    %v3331 = vld [vmem:[%s9 + $0x70] sm:$0xf]
    %v3332 = vld [vmem:[%s9 + $0x74] sm:$0xf]
    %v3333 = vld [vmem:[%s9 + $0x78] sm:$0xf]
    %v3334 = vld [vmem:[%s9 + $0x7c] sm:$0xf]
    %v3335 = vld [vmem:[%s9 + $0x80] sm:$0xf]
    %v3336 = vld [vmem:[%s9 + $0x84] sm:$0xf]
    %v3337 = vld [vmem:[%s9 + $0x88] sm:$0xf]
    %v3338 = vld [vmem:[%s9 + $0x8c] sm:$0xf]
    %v3339 = vld [vmem:[%s9 + $0x90] sm:$0xf]
    %v3340 = vld [vmem:[%s9 + $0x94] sm:$0xf]
    %v3341 = vld [vmem:[%s9 + $0x98] sm:$0xf]
    %v3342 = vld [vmem:[%s9 + $0x9c] sm:$0xf]
    %v3343 = vld [vmem:[%s9 + $0xa0] sm:$0xf]
    %v3344 = vld [vmem:[%s9 + $0xa4] sm:$0xf]
    %v3345 = vld [vmem:[%s9 + $0xa8] sm:$0xf]
    %v3346 = vld [vmem:[%s9 + $0xac] sm:$0xf]
    %v3347 = vld [vmem:[%s9 + $0xb0] sm:$0xf]
    %v3348 = vld [vmem:[%s9 + $0xb4] sm:$0xf]
    %v3349 = vld [vmem:[%s9 + $0xb8] sm:$0xf]
    %v3350 = vld [vmem:[%s9 + $0xbc] sm:$0xf]
    %v3351 = vld [vmem:[%s9 + $0xc0] sm:$0xf]
    %v3352 = vld [vmem:[%s9 + $0xc4] sm:$0xf]
    %v3353 = vld [vmem:[%s9 + $0xc8] sm:$0xf]
    %v3354 = vld [vmem:[%s9 + $0xcc] sm:$0xf]
    %v3355 = vld [vmem:[%s9 + $0xd0] sm:$0xf]
    %v3356 = vld [vmem:[%s9 + $0xd4] sm:$0xf]
    %v3357 = vld [vmem:[%s9 + $0xd8] sm:$0xf]
    %v3358 = vld [vmem:[%s9 + $0xdc] sm:$0xf]
    %v3359 = vld [vmem:[%s9 + $0xe0] sm:$0xf]
    %v3360 = vld [vmem:[%s9 + $0xe4] sm:$0xf]
    %v3361 = vld [vmem:[%s9 + $0xe8] sm:$0xf]
    %v3362 = vld [vmem:[%s9 + $0xec] sm:$0xf]
    %v3363 = vld [vmem:[%s9 + $0xf0] sm:$0xf]
    %v3364 = vld [vmem:[%s9 + $0xf4] sm:$0xf]
    %v3365 = vld [vmem:[%s9 + $0xf8] sm:$0xf]
    %v3366 = vld [vmem:[%s9 + $0xfc] sm:$0xf]
    %v3431 = vunpack.c.l.b16 %v3303
    %v3432 = vunpack.c.l.b16 %v3304
    %v3433 = vunpack.c.l.b16 %v3305
    %v3434 = vunpack.c.l.b16 %v3306
    %v3435 = vunpack.c.l.b16 %v3307
    %v3436 = vunpack.c.l.b16 %v3308
    %v3437 = vunpack.c.l.b16 %v3309
    %v3438 = vunpack.c.l.b16 %v3310
    %v3439 = vunpack.c.l.b16 %v3311
    %v3440 = vunpack.c.l.b16 %v3312
    %v3441 = vunpack.c.l.b16 %v3313
    %v3442 = vunpack.c.l.b16 %v3314
    %v3443 = vunpack.c.l.b16 %v3315
    %v3444 = vunpack.c.l.b16 %v3316
    %v3445 = vunpack.c.l.b16 %v3317
    %v3446 = vunpack.c.l.b16 %v3318
    %v3447 = vunpack.c.l.b16 %v3319
    %v3448 = vunpack.c.l.b16 %v3320
    %v3449 = vunpack.c.l.b16 %v3321
    %v3450 = vunpack.c.l.b16 %v3322
    %v3451 = vunpack.c.l.b16 %v3323
    %v3452 = vunpack.c.l.b16 %v3324
    %v3453 = vunpack.c.l.b16 %v3325
    %v3454 = vunpack.c.l.b16 %v3326
    %v3455 = vunpack.c.l.b16 %v3327
    %v3456 = vunpack.c.l.b16 %v3328
    %v3457 = vunpack.c.l.b16 %v3329
    %v3458 = vunpack.c.l.b16 %v3330
    %v3459 = vunpack.c.l.b16 %v3331
    %v3460 = vunpack.c.l.b16 %v3332
    %v3461 = vunpack.c.l.b16 %v3333
    %v3462 = vunpack.c.l.b16 %v3334
    %v3463 = vunpack.c.l.b16 %v3335
    %v3464 = vunpack.c.l.b16 %v3336
    %v3465 = vunpack.c.l.b16 %v3337
    %v3466 = vunpack.c.l.b16 %v3338
    %v3467 = vunpack.c.l.b16 %v3339
    %v3468 = vunpack.c.l.b16 %v3340
    %v3469 = vunpack.c.l.b16 %v3341
    %v3470 = vunpack.c.l.b16 %v3342
    %v3471 = vunpack.c.l.b16 %v3343
    %v3472 = vunpack.c.l.b16 %v3344
    %v3473 = vunpack.c.l.b16 %v3345
    %v3474 = vunpack.c.l.b16 %v3346
    %v3475 = vunpack.c.l.b16 %v3347
    %v3476 = vunpack.c.l.b16 %v3348
    %v3477 = vunpack.c.l.b16 %v3349
    %v3478 = vunpack.c.l.b16 %v3350
    %v3479 = vunpack.c.l.b16 %v3351
    %v3480 = vunpack.c.l.b16 %v3352
    %v3481 = vunpack.c.l.b16 %v3353
    %v3482 = vunpack.c.l.b16 %v3354
    %v3483 = vunpack.c.l.b16 %v3355
    %v3484 = vunpack.c.l.b16 %v3356
    %v3485 = vunpack.c.l.b16 %v3357
    %v3486 = vunpack.c.l.b16 %v3358
    %v3487 = vunpack.c.l.b16 %v3359
    %v3488 = vunpack.c.l.b16 %v3360
    %v3489 = vunpack.c.l.b16 %v3361
    %v3490 = vunpack.c.l.b16 %v3362
    %v3491 = vunpack.c.l.b16 %v3363
    %v3492 = vunpack.c.l.b16 %v3364
    %v3493 = vunpack.c.l.b16 %v3365
    %v3494 = vunpack.c.l.b16 %v3366
    %v3495 = vpack.c.b16 %v3432, %v3431
    %v3496 = vpack.c.b16 %v3434, %v3433
    %v3497 = vpack.c.b16 %v3436, %v3435
    %v3498 = vpack.c.b16 %v3438, %v3437
    %v3499 = vpack.c.b16 %v3440, %v3439
    %v3500 = vpack.c.b16 %v3442, %v3441
    %v3501 = vpack.c.b16 %v3444, %v3443
    %v3502 = vpack.c.b16 %v3446, %v3445
    %v3503 = vpack.c.b16 %v3448, %v3447
    %v3504 = vpack.c.b16 %v3450, %v3449
    %v3505 = vpack.c.b16 %v3452, %v3451
    %v3506 = vpack.c.b16 %v3454, %v3453
    %v3507 = vpack.c.b16 %v3456, %v3455
    %v3508 = vpack.c.b16 %v3458, %v3457
    %v3509 = vpack.c.b16 %v3460, %v3459
    %v3510 = vpack.c.b16 %v3462, %v3461
    %v3511 = vpack.c.b16 %v3464, %v3463
    %v3512 = vpack.c.b16 %v3466, %v3465
    %v3513 = vpack.c.b16 %v3468, %v3467
    %v3514 = vpack.c.b16 %v3470, %v3469
    %v3515 = vpack.c.b16 %v3472, %v3471
    %v3516 = vpack.c.b16 %v3474, %v3473
    %v3517 = vpack.c.b16 %v3476, %v3475
    %v3518 = vpack.c.b16 %v3478, %v3477
    %v3519 = vpack.c.b16 %v3480, %v3479
    %v3520 = vpack.c.b16 %v3482, %v3481
    %v3521 = vpack.c.b16 %v3484, %v3483
    %v3522 = vpack.c.b16 %v3486, %v3485
    %v3523 = vpack.c.b16 %v3488, %v3487
    %v3524 = vpack.c.b16 %v3490, %v3489
    %v3525 = vpack.c.b16 %v3492, %v3491
    %v3526 = vpack.c.b16 %v3494, %v3493
    %3559 = vmatprep.subr.bf16.mxu0 0
    %3560 = vmatpush1.bf16.msra.mxu0 %v3495
    %3561 = vmatprep.subr.bf16.mxu0 0
    %3562 = vmatpush1.bf16.msra.mxu0 %v3496
    %3563 = vmatprep.subr.bf16.mxu0 0
    %3564 = vmatpush1.bf16.msra.mxu0 %v3497
    %3565 = vmatprep.subr.bf16.mxu0 0
    %3566 = vmatpush1.bf16.msra.mxu0 %v3498
    %3567 = vmatprep.subr.bf16.mxu0 0
    %3568 = vmatpush1.bf16.msra.mxu0 %v3499
    %3569 = vmatprep.subr.bf16.mxu0 0
    %3570 = vmatpush1.bf16.msra.mxu0 %v3500
    %3571 = vmatprep.subr.bf16.mxu0 0
    %3572 = vmatpush1.bf16.msra.mxu0 %v3501
    %3573 = vmatprep.subr.bf16.mxu0 0
    %3574 = vmatpush1.bf16.msra.mxu0 %v3502
    %3575 = vmatprep.subr.bf16.mxu0 0
    %3576 = vmatpush1.bf16.msra.mxu0 %v3503
    %3577 = vmatprep.subr.bf16.mxu0 0
    %3578 = vmatpush1.bf16.msra.mxu0 %v3504
    %3579 = vmatprep.subr.bf16.mxu0 0
    %3580 = vmatpush1.bf16.msra.mxu0 %v3505
    %3581 = vmatprep.subr.bf16.mxu0 0
    %3582 = vmatpush1.bf16.msra.mxu0 %v3506
    %3583 = vmatprep.subr.bf16.mxu0 0
    %3584 = vmatpush1.bf16.msra.mxu0 %v3507
    %3585 = vmatprep.subr.bf16.mxu0 0
    %3586 = vmatpush1.bf16.msra.mxu0 %v3508
    %3587 = vmatprep.subr.bf16.mxu0 0
    %3588 = vmatpush1.bf16.msra.mxu0 %v3509
    %3589 = vmatprep.subr.bf16.mxu0 0
    %3590 = vmatpush1.bf16.msra.mxu0 %v3510
    %3591 = vmatprep.mubr.bf16.mxu0 %v2238
    %3592 = vmatmul.mubr.bf16.gmra.mrb[0].mxu0 %v2237
    %v3593 = vpop.f32.mrb[0].mxu0
    %v3594 = vadd.f32 %v2980, %v3593
    %v3595 = vpop.f32.mrb[0].mxu0
    %v3596 = vpop.f32.mrb[0].mxu0
    %v3597 = vadd.f32 %v2980, %v3596
    %v3598 = vpop.f32.mrb[0].mxu0
    %3599 = vmatprep.mubr.bf16.mxu0 %v2240
    %3600 = vmatmul.mubr.bf16.gmra.mrb[0].mxu0 %v2239
    %v3601 = vpop.f32.mrb[0].mxu0
    %v3602 = vadd.f32 %v2980, %v3601
    %v3603 = vpop.f32.mrb[0].mxu0
    %v3604 = vpop.f32.mrb[0].mxu0
    %v3605 = vadd.f32 %v2980, %v3604
    %v3606 = vpop.f32.mrb[0].mxu0
    %3607 = vmatprep.mubr.bf16.mxu0 %v2242
    %3608 = vmatmul.mubr.bf16.gmra.mrb[0].mxu0 %v2241
    %v3609 = vpop.f32.mrb[0].mxu0
    %v3610 = vadd.f32 %v2980, %v3609
    %v3611 = vpop.f32.mrb[0].mxu0
    %v3612 = vpop.f32.mrb[0].mxu0
    %v3613 = vadd.f32 %v2980, %v3612
    %v3614 = vpop.f32.mrb[0].mxu0
    %3615 = vmatprep.mubr.bf16.mxu0 %v2244
    %3616 = vmatmul.mubr.bf16.gmra.mrb[0].mxu0 %v2243
    %v3617 = vpop.f32.mrb[0].mxu0
    %v3618 = vadd.f32 %v2980, %v3617
    %v3619 = vpop.f32.mrb[0].mxu0
    %v3620 = vpop.f32.mrb[0].mxu0
    %v3621 = vadd.f32 %v2980, %v3620
    %v3622 = vpop.f32.mrb[0].mxu0
    %3623 = vmatprep.mubr.bf16.mxu0 %v2246
    %3624 = vmatmul.mubr.bf16.gmra.mrb[0].mxu0 %v2245
    %v3625 = vpop.f32.mrb[0].mxu0
    %v3626 = vadd.f32 %v2980, %v3625
    %v3627 = vpop.f32.mrb[0].mxu0
    %v3628 = vpop.f32.mrb[0].mxu0
    %v3629 = vadd.f32 %v2980, %v3628
    %v3630 = vpop.f32.mrb[0].mxu0
    %3631 = vmatprep.mubr.bf16.mxu0 %v2248
    %3632 = vmatmul.mubr.bf16.gmra.mrb[0].mxu0 %v2247
    %v3633 = vpop.f32.mrb[0].mxu0
    %v3634 = vadd.f32 %v2980, %v3633
    %v3635 = vpop.f32.mrb[0].mxu0
    %v3636 = vpop.f32.mrb[0].mxu0
    %v3637 = vadd.f32 %v2980, %v3636
    %v3638 = vpop.f32.mrb[0].mxu0
    %3639 = vmatprep.mubr.bf16.mxu0 %v2250
    %3640 = vmatmul.mubr.bf16.gmra.mrb[0].mxu0 %v2249
    %v3641 = vpop.f32.mrb[0].mxu0
    %v3642 = vadd.f32 %v2980, %v3641
    %v3643 = vpop.f32.mrb[0].mxu0
    %v3644 = vpop.f32.mrb[0].mxu0
    %v3645 = vadd.f32 %v2980, %v3644
    %v3646 = vpop.f32.mrb[0].mxu0
    %3647 = vmatprep.mubr.bf16.mxu0 %v2252
    %3648 = vmatmul.mubr.bf16.gmra.mrb[0].mxu0 %v2251
    %v3649 = vpop.f32.mrb[0].mxu0
    %v3650 = vadd.f32 %v2980, %v3649
    %v3651 = vpop.f32.mrb[0].mxu0
    %v3652 = vpop.f32.mrb[0].mxu0
    %v3653 = vadd.f32 %v2980, %v3652
    %v3654 = vpop.f32.mrb[0].mxu0
    %3655 = vmatprep.mubr.bf16.mxu0 %v2928
    %3656 = vmatmul.mubr.bf16.gmra.mrb[0].mxu0 %v2927
    %v3657 = vpop.f32.mrb[0].mxu0
    %v3658 = vadd.f32 %v2980, %v3657
    %v3659 = vpop.f32.mrb[0].mxu0
    %v3660 = vpop.f32.mrb[0].mxu0
    %v3661 = vadd.f32 %v2980, %v3660
    %v3662 = vpop.f32.mrb[0].mxu0
    %3663 = vmatprep.mubr.bf16.mxu0 %v2930
    %3664 = vmatmul.mubr.bf16.gmra.mrb[0].mxu0 %v2929
    %v3665 = vpop.f32.mrb[0].mxu0
    %v3666 = vadd.f32 %v2980, %v3665
    %v3667 = vpop.f32.mrb[0].mxu0
    %v3668 = vpop.f32.mrb[0].mxu0
    %v3669 = vadd.f32 %v2980, %v3668
    %v3670 = vpop.f32.mrb[0].mxu0
    %3671 = vmatprep.mubr.bf16.mxu0 %v2932
    %3672 = vmatmul.mubr.bf16.gmra.mrb[0].mxu0 %v2931
    %v3673 = vpop.f32.mrb[0].mxu0
    %v3674 = vadd.f32 %v2980, %v3673
    %v3675 = vpop.f32.mrb[0].mxu0
    %v3676 = vpop.f32.mrb[0].mxu0
    %v3677 = vadd.f32 %v2980, %v3676
    %v3678 = vpop.f32.mrb[0].mxu0
    %3679 = vmatprep.mubr.bf16.mxu0 %v2934
    %3680 = vmatmul.mubr.bf16.gmra.mrb[0].mxu0 %v2933
    %v3681 = vpop.f32.mrb[0].mxu0
    %v3682 = vadd.f32 %v2980, %v3681
    %v3683 = vpop.f32.mrb[0].mxu0
    %v3684 = vpop.f32.mrb[0].mxu0
    %v3685 = vadd.f32 %v2980, %v3684
    %v3686 = vpop.f32.mrb[0].mxu0
    %3687 = vmatprep.mubr.bf16.mxu0 %v2936
    %3688 = vmatmul.mubr.bf16.gmra.mrb[0].mxu0 %v2935
    %v3689 = vpop.f32.mrb[0].mxu0
    %v3690 = vadd.f32 %v2980, %v3689
    %v3691 = vpop.f32.mrb[0].mxu0
    %v3692 = vpop.f32.mrb[0].mxu0
    %v3693 = vadd.f32 %v2980, %v3692
    %v3694 = vpop.f32.mrb[0].mxu0
    %3695 = vmatprep.mubr.bf16.mxu0 %v2938
    %3696 = vmatmul.mubr.bf16.gmra.mrb[0].mxu0 %v2937
    %v3697 = vpop.f32.mrb[0].mxu0
    %v3698 = vadd.f32 %v2980, %v3697
    %v3699 = vpop.f32.mrb[0].mxu0
    %v3700 = vpop.f32.mrb[0].mxu0
    %v3701 = vadd.f32 %v2980, %v3700
    %v3702 = vpop.f32.mrb[0].mxu0
    %3703 = vmatprep.mubr.bf16.mxu0 %v2940
    %3704 = vmatmul.mubr.bf16.gmra.mrb[0].mxu0 %v2939
    %v3705 = vpop.f32.mrb[0].mxu0
    %v3706 = vadd.f32 %v2980, %v3705
    %v3707 = vpop.f32.mrb[0].mxu0
    %v3708 = vpop.f32.mrb[0].mxu0
    %v3709 = vadd.f32 %v2980, %v3708
    %v3710 = vpop.f32.mrb[0].mxu0
    %3711 = vmatprep.mubr.bf16.mxu0 %v2942
    %3712 = vmatmul.mubr.bf16.gmra.mrb[0].mxu0 %v2941
    %v3713 = vpop.f32.mrb[0].mxu0
    %v3714 = vadd.f32 %v2980, %v3713
    %v3715 = vpop.f32.mrb[0].mxu0
    %v3716 = vpop.f32.mrb[0].mxu0
    %v3717 = vadd.f32 %v2980, %v3716
    %v3718 = vpop.f32.mrb[0].mxu0
    %3719 = vdwg.mxu0
    %3720 = vmatprep.subr.bf16.mxu0 0
    %3721 = vmatpush1.bf16.msra.mxu0 %v3511
    %3722 = vmatprep.subr.bf16.mxu0 0
    %3723 = vmatpush1.bf16.msra.mxu0 %v3512
    %3724 = vmatprep.subr.bf16.mxu0 0
    %3725 = vmatpush1.bf16.msra.mxu0 %v3513
    %3726 = vmatprep.subr.bf16.mxu0 0
    %3727 = vmatpush1.bf16.msra.mxu0 %v3514
    %3728 = vmatprep.subr.bf16.mxu0 0
    %3729 = vmatpush1.bf16.msra.mxu0 %v3515
    %3730 = vmatprep.subr.bf16.mxu0 0
    %3731 = vmatpush1.bf16.msra.mxu0 %v3516
    %3732 = vmatprep.subr.bf16.mxu0 0
    %3733 = vmatpush1.bf16.msra.mxu0 %v3517
    %3734 = vmatprep.subr.bf16.mxu0 0
    %3735 = vmatpush1.bf16.msra.mxu0 %v3518
    %3736 = vmatprep.subr.bf16.mxu0 0
    %3737 = vmatpush1.bf16.msra.mxu0 %v3519
    %3738 = vmatprep.subr.bf16.mxu0 0
    %3739 = vmatpush1.bf16.msra.mxu0 %v3520
    %3740 = vmatprep.subr.bf16.mxu0 0
    %3741 = vmatpush1.bf16.msra.mxu0 %v3521
    %3742 = vmatprep.subr.bf16.mxu0 0
    %3743 = vmatpush1.bf16.msra.mxu0 %v3522
    %3744 = vmatprep.subr.bf16.mxu0 0
    %3745 = vmatpush1.bf16.msra.mxu0 %v3523
    %3746 = vmatprep.subr.bf16.mxu0 0
    %3747 = vmatpush1.bf16.msra.mxu0 %v3524
    %3748 = vmatprep.subr.bf16.mxu0 0
    %3749 = vmatpush1.bf16.msra.mxu0 %v3525
    %3750 = vmatprep.subr.bf16.mxu0 0
    %3751 = vmatpush1.bf16.msra.mxu0 %v3526
    %3752 = vmatprep.mubr.bf16.mxu0 %v2928
    %3753 = vmatmul.mubr.bf16.gmra.mrb[0].mxu0 %v2927
    %v3754 = vpop.f32.mrb[0].mxu0
    %v3755 = vadd.f32 %v3594, %v3754
    %v3756 = vpop.f32.mrb[0].mxu0
    %v3757 = vpop.f32.mrb[0].mxu0
    %v3758 = vadd.f32 %v3597, %v3757
    %v3759 = vpop.f32.mrb[0].mxu0
    %3760 = vmatprep.mubr.bf16.mxu0 %v2930
    %3761 = vmatmul.mubr.bf16.gmra.mrb[0].mxu0 %v2929
    %v3762 = vpop.f32.mrb[0].mxu0
    %v3763 = vadd.f32 %v3602, %v3762
    %v3764 = vpop.f32.mrb[0].mxu0
    %v3765 = vpop.f32.mrb[0].mxu0
    %v3766 = vadd.f32 %v3605, %v3765
    %v3767 = vpop.f32.mrb[0].mxu0
    %3768 = vmatprep.mubr.bf16.mxu0 %v2932
    %3769 = vmatmul.mubr.bf16.gmra.mrb[0].mxu0 %v2931
    %v3770 = vpop.f32.mrb[0].mxu0
    %v3771 = vadd.f32 %v3610, %v3770
    %v3772 = vpop.f32.mrb[0].mxu0
    %v3773 = vpop.f32.mrb[0].mxu0
    %v3774 = vadd.f32 %v3613, %v3773
    %v3775 = vpop.f32.mrb[0].mxu0
    %3776 = vmatprep.mubr.bf16.mxu0 %v2934
    %3777 = vmatmul.mubr.bf16.gmra.mrb[0].mxu0 %v2933
    %v3778 = vpop.f32.mrb[0].mxu0
    %v3779 = vadd.f32 %v3618, %v3778
    %v3780 = vpop.f32.mrb[0].mxu0
    %v3781 = vpop.f32.mrb[0].mxu0
    %v3782 = vadd.f32 %v3621, %v3781
    %v3783 = vpop.f32.mrb[0].mxu0
    %3784 = vmatprep.mubr.bf16.mxu0 %v2936
    %3785 = vmatmul.mubr.bf16.gmra.mrb[0].mxu0 %v2935
    %v3786 = vpop.f32.mrb[0].mxu0
    %v3787 = vadd.f32 %v3626, %v3786
    %v3788 = vpop.f32.mrb[0].mxu0
    %v3789 = vpop.f32.mrb[0].mxu0
    %v3790 = vadd.f32 %v3629, %v3789
    %v3791 = vpop.f32.mrb[0].mxu0
    %3792 = vmatprep.mubr.bf16.mxu0 %v2938
    %3793 = vmatmul.mubr.bf16.gmra.mrb[0].mxu0 %v2937
    %v3794 = vpop.f32.mrb[0].mxu0
    %v3795 = vadd.f32 %v3634, %v3794
    %v3796 = vpop.f32.mrb[0].mxu0
    %v3797 = vpop.f32.mrb[0].mxu0
    %v3798 = vadd.f32 %v3637, %v3797
    %v3799 = vpop.f32.mrb[0].mxu0
    %3800 = vmatprep.mubr.bf16.mxu0 %v2940
    %3801 = vmatmul.mubr.bf16.gmra.mrb[0].mxu0 %v2939
    %v3802 = vpop.f32.mrb[0].mxu0
    %v3803 = vadd.f32 %v3642, %v3802
    %v3804 = vpop.f32.mrb[0].mxu0
    %v3805 = vpop.f32.mrb[0].mxu0
    %v3806 = vadd.f32 %v3645, %v3805
    %v3807 = vpop.f32.mrb[0].mxu0
    %3808 = vmatprep.mubr.bf16.mxu0 %v2942
    %3809 = vmatmul.mubr.bf16.gmra.mrb[0].mxu0 %v2941
    %v3810 = vpop.f32.mrb[0].mxu0
    %v3811 = vadd.f32 %v3650, %v3810
    %v3812 = vpop.f32.mrb[0].mxu0
    %v3813 = vpop.f32.mrb[0].mxu0
    %v3814 = vadd.f32 %v3653, %v3813
    %v3815 = vpop.f32.mrb[0].mxu0
    %3816 = vmatprep.mubr.bf16.mxu0 %v2242
    %3817 = vmatmul.mubr.bf16.gmra.mrb[0].mxu0 %v2241
    %v3818 = vpop.f32.mrb[0].mxu0
    %v3819 = vadd.f32 %v3658, %v3818
    %v3820 = vpop.f32.mrb[0].mxu0
    %v3821 = vpop.f32.mrb[0].mxu0
    %v3822 = vadd.f32 %v3661, %v3821
    %v3823 = vpop.f32.mrb[0].mxu0
    %3824 = vmatprep.mubr.bf16.mxu0 %v2244
    %3825 = vmatmul.mubr.bf16.gmra.mrb[0].mxu0 %v2243
    %v3826 = vpop.f32.mrb[0].mxu0
    %v3827 = vadd.f32 %v3666, %v3826
    %v3828 = vpop.f32.mrb[0].mxu0
    %v3829 = vpop.f32.mrb[0].mxu0
    %v3830 = vadd.f32 %v3669, %v3829
    %v3831 = vpop.f32.mrb[0].mxu0
    %3832 = vmatprep.mubr.bf16.mxu0 %v2246
    %3833 = vmatmul.mubr.bf16.gmra.mrb[0].mxu0 %v2245
    %v3834 = vpop.f32.mrb[0].mxu0
    %v3835 = vadd.f32 %v3674, %v3834
    %v3836 = vpop.f32.mrb[0].mxu0
    %v3837 = vpop.f32.mrb[0].mxu0
    %v3838 = vadd.f32 %v3677, %v3837
    %v3839 = vpop.f32.mrb[0].mxu0
    %3840 = vmatprep.mubr.bf16.mxu0 %v2248
    %3841 = vmatmul.mubr.bf16.gmra.mrb[0].mxu0 %v2247
    %v3842 = vpop.f32.mrb[0].mxu0
    %v3843 = vadd.f32 %v3682, %v3842
    %v3844 = vpop.f32.mrb[0].mxu0
    %v3845 = vpop.f32.mrb[0].mxu0
    %v3846 = vadd.f32 %v3685, %v3845
    %v3847 = vpop.f32.mrb[0].mxu0
    %3848 = vmatprep.mubr.bf16.mxu0 %v2250
    %3849 = vmatmul.mubr.bf16.gmra.mrb[0].mxu0 %v2249
    %v3850 = vpop.f32.mrb[0].mxu0
    %v3851 = vadd.f32 %v3690, %v3850
    %v3852 = vpop.f32.mrb[0].mxu0
    %v3853 = vpop.f32.mrb[0].mxu0
    %v3854 = vadd.f32 %v3693, %v3853
    %v3855 = vpop.f32.mrb[0].mxu0
    %3856 = vmatprep.mubr.bf16.mxu0 %v2252
    %3857 = vmatmul.mubr.bf16.gmra.mrb[0].mxu0 %v2251
    %v3858 = vpop.f32.mrb[0].mxu0
    %v3859 = vadd.f32 %v3698, %v3858
    %v3860 = vpop.f32.mrb[0].mxu0
    %v3861 = vpop.f32.mrb[0].mxu0
    %v3862 = vadd.f32 %v3701, %v3861
    %v3863 = vpop.f32.mrb[0].mxu0
    %3864 = vmatprep.mubr.bf16.mxu0 0
    %3865 = vmatmul.mubr.bf16.gmra.mrb[0].mxu0 0
    %v3866 = vpop.f32.mrb[0].mxu0
    %v3867 = vadd.f32 %v3706, %v3866
    %v3868 = vpop.f32.mrb[0].mxu0
    %v3869 = vpop.f32.mrb[0].mxu0
    %v3870 = vadd.f32 %v3709, %v3869
    %v3871 = vpop.f32.mrb[0].mxu0
    %3872 = vmatprep.mubr.bf16.mxu0 0
    %3873 = vmatmul.mubr.bf16.gmra.mrb[0].mxu0 0
    %v3874 = vpop.f32.mrb[0].mxu0
    %v3875 = vadd.f32 %v3714, %v3874
    %v3876 = vpop.f32.mrb[0].mxu0
    %v3877 = vpop.f32.mrb[0].mxu0
    %v3878 = vadd.f32 %v3717, %v3877
    %v3879 = vpop.f32.mrb[0].mxu0
    %3880 = vdwg.mxu0
    %v3881 = vmax.f32 %v3755, -1.0
    %v3882 = vmax.f32 %v3758, -1.0
    %v3883 = vmax.f32 %v3763, -1.0
    %v3884 = vmax.f32 %v3766, -1.0
    %v3885 = vmax.f32 %v3771, -1.0
    %v3886 = vmax.f32 %v3774, -1.0
    %v3887 = vmax.f32 %v3779, -1.0
    %v3888 = vmax.f32 %v3782, -1.0
    %v3889 = vmax.f32 %v3787, -1.0
    %v3890 = vmax.f32 %v3790, -1.0
    %v3891 = vmax.f32 %v3795, -1.0
    %v3892 = vmax.f32 %v3798, -1.0
    %v3893 = vmax.f32 %v3803, -1.0
    %v3894 = vmax.f32 %v3806, -1.0
    %v3895 = vmax.f32 %v3811, -1.0
    %v3896 = vmax.f32 %v3814, -1.0
    %v3897 = vmax.f32 %v3819, -1.0
    %v3898 = vmax.f32 %v3822, -1.0
    %v3899 = vmax.f32 %v3827, -1.0
    %v3900 = vmax.f32 %v3830, -1.0
    %v3901 = vmax.f32 %v3835, -1.0
    %v3902 = vmax.f32 %v3838, -1.0
    %v3903 = vmax.f32 %v3843, -1.0
    %v3904 = vmax.f32 %v3846, -1.0
    %v3905 = vmax.f32 %v3851, -1.0
    %v3906 = vmax.f32 %v3854, -1.0
    %v3907 = vmax.f32 %v3859, -1.0
    %v3908 = vmax.f32 %v3862, -1.0
    %v3909 = vmax.f32 %v3867, -1.0
    %v3910 = vmax.f32 %v3870, -1.0
    %v3911 = vmax.f32 %v3875, -1.0
    %v3912 = vmax.f32 %v3878, -1.0
    %v3913 = vmin.f32 %v3881, 1.0
    %v3914 = vmin.f32 %v3882, 1.0
    %v3915 = vmin.f32 %v3883, 1.0
    %v3916 = vmin.f32 %v3884, 1.0
    %v3917 = vmin.f32 %v3885, 1.0
    %v3918 = vmin.f32 %v3886, 1.0
    %v3919 = vmin.f32 %v3887, 1.0
    %v3920 = vmin.f32 %v3888, 1.0
    %v3921 = vmin.f32 %v3889, 1.0
    %v3922 = vmin.f32 %v3890, 1.0
    %v3923 = vmin.f32 %v3891, 1.0
    %v3924 = vmin.f32 %v3892, 1.0
    %v3925 = vmin.f32 %v3893, 1.0
    %v3926 = vmin.f32 %v3894, 1.0
    %v3927 = vmin.f32 %v3895, 1.0
    %v3928 = vmin.f32 %v3896, 1.0
    %v3929 = vmin.f32 %v3897, 1.0
    %v3930 = vmin.f32 %v3898, 1.0
    %v3931 = vmin.f32 %v3899, 1.0
    %v3932 = vmin.f32 %v3900, 1.0
    %v3933 = vmin.f32 %v3901, 1.0
    %v3934 = vmin.f32 %v3902, 1.0
    %v3935 = vmin.f32 %v3903, 1.0
    %v3936 = vmin.f32 %v3904, 1.0
    %v3937 = vmin.f32 %v3905, 1.0
    %v3938 = vmin.f32 %v3906, 1.0
    %v3939 = vmin.f32 %v3907, 1.0
    %v3940 = vmin.f32 %v3908, 1.0
    %v3941 = vmin.f32 %v3909, 1.0
    %v3942 = vmin.f32 %v3910, 1.0
    %v3943 = vmin.f32 %v3911, 1.0
    %v3944 = vmin.f32 %v3912, 1.0
    %3961 = vrot.lane.b32.xlu0 %v3913, 64
    %v3962 = vpop.permute.xlu0 %3961
    %3963 = vrot.lane.b32.xlu0 %v3914, 64
    %v3964 = vpop.permute.xlu0 %3963
    %3965 = vrot.lane.b32.xlu0 %v3915, 64
    %v3966 = vpop.permute.xlu0 %3965
    %3967 = vrot.lane.b32.xlu0 %v3916, 64
    %v3968 = vpop.permute.xlu0 %3967
    %3969 = vrot.lane.b32.xlu0 %v3917, 64
    %v3970 = vpop.permute.xlu0 %3969
    %3971 = vrot.lane.b32.xlu0 %v3918, 64
    %v3972 = vpop.permute.xlu0 %3971
    %3973 = vrot.lane.b32.xlu0 %v3919, 64
    %v3974 = vpop.permute.xlu0 %3973
    %3975 = vrot.lane.b32.xlu0 %v3920, 64
    %v3976 = vpop.permute.xlu0 %3975
    %3977 = vrot.lane.b32.xlu0 %v3921, 64
    %v3978 = vpop.permute.xlu0 %3977
    %3979 = vrot.lane.b32.xlu0 %v3922, 64
    %v3980 = vpop.permute.xlu0 %3979
    %3981 = vrot.lane.b32.xlu0 %v3923, 64
    %v3982 = vpop.permute.xlu0 %3981
    %3983 = vrot.lane.b32.xlu0 %v3924, 64
    %v3984 = vpop.permute.xlu0 %3983
    %3985 = vrot.lane.b32.xlu0 %v3925, 64
    %v3986 = vpop.permute.xlu0 %3985
    %3987 = vrot.lane.b32.xlu0 %v3926, 64
    %v3988 = vpop.permute.xlu0 %3987
    %3989 = vrot.lane.b32.xlu0 %v3927, 64
    %v3990 = vpop.permute.xlu0 %3989
    %3991 = vrot.lane.b32.xlu0 %v3928, 64
    %v3992 = vpop.permute.xlu0 %3991
    %4025 = vrot.lane.b32.xlu0 %v3929, 64
    %v4026 = vpop.permute.xlu0 %4025
    %4027 = vrot.lane.b32.xlu0 %v3930, 64
    %v4028 = vpop.permute.xlu0 %4027
    %4029 = vrot.lane.b32.xlu0 %v3931, 64
    %v4030 = vpop.permute.xlu0 %4029
    %4031 = vrot.lane.b32.xlu0 %v3932, 64
    %v4032 = vpop.permute.xlu0 %4031
    %4033 = vrot.lane.b32.xlu0 %v3933, 64
    %v4034 = vpop.permute.xlu0 %4033
    %4035 = vrot.lane.b32.xlu0 %v3934, 64
    %v4036 = vpop.permute.xlu0 %4035
    %4037 = vrot.lane.b32.xlu0 %v3935, 64
    %v4038 = vpop.permute.xlu0 %4037
    %4039 = vrot.lane.b32.xlu0 %v3936, 64
    %v4040 = vpop.permute.xlu0 %4039
    %4041 = vrot.lane.b32.xlu0 %v3937, 64
    %v4042 = vpop.permute.xlu0 %4041
    %4043 = vrot.lane.b32.xlu0 %v3938, 64
    %v4044 = vpop.permute.xlu0 %4043
    %4045 = vrot.lane.b32.xlu0 %v3939, 64
    %v4046 = vpop.permute.xlu0 %4045
    %4047 = vrot.lane.b32.xlu0 %v3940, 64
    %v4048 = vpop.permute.xlu0 %4047
    %4049 = vrot.lane.b32.xlu0 %v3941, 64
    %v4050 = vpop.permute.xlu0 %4049
    %4051 = vrot.lane.b32.xlu0 %v3942, 64
    %v4052 = vpop.permute.xlu0 %4051
    %4053 = vrot.lane.b32.xlu0 %v3943, 64
    %v4054 = vpop.permute.xlu0 %4053
    %4055 = vrot.lane.b32.xlu0 %v3944, 64
    %v4056 = vpop.permute.xlu0 %4055
    %v4073 = vsel %vm185, %v3271, %v3962
    %v4074 = vsel %vm185, %v3272, %v3964
    %v4075 = vsel %vm185, %v3273, %v3966
    %v4076 = vsel %vm185, %v3274, %v3968
    %v4077 = vsel %vm185, %v3275, %v3970
    %v4078 = vsel %vm185, %v3276, %v3972
    %v4079 = vsel %vm185, %v3277, %v3974
    %v4080 = vsel %vm185, %v3278, %v3976
    %v4081 = vsel %vm185, %v3279, %v3978
    %v4082 = vsel %vm185, %v3280, %v3980
    %v4083 = vsel %vm185, %v3281, %v3982
    %v4084 = vsel %vm185, %v3282, %v3984
    %v4085 = vsel %vm185, %v3283, %v3986
    %v4086 = vsel %vm185, %v3284, %v3988
    %v4087 = vsel %vm185, %v3285, %v3990
    %v4088 = vsel %vm185, %v3286, %v3992
    %v4089 = vsel %vm185, %v3287, %v4026
    %v4090 = vsel %vm185, %v3288, %v4028
    %v4091 = vsel %vm185, %v3289, %v4030
    %v4092 = vsel %vm185, %v3290, %v4032
    %v4093 = vsel %vm185, %v3291, %v4034
    %v4094 = vsel %vm185, %v3292, %v4036
    %v4095 = vsel %vm185, %v3293, %v4038
    %v4096 = vsel %vm185, %v3294, %v4040
    %v4097 = vsel %vm185, %v3295, %v4042
    %v4098 = vsel %vm185, %v3296, %v4044
    %v4099 = vsel %vm185, %v3297, %v4046
    %v4100 = vsel %vm185, %v3298, %v4048
    %v4101 = vsel %vm185, %v3299, %v4050
    %v4102 = vsel %vm185, %v3300, %v4052
    %v4103 = vsel %vm185, %v3301, %v4054
    %v4104 = vsel %vm185, %v3302, %v4056
    %4105 = vst [vmem:[%s11] sm:$0xff] %v4073
    %4106 = vst [vmem:[%s11 + $0x8] sm:$0xff] %v4089
    %4107 = vst [vmem:[%s11 + $0x10] sm:$0xff] %v4074
    %4108 = vst [vmem:[%s11 + $0x18] sm:$0xff] %v4090
    %4109 = vst [vmem:[%s11 + $0x20] sm:$0xff] %v4075
    %4110 = vst [vmem:[%s11 + $0x28] sm:$0xff] %v4091
    %4111 = vst [vmem:[%s11 + $0x30] sm:$0xff] %v4076
    %4112 = vst [vmem:[%s11 + $0x38] sm:$0xff] %v4092
    %4113 = vst [vmem:[%s11 + $0x40] sm:$0xff] %v4077
    %4114 = vst [vmem:[%s11 + $0x48] sm:$0xff] %v4093
    %4115 = vst [vmem:[%s11 + $0x50] sm:$0xff] %v4078
    %4116 = vst [vmem:[%s11 + $0x58] sm:$0xff] %v4094
    %4117 = vst [vmem:[%s11 + $0x60] sm:$0xff] %v4079
    %4118 = vst [vmem:[%s11 + $0x68] sm:$0xff] %v4095
    %4119 = vst [vmem:[%s11 + $0x70] sm:$0xff] %v4080
    %4120 = vst [vmem:[%s11 + $0x78] sm:$0xff] %v4096
    %4121 = vst [vmem:[%s11 + $0x80] sm:$0xff] %v4081
    %4122 = vst [vmem:[%s11 + $0x88] sm:$0xff] %v4097
    %4123 = vst [vmem:[%s11 + $0x90] sm:$0xff] %v4082
    %4124 = vst [vmem:[%s11 + $0x98] sm:$0xff] %v4098
    %4125 = vst [vmem:[%s11 + $0xa0] sm:$0xff] %v4083
    %4126 = vst [vmem:[%s11 + $0xa8] sm:$0xff] %v4099
    %4127 = vst [vmem:[%s11 + $0xb0] sm:$0xff] %v4084
    %4128 = vst [vmem:[%s11 + $0xb8] sm:$0xff] %v4100
    %4129 = vst [vmem:[%s11 + $0xc0] sm:$0xff] %v4085
    %4130 = vst [vmem:[%s11 + $0xc8] sm:$0xff] %v4101
    %4131 = vst [vmem:[%s11 + $0xd0] sm:$0xff] %v4086
    %4132 = vst [vmem:[%s11 + $0xd8] sm:$0xff] %v4102
    %4133 = vst [vmem:[%s11 + $0xe0] sm:$0xff] %v4087
    %4134 = vst [vmem:[%s11 + $0xe8] sm:$0xff] %v4103
    %4135 = vst [vmem:[%s11 + $0xf0] sm:$0xff] %v4088
    %4136 = vst [vmem:[%s11 + $0xf8] sm:$0xff] %v4104
    // Predicated region
    $region54: #{qcae_forward.1} parent=1 // pred_check
      _
    $region55: #{qcae_forward.1} parent=1 // pred_check_branch
      %4138 = sbr.rel (0) target = $region57
    $region56: #{qcae_forward.1} parent=1 // pred_region
      _
    $region57: #{qcae_forward.1} parent=1 // pred_fallthru
      _
    // Predicated region
    $region58: #{qcae_forward.1} parent=1 // pred_check
      _
    $region59: #{qcae_forward.1} parent=1 // pred_check_branch
      %4140 = sbr.rel (0) target = $region61
    $region60: #{qcae_forward.1} parent=1 // pred_region
      _
    $region61: #{qcae_forward.1} parent=1 // pred_fallthru
      _
    %4141 = vsyncpa [#allocation3], 1
    %4142 = vsyncpa [#allocation5], 1

</llo_original>
